<compile_context>
chip_gen: v7x
topology: tpu7x:2x2x1
jax: 0.10.0
libtpu: 0.0.40
codegen_flags: <defaults>
</compile_context>

<pallas_src>
import math
import functools

import jax
import jax.numpy as jnp
from jax.experimental import pallas as pl
from jax.experimental.pallas import tpu as pltpu


# ----------------------------- small helpers --------------------------------

def closest_factor_to_sqrt(n):
    if n <= 1:
        return n
    sqrt_n = int(math.sqrt(n))
    if sqrt_n * sqrt_n == n:
        return sqrt_n
    closest_factor = None
    closest_diff = float("inf")
    for i in range(sqrt_n, 0, -1):
        if n % i == 0:
            diff = abs(i - n // i)
            if diff < closest_diff:
                closest_diff = diff
                closest_factor = i
    return closest_factor


def position(D, H, W):
    # matches torch `position(D, H, W)`: returns (1, 3, D, W, H)
    loc_d = jnp.broadcast_to(jnp.linspace(-1.0, 1.0, D)[:, None, None], (D, W, H))
    loc_w = jnp.broadcast_to(jnp.linspace(-1.0, 1.0, W)[None, :, None], (D, W, H))
    loc_h = jnp.broadcast_to(jnp.linspace(-1.0, 1.0, H)[None, None, :], (D, W, H))
    return jnp.stack([loc_d, loc_w, loc_h], axis=0)[None].astype(jnp.float32)


def _pick_spatial_tile(S, cap):
    """Largest multiple of 128 that divides S (capped); fall back to full S."""
    best = None
    t = 128
    while t <= min(S, cap):
        if S % t == 0:
            best = t
        t += 128
    return best if best is not None else S


def _pick_tap_chunk(n_taps, head_dim, ts, budget_bytes=6 * 1024 * 1024):
    """Largest divisor of n_taps whose per-step k/v/pe blocks stay under budget."""
    per_tap = max(1, head_dim) * ts * 4            # f32 bytes for one tap row
    max_taps = max(1, budget_bytes // (6 * per_tap))   # k+v+pe, double-buffered
    best = 1
    for t in range(1, n_taps + 1):
        if n_taps % t == 0 and t <= max_taps:
            best = t
    return best


_VMEM_BUDGET = 32 * 1024 * 1024   # portable scoped-VMEM budget (v5e/v6e/v7x safe)


# ------------------- kernel 1: channel-first 1x1 conv (matmul) ---------------
# out[b, :, s_tile] = W @ x[b, :, s_tile] + bias   (f32 accumulation on MXU)
# Used with fused weights for conv1+conv2+conv3, and for conv_p and fc.

def _conv1x1_cf_kernel(x_ref, w_ref, b_ref, o_ref):
    acc = jnp.dot(w_ref[...], x_ref[0], preferred_element_type=jnp.float32)
    o_ref[0] = (acc + b_ref[...]).astype(o_ref.dtype)


def conv1x1_cf(x_cf, w, bias, *, mxu_dtype=jnp.bfloat16, max_tile=2048):
    """x_cf: (B, Cin, S) channel-first; w: (Cout, Cin); bias: (Cout,) -> (B, Cout, S) f32."""
    B, Cin, S = x_cf.shape
    Cout = w.shape[0]
    tn = _pick_spatial_tile(S, max_tile)
    xk = x_cf.astype(mxu_dtype)
    wk = w.astype(mxu_dtype)
    bk = bias.astype(jnp.float32).reshape(Cout, 1)
    return pl.pallas_call(
        _conv1x1_cf_kernel,
        out_shape=jax.ShapeDtypeStruct((B, Cout, S), jnp.float32),
        grid=(B, S // tn),
        in_specs=[
            pl.BlockSpec((1, Cin, tn), lambda ib, j: (ib, 0, j)),
            pl.BlockSpec((Cout, Cin), lambda ib, j: (0, 0)),
            pl.BlockSpec((Cout, 1), lambda ib, j: (0, 0)),
        ],
        out_specs=pl.BlockSpec((1, Cout, tn), lambda ib, j: (ib, 0, j)),
        compiler_params=pltpu.CompilerParams(
            dimension_semantics=("parallel", "parallel"),
            vmem_limit_bytes=_VMEM_BUDGET),
    )(xk, wk, bk)


# --------------- kernel 2: unfold-attention, flash-style online softmax ------
# grid = (b*head, spatial tiles, tap chunks); the tap-chunk axis is a reduction
# carried in VMEM scratch (running max / denominator / accumulator).  Each grid
# step processes `tc` taps at once (vectorised over the sublane axis).

def _att_online_kernel(q_ref, k_ref, v_ref, pe_ref, o_ref, m_ref, l_ref, acc_ref,
                       *, scaling):
    t = pl.program_id(2)

    @pl.when(t == 0)
    def _init():
        m_ref[...] = jnp.full(m_ref.shape, -jnp.inf, dtype=jnp.float32)
        l_ref[...] = jnp.zeros(l_ref.shape, dtype=jnp.float32)
        acc_ref[...] = jnp.zeros(acc_ref.shape, dtype=jnp.float32)

    q = q_ref[0] * scaling                       # (HD, ts) f32
    kd = k_ref[0] + pe_ref[...]                  # (tc, HD, ts): k_shift + (pe - pe_shift)
    s = jnp.sum(kd * q[None, :, :], axis=1)      # (tc, ts) logits for this tap chunk

    m_prev = m_ref[...]                          # (1, ts)
    m_new = jnp.maximum(m_prev, jnp.max(s, axis=0, keepdims=True))
    alpha = jnp.exp(m_prev - m_new)
    p = jnp.exp(s - m_new)                       # (tc, ts)
    l_ref[...] = alpha * l_ref[...] + jnp.sum(p, axis=0, keepdims=True)
    acc_ref[...] = alpha * acc_ref[...] + jnp.sum(p[:, None, :] * v_ref[0], axis=0)
    m_ref[...] = m_new

    @pl.when(t == pl.num_programs(2) - 1)
    def _finalize():
        inv_l = pl.reciprocal(l_ref[...], approx=True)
        o_ref[0] = (acc_ref[...] * inv_l).astype(o_ref.dtype)


def attention_pallas(q_att, k_unf, v_unf, pe_diff, scaling, *, max_tile=512):
    BH, HD, S = q_att.shape
    n_taps = k_unf.shape[1]
    ts = _pick_spatial_tile(S, max_tile)
    tc = _pick_tap_chunk(n_taps, HD, ts)
    kern = functools.partial(_att_online_kernel, scaling=scaling)
    return pl.pallas_call(
        kern,
        out_shape=jax.ShapeDtypeStruct((BH, HD, S), jnp.float32),
        grid=(BH, S // ts, n_taps // tc),
        in_specs=[
            pl.BlockSpec((1, HD, ts), lambda i, j, t: (i, 0, j)),         # q (scaled in-kernel)
            pl.BlockSpec((1, tc, HD, ts), lambda i, j, t: (i, t, 0, j)),  # unfolded k
            pl.BlockSpec((1, tc, HD, ts), lambda i, j, t: (i, t, 0, j)),  # unfolded v
            pl.BlockSpec((tc, HD, ts), lambda i, j, t: (t, 0, j)),        # pe - pe_shift
        ],
        out_specs=pl.BlockSpec((1, HD, ts), lambda i, j, t: (i, 0, j)),
        scratch_shapes=[pltpu.VMEM((1, ts), jnp.float32),   # running max
                        pltpu.VMEM((1, ts), jnp.float32),   # running denom
                        pltpu.VMEM((HD, ts), jnp.float32)], # running accum
        compiler_params=pltpu.CompilerParams(
            dimension_semantics=("parallel", "parallel", "arbitrary"),
            vmem_limit_bytes=_VMEM_BUDGET),
    )(q_att, k_unf, v_unf, pe_diff)


# --------- kernel 3: grouped dep_conv (im2col matmul) + rate combine ---------
# grid = (batch, group, spatial tiles); per step one MXU matmul
#   (head, kc^2*kc^2) x (kc^2*kc^2, ts) fused with rate1*att + rate2*conv.
# The grouped structure is preserved — the weight is never densified.

def _depconv_kernel(x_ref, w_ref, oatt_ref, rates_ref, o_ref):
    conv = jnp.dot(w_ref[0], x_ref[0, 0], preferred_element_type=jnp.float32)
    out = rates_ref[0] * oatt_ref[0, 0] + rates_ref[1] * conv
    o_ref[0, 0] = out.astype(o_ref.dtype)


def depconv_combine(x_taps, w_dep_g, oatt_g, rates, *, mxu_dtype=jnp.bfloat16,
                    max_tile=2048):
    B, G, K2, N = x_taps.shape          # K2 = kc^2 (taps) * kc^2 (per-group in-chans)
    HP = w_dep_g.shape[1]               # out channels per group (= head)
    tn = _pick_spatial_tile(N, max_tile)
    xk = x_taps.astype(mxu_dtype)
    wk = w_dep_g.astype(mxu_dtype)
    return pl.pallas_call(
        _depconv_kernel,
        out_shape=jax.ShapeDtypeStruct((B, G, HP, N), jnp.float32),
        grid=(B, G, N // tn),
        in_specs=[
            pl.BlockSpec((1, 1, K2, tn), lambda ib, g, j: (ib, g, 0, j)),
            pl.BlockSpec((1, HP, K2), lambda ib, g, j: (g, 0, 0)),
            pl.BlockSpec((1, 1, HP, tn), lambda ib, g, j: (ib, g, 0, j)),
            pl.BlockSpec(memory_space=pltpu.MemorySpace.SMEM),        # rates (2,)
        ],
        out_specs=pl.BlockSpec((1, 1, HP, tn), lambda ib, g, j: (ib, g, 0, j)),
        compiler_params=pltpu.CompilerParams(
            dimension_semantics=("parallel", "parallel", "parallel"),
            vmem_limit_bytes=_VMEM_BUDGET),
    )(xk, wk, oatt_g, rates)


# ------------------------------- forward -------------------------------------

def acmix_forward(x, p, *, head, kernel_att=7, kernel_conv=3, stride=1, dilation=1,
                  mxu_dtype=jnp.bfloat16):
    """ACmix forward.  x: (b, in_planes, d, w, h) NCDHW, params from init_params."""
    # TODO(synk): stride > 1 sub-sampling of q_att / pe not implemented (module default is 1).
    assert stride == 1
    b, cin, d, w, h = x.shape
    C = p["w1"].shape[0]                  # out_planes
    head_dim = C // head
    kc, ka = kernel_conv, kernel_att
    kc2 = kc * kc
    S = d * w * h
    scaling = float(head_dim) ** (-0.5)

    # --- fused q/k/v 1x1 conv (channel-first, no layout round trips) ---------
    x_cf = x.reshape(b, cin, S)
    w_qkv = jnp.concatenate([p["w1"], p["w2"], p["w3"]], axis=0)      # (3C, cin)
    b_qkv = jnp.concatenate([p["b1"], p["b2"], p["b3"]], axis=0)      # (3C,)
    qkv = conv1x1_cf(x_cf, w_qkv, b_qkv, mxu_dtype=mxu_dtype)         # (b, 3C, S) f32

    # --- positional encoding (conv_p) + batch-independent per-tap pe diff ----
    factor_h = closest_factor_to_sqrt(d)
    factor_w = d // factor_h
    H2, W2 = factor_h * h, factor_w * w
    pad_att = (dilation * (ka - 1) + 1) // 2
    assert H2 > pad_att and W2 > pad_att, "reflection padding needs extent > pad"

    pos = position(d, h, w).reshape(1, 3, S)
    pe = conv1x1_cf(pos, p["wp"], p["bp"], mxu_dtype=mxu_dtype)[0]    # (head_dim, S)
    taps = [(t // ka, t % ka) for t in range(ka * ka)]
    pe2 = pe.reshape(head_dim, H2, W2)
    pe_pad = jnp.pad(pe2, ((0, 0), (pad_att, pad_att), (pad_att, pad_att)),
                     mode="reflect")
    pe_diff = jnp.stack(
        [pe2 - pe_pad[:, ky:ky + H2, kx:kx + W2] for ky, kx in taps], axis=0
    ).reshape(ka * ka, head_dim, S)

    # --- per-tap unfolded K / V (lane-dense blocks, tap as a leading dim) ----
    # The ReflectionPad2d + nn.Unfold (misaligned lane shifts) stays in the XLA
    # wrapper so all in-kernel accesses are 128-lane aligned.
    BH = b * head
    q_att = qkv[:, 0 * C:1 * C, :].reshape(BH, head_dim, S)
    k2 = qkv[:, 1 * C:2 * C, :].reshape(BH, head_dim, H2, W2)
    v2 = qkv[:, 2 * C:3 * C, :].reshape(BH, head_dim, H2, W2)
    rpad = lambda a: jnp.pad(a, ((0, 0), (0, 0), (pad_att, pad_att),
                                 (pad_att, pad_att)), mode="reflect")
    unfold = lambda a: jnp.stack(
        [a[:, :, ky:ky + H2, kx:kx + W2] for ky, kx in taps], axis=1
    ).reshape(BH, ka * ka, head_dim, S)
    k_unf = unfold(rpad(k2))
    v_unf = unfold(rpad(v2))

    out_att = attention_pallas(q_att, k_unf, v_unf, pe_diff, scaling)  # (BH, hd, S)

    # --- fc: 1x1 conv over the 3*head axis, channel-first --------------------
    q3 = qkv.reshape(b, 3 * head, head_dim * S)      # channel splits as (3*head, head_dim)
    f_all = conv1x1_cf(q3, p["wfc"], jnp.zeros((kc2,), jnp.float32),
                       mxu_dtype=mxu_dtype)          # (b, kc2, head_dim*S)
    f_conv = f_all.reshape(b, kc2 * head_dim, d, w * h)

    # --- grouped dep_conv as per-group im2col matmul + fused combine ---------
    G = head_dim                                     # number of groups
    f_g = f_conv.reshape(b, G, kc2, d, w * h)        # group-major channel split
    f_pad = jnp.pad(f_g, ((0, 0), (0, 0), (0, 0), (1, 1), (1, 1)))   # Conv2d zero pad=1
    conv_taps = [(t // kc, t % kc) for t in range(kc2)]
    x_taps = jnp.stack(
        [f_pad[:, :, :, ky:ky + d, kx:kx + w * h] for ky, kx in conv_taps], axis=2
    ).reshape(b, G, kc2 * kc2, d * w * h)            # last-dim index = tap*kc2 + in_chan

    head_per_group = C // G                          # == head
    w_dep_g = p["w_dep"].reshape(G, head_per_group, kc2, kc, kc)
    w_dep_g = jnp.transpose(w_dep_g, (0, 1, 3, 4, 2)).reshape(
        G, head_per_group, kc2 * kc2)                # index = tap*kc2 + in_chan

    oatt_g = out_att.reshape(b, G, head_per_group, S)
    out = depconv_combine(x_taps, w_dep_g, oatt_g, p["rates"], mxu_dtype=mxu_dtype)
    return out.reshape(b, C, d, w, h)


# --------------------- pure-JAX reference (for verification) -----------------

def acmix_reference(x, p, *, head, kernel_att=7, kernel_conv=3, dilation=1):
    hp = jax.lax.Precision.HIGHEST
    b, cin, d, w, h = x.shape
    C = p["w1"].shape[0]
    hd = C // head
    kc, ka = kernel_conv, kernel_att
    scaling = float(hd) ** (-0.5)

    def conv1x1(inp, wgt, bias):
        y = jnp.einsum("oc,nc...->no...", wgt, inp, precision=hp)
        if bias is not None:
            y = y + bias.reshape((1, -1) + (1,) * (inp.ndim - 2))
        return y

    q = conv1x1(x, p["w1"], p["b1"])
    k = conv1x1(x, p["w2"], p["b2"])
    v = conv1x1(x, p["w3"], p["b3"])

    fh = closest_factor_to_sqrt(d)
    H2, W2 = fh * h, (d // fh) * w
    pe = conv1x1(position(d, h, w), p["wp"], p["bp"]).reshape(1, hd, H2, W2)

    q_att = (q * scaling).reshape(b * head, hd, H2, W2)
    k_att = k.reshape(b * head, hd, H2, W2)
    v_att = v.reshape(b * head, hd, H2, W2)

    pad = (dilation * (ka - 1) + 1) // 2
    rp = lambda a: jnp.pad(a, ((0, 0), (0, 0), (pad, pad), (pad, pad)), mode="reflect")
    taps = [(t // ka, t % ka) for t in range(ka * ka)]
    unf = lambda a: jnp.stack([a[:, :, ky:ky + H2, kx:kx + W2] for ky, kx in taps],
                              axis=2)                    # (B, hd, ka*ka, H2, W2)
    unfold_k = unf(rp(k_att))
    unfold_pe = unf(rp(pe))
    unfold_v = unf(rp(v_att))

    att = (q_att[:, :, None] * (unfold_k + pe[:, :, None] - unfold_pe)).sum(axis=1)
    att = jax.nn.softmax(att, axis=1)
    out_att = (att[:, None] * unfold_v).sum(axis=2).reshape(b, C, d, w, h)

    S = d * h * w
    cat = jnp.concatenate([q.reshape(b, head, hd, S),
                           k.reshape(b, head, hd, S),
                           v.reshape(b, head, hd, S)], axis=1)     # (b, 3*head, hd, S)
    f_all = jnp.einsum("tm,bmcs->btcs", p["wfc"], cat, precision=hp)
    f_conv = f_all.reshape(b, kc * kc * hd, d, h * w)

    out_conv = jax.lax.conv_general_dilated(
        f_conv, p["w_dep"], window_strides=(1, 1), padding=((1, 1), (1, 1)),
        dimension_numbers=("NCHW", "OIHW", "NCHW"),
        feature_group_count=hd, precision=hp).reshape(b, C, d, w, h)

    return p["rates"][0] * out_att + p["rates"][1] * out_conv


# ------------------------------ param init -----------------------------------

def init_params(key, in_planes, out_planes, head, kernel_conv=3):
    head_dim = out_planes // head
    kc2 = kernel_conv * kernel_conv
    ks = jax.random.split(key, 8)
    s = 0.1
    one_hot = jnp.eye(kc2, dtype=jnp.float32).reshape(kc2, kernel_conv, kernel_conv)
    return {
        "w1": s * jax.random.normal(ks[0], (out_planes, in_planes), jnp.float32),
        "b1": s * jax.random.normal(ks[1], (out_planes,), jnp.float32),
        "w2": s * jax.random.normal(ks[2], (out_planes, in_planes), jnp.float32),
        "b2": s * jax.random.normal(ks[3], (out_planes,), jnp.float32),
        "w3": s * jax.random.normal(ks[4], (out_planes, in_planes), jnp.float32),
        "b3": s * jax.random.normal(ks[5], (out_planes,), jnp.float32),
        "wp": s * jax.random.normal(ks[6], (head_dim, 3), jnp.float32),
        "bp": jnp.zeros((head_dim,), jnp.float32),
        "wfc": s * jax.random.normal(ks[7], (kc2, 3 * head), jnp.float32),
        # dep_conv weight: the one-hot shift kernel from reset_parameters().
        # It is a learnable grouped Conv2d weight in the reference, so the
        # kernels treat it generically (grouped matmul), not as fixed shifts.
        "w_dep": jnp.broadcast_to(one_hot[None],
                                  (out_planes, kc2, kernel_conv, kernel_conv)
                                  ).astype(jnp.float32),
        # dep_conv.bias is None in the reference (init_rate_0 returns None).
        "rates": jnp.array([0.5, 0.5], jnp.float32),   # rate1 = rate2 = 0.5
    }


# --------------------------------- main ---------------------------------------

if __name__ == "__main__":
    B, IN_PLANES, OUT_PLANES, HEAD = 2, 4, 8, 4
    D, W, H = 4, 8, 8   # x layout: (b, in_planes, d, w, h), matching PyTorch NCDHW

    root = jax.random.PRNGKey(0)
    kx, kparam = jax.random.split(root)
    x = jax.random.normal(kx, (B, IN_PLANES, D, W, H), jnp.float32)
    params = init_params(kparam, IN_PLANES, OUT_PLANES, HEAD)

    fwd = jax.jit(functools.partial(acmix_forward, head=HEAD, kernel_att=7,
                                    kernel_conv=3, stride=1, dilation=1,
                                    mxu_dtype=jnp.bfloat16))
    out = jax.block_until_ready(fwd(x, params))

    assert out.shape == (B, OUT_PLANES, D, W, H), out.shape
    assert bool(jnp.all(jnp.isfinite(out)))

    # numerical check vs a pure-JAX transcription of the PyTorch forward
    ref = jax.block_until_ready(
        acmix_reference(x, params, head=HEAD, kernel_att=7, kernel_conv=3, dilation=1))
    max_err = float(jnp.max(jnp.abs(out - ref)))
    assert max_err < 5e-2, f"mismatch vs reference: max |err| = {max_err}"

    print("KERNEL_OK")
</pallas_src>

<mosaic_0001>
module attributes {stable_mosaic.version = 11 : i64} {
  func.func @_conv1x1_cf_kernel(%arg0: i32, %arg1: i32, %arg2: memref<1x3x256xbf16, #tpu.memory_space<vmem>>, %arg3: memref<2x3xbf16, #tpu.memory_space<vmem>>, %arg4: memref<2x1xf32, #tpu.memory_space<vmem>>, %arg5: memref<1x2x256xf32, #tpu.memory_space<vmem>>) attributes {dimension_semantics = [#tpu.dimension_semantics<parallel>, #tpu.dimension_semantics<parallel>], iteration_bounds = array<i64: 1, 1>, scalar_prefetch = 0 : i64, scratch_operands = 0 : i64, tpu.core_type = #tpu.core_type<tc>, window_params = [{transform_indices = @transform_0, window_bounds = array<i64: 1, 3, 256>}, {pipeline_mode = #tpu.pipeline_mode<synchronous>, transform_indices = @transform_1, window_bounds = array<i64: 2, 3>}, {pipeline_mode = #tpu.pipeline_mode<synchronous>, transform_indices = @transform_2, window_bounds = array<i64: 2, 1>}, {transform_indices = @transform_3, window_bounds = array<i64: 1, 2, 256>}]} {
    %c0 = arith.constant 0 : index
    %c0_0 = arith.constant 0 : index
    %0 = vector.load %arg3[%c0, %c0_0] : memref<2x3xbf16, #tpu.memory_space<vmem>>, vector<2x3xbf16>
    %c0_1 = arith.constant 0 : index
    %c0_2 = arith.constant 0 : index
    %c0_3 = arith.constant 0 : index
    %1 = vector.load %arg2[%c0_1, %c0_2, %c0_3] : memref<1x3x256xbf16, #tpu.memory_space<vmem>>, vector<1x3x256xbf16>
    %2 = vector.shape_cast %1 : vector<1x3x256xbf16> to vector<3x256xbf16>
    %cst = arith.constant dense<0.000000e+00> : vector<2x256xf32>
    %3 = tpu.matmul %0, %2, %cst {dimension_numbers = #tpu.dot_dimension_numbers<[1], [0], [0], [1], [0, 0, 1, 1], [], []>} : vector<2x3xbf16>, vector<3x256xbf16>, vector<2x256xf32> -> vector<2x256xf32>
    %c0_4 = arith.constant 0 : index
    %c0_5 = arith.constant 0 : index
    %4 = vector.load %arg4[%c0_4, %c0_5] : memref<2x1xf32, #tpu.memory_space<vmem>>, vector<2x1xf32>
    %5 = vector.broadcast %4 : vector<2x1xf32> to vector<2x256xf32>
    %6 = arith.addf %3, %5 : vector<2x256xf32>
    %c0_6 = arith.constant 0 : index
    %c0_7 = arith.constant 0 : index
    %c0_8 = arith.constant 0 : index
    %7 = vector.load %arg5[%c0_6, %c0_7, %c0_8] : memref<1x2x256xf32, #tpu.memory_space<vmem>>, vector<1x2x256xf32>
    %8 = vector.shape_cast %7 : vector<1x2x256xf32> to vector<2x256xf32>
    %9 = vector.shape_cast %6 : vector<2x256xf32> to vector<1x2x256xf32>
    tpu.vector_store %arg5[%c0_6, %c0_7, %c0_8], %9 {strides = array<i32>} : memref<1x2x256xf32, #tpu.memory_space<vmem>>, vector<1x2x256xf32>,
    return
  }
  func.func @transform_0(%arg0: i32, %arg1: i32) -> (i32, i32, i32) {
    %c0_i32 = arith.constant 0 : i32
    %c0_i32_0 = arith.constant 0 : i32
    return %arg0, %c0_i32, %arg1 : i32, i32, i32
  }
  func.func @transform_1(%arg0: i32, %arg1: i32) -> (i32, i32) {
    %c0_i32 = arith.constant 0 : i32
    %c0_i32_0 = arith.constant 0 : i32
    %c0_i32_1 = arith.constant 0 : i32
    return %c0_i32, %c0_i32_0 : i32, i32
  }
  func.func @transform_2(%arg0: i32, %arg1: i32) -> (i32, i32) {
    %c0_i32 = arith.constant 0 : i32
    %c0_i32_0 = arith.constant 0 : i32
    %c0_i32_1 = arith.constant 0 : i32
    return %c0_i32, %c0_i32_0 : i32, i32
  }
  func.func @transform_3(%arg0: i32, %arg1: i32) -> (i32, i32, i32) {
    %c0_i32 = arith.constant 0 : i32
    %c0_i32_0 = arith.constant 0 : i32
    return %arg0, %c0_i32, %arg1 : i32, i32, i32
  }
}

module attributes {stable_mosaic.version = 11 : i64} {
  func.func @_conv1x1_cf_kernel(%arg0: i32, %arg1: i32, %arg2: memref<1x4x256xbf16, #tpu.memory_space<vmem>>, %arg3: memref<24x4xbf16, #tpu.memory_space<vmem>>, %arg4: memref<24x1xf32, #tpu.memory_space<vmem>>, %arg5: memref<1x24x256xf32, #tpu.memory_space<vmem>>) attributes {dimension_semantics = [#tpu.dimension_semantics<parallel>, #tpu.dimension_semantics<parallel>], iteration_bounds = array<i64: 2, 1>, scalar_prefetch = 0 : i64, scratch_operands = 0 : i64, tpu.core_type = #tpu.core_type<tc>, window_params = [{transform_indices = @transform_0, window_bounds = array<i64: 1, 4, 256>}, {pipeline_mode = #tpu.pipeline_mode<synchronous>, transform_indices = @transform_1, window_bounds = array<i64: 24, 4>}, {pipeline_mode = #tpu.pipeline_mode<synchronous>, transform_indices = @transform_2, window_bounds = array<i64: 24, 1>}, {transform_indices = @transform_3, window_bounds = array<i64: 1, 24, 256>}]} {
    %c0 = arith.constant 0 : index
    %c0_0 = arith.constant 0 : index
    %0 = vector.load %arg3[%c0, %c0_0] : memref<24x4xbf16, #tpu.memory_space<vmem>>, vector<24x4xbf16>
    %c0_1 = arith.constant 0 : index
    %c0_2 = arith.constant 0 : index
    %c0_3 = arith.constant 0 : index
    %1 = vector.load %arg2[%c0_1, %c0_2, %c0_3] : memref<1x4x256xbf16, #tpu.memory_space<vmem>>, vector<1x4x256xbf16>
    %2 = vector.shape_cast %1 : vector<1x4x256xbf16> to vector<4x256xbf16>
    %cst = arith.constant dense<0.000000e+00> : vector<24x256xf32>
    %3 = tpu.matmul %0, %2, %cst {dimension_numbers = #tpu.dot_dimension_numbers<[1], [0], [0], [1], [0, 0, 1, 1], [], []>} : vector<24x4xbf16>, vector<4x256xbf16>, vector<24x256xf32> -> vector<24x256xf32>
    %c0_4 = arith.constant 0 : index
    %c0_5 = arith.constant 0 : index
    %4 = vector.load %arg4[%c0_4, %c0_5] : memref<24x1xf32, #tpu.memory_space<vmem>>, vector<24x1xf32>
    %5 = vector.broadcast %4 : vector<24x1xf32> to vector<24x256xf32>
    %6 = arith.addf %3, %5 : vector<24x256xf32>
    %c0_6 = arith.constant 0 : index
    %c0_7 = arith.constant 0 : index
    %c0_8 = arith.constant 0 : index
    %7 = vector.load %arg5[%c0_6, %c0_7, %c0_8] : memref<1x24x256xf32, #tpu.memory_space<vmem>>, vector<1x24x256xf32>
    %8 = vector.shape_cast %7 : vector<1x24x256xf32> to vector<24x256xf32>
    %9 = vector.shape_cast %6 : vector<24x256xf32> to vector<1x24x256xf32>
    tpu.vector_store %arg5[%c0_6, %c0_7, %c0_8], %9 {strides = array<i32>} : memref<1x24x256xf32, #tpu.memory_space<vmem>>, vector<1x24x256xf32>,
    return
  }
  func.func @transform_0(%arg0: i32, %arg1: i32) -> (i32, i32, i32) {
    %c0_i32 = arith.constant 0 : i32
    %c0_i32_0 = arith.constant 0 : i32
    return %arg0, %c0_i32, %arg1 : i32, i32, i32
  }
  func.func @transform_1(%arg0: i32, %arg1: i32) -> (i32, i32) {
    %c0_i32 = arith.constant 0 : i32
    %c0_i32_0 = arith.constant 0 : i32
    %c0_i32_1 = arith.constant 0 : i32
    return %c0_i32, %c0_i32_0 : i32, i32
  }
  func.func @transform_2(%arg0: i32, %arg1: i32) -> (i32, i32) {
    %c0_i32 = arith.constant 0 : i32
    %c0_i32_0 = arith.constant 0 : i32
    %c0_i32_1 = arith.constant 0 : i32
    return %c0_i32, %c0_i32_0 : i32, i32
  }
  func.func @transform_3(%arg0: i32, %arg1: i32) -> (i32, i32, i32) {
    %c0_i32 = arith.constant 0 : i32
    %c0_i32_0 = arith.constant 0 : i32
    return %arg0, %c0_i32, %arg1 : i32, i32, i32
  }
}

module attributes {stable_mosaic.version = 11 : i64} {
  func.func @_conv1x1_cf_kernel(%arg0: i32, %arg1: i32, %arg2: memref<1x12x512xbf16, #tpu.memory_space<vmem>>, %arg3: memref<9x12xbf16, #tpu.memory_space<vmem>>, %arg4: memref<9x1xf32, #tpu.memory_space<vmem>>, %arg5: memref<1x9x512xf32, #tpu.memory_space<vmem>>) attributes {dimension_semantics = [#tpu.dimension_semantics<parallel>, #tpu.dimension_semantics<parallel>], iteration_bounds = array<i64: 2, 1>, scalar_prefetch = 0 : i64, scratch_operands = 0 : i64, tpu.core_type = #tpu.core_type<tc>, window_params = [{transform_indices = @transform_0, window_bounds = array<i64: 1, 12, 512>}, {pipeline_mode = #tpu.pipeline_mode<synchronous>, transform_indices = @transform_1, window_bounds = array<i64: 9, 12>}, {pipeline_mode = #tpu.pipeline_mode<synchronous>, transform_indices = @transform_2, window_bounds = array<i64: 9, 1>}, {transform_indices = @transform_3, window_bounds = array<i64: 1, 9, 512>}]} {
    %c0 = arith.constant 0 : index
    %c0_0 = arith.constant 0 : index
    %0 = vector.load %arg3[%c0, %c0_0] : memref<9x12xbf16, #tpu.memory_space<vmem>>, vector<9x12xbf16>
    %c0_1 = arith.constant 0 : index
    %c0_2 = arith.constant 0 : index
    %c0_3 = arith.constant 0 : index
    %1 = vector.load %arg2[%c0_1, %c0_2, %c0_3] : memref<1x12x512xbf16, #tpu.memory_space<vmem>>, vector<1x12x512xbf16>
    %2 = vector.shape_cast %1 : vector<1x12x512xbf16> to vector<12x512xbf16>
    %cst = arith.constant dense<0.000000e+00> : vector<9x512xf32>
    %3 = tpu.matmul %0, %2, %cst {dimension_numbers = #tpu.dot_dimension_numbers<[1], [0], [0], [1], [0, 0, 1, 1], [], []>} : vector<9x12xbf16>, vector<12x512xbf16>, vector<9x512xf32> -> vector<9x512xf32>
    %c0_4 = arith.constant 0 : index
    %c0_5 = arith.constant 0 : index
    %4 = vector.load %arg4[%c0_4, %c0_5] : memref<9x1xf32, #tpu.memory_space<vmem>>, vector<9x1xf32>
    %5 = vector.broadcast %4 : vector<9x1xf32> to vector<9x512xf32>
    %6 = arith.addf %3, %5 : vector<9x512xf32>
    %c0_6 = arith.constant 0 : index
    %c0_7 = arith.constant 0 : index
    %c0_8 = arith.constant 0 : index
    %7 = vector.load %arg5[%c0_6, %c0_7, %c0_8] : memref<1x9x512xf32, #tpu.memory_space<vmem>>, vector<1x9x512xf32>
    %8 = vector.shape_cast %7 : vector<1x9x512xf32> to vector<9x512xf32>
    %9 = vector.shape_cast %6 : vector<9x512xf32> to vector<1x9x512xf32>
    tpu.vector_store %arg5[%c0_6, %c0_7, %c0_8], %9 {strides = array<i32>} : memref<1x9x512xf32, #tpu.memory_space<vmem>>, vector<1x9x512xf32>,
    return
  }
  func.func @transform_0(%arg0: i32, %arg1: i32) -> (i32, i32, i32) {
    %c0_i32 = arith.constant 0 : i32
    %c0_i32_0 = arith.constant 0 : i32
    return %arg0, %c0_i32, %arg1 : i32, i32, i32
  }
  func.func @transform_1(%arg0: i32, %arg1: i32) -> (i32, i32) {
    %c0_i32 = arith.constant 0 : i32
    %c0_i32_0 = arith.constant 0 : i32
    %c0_i32_1 = arith.constant 0 : i32
    return %c0_i32, %c0_i32_0 : i32, i32
  }
  func.func @transform_2(%arg0: i32, %arg1: i32) -> (i32, i32) {
    %c0_i32 = arith.constant 0 : i32
    %c0_i32_0 = arith.constant 0 : i32
    %c0_i32_1 = arith.constant 0 : i32
    return %c0_i32, %c0_i32_0 : i32, i32
  }
  func.func @transform_3(%arg0: i32, %arg1: i32) -> (i32, i32, i32) {
    %c0_i32 = arith.constant 0 : i32
    %c0_i32_0 = arith.constant 0 : i32
    return %arg0, %c0_i32, %arg1 : i32, i32, i32
  }
}

module attributes {stable_mosaic.version = 11 : i64} {
  func.func @_att_online_kernel(%arg0: i32, %arg1: i32, %arg2: i32, %arg3: memref<1x2x256xf32, #tpu.memory_space<vmem>>, %arg4: memref<1x49x2x256xf32, #tpu.memory_space<vmem>>, %arg5: memref<1x49x2x256xf32, #tpu.memory_space<vmem>>, %arg6: memref<49x2x256xf32, #tpu.memory_space<vmem>>, %arg7: memref<1x2x256xf32, #tpu.memory_space<vmem>>, %arg8: memref<1x256xf32, #tpu.memory_space<vmem>>, %arg9: memref<1x256xf32, #tpu.memory_space<vmem>>, %arg10: memref<2x256xf32, #tpu.memory_space<vmem>>) attributes {dimension_semantics = [#tpu.dimension_semantics<parallel>, #tpu.dimension_semantics<parallel>, #tpu.dimension_semantics<arbitrary>], iteration_bounds = array<i64: 8, 1, 1>, scalar_prefetch = 0 : i64, scratch_operands = 3 : i64, tpu.core_type = #tpu.core_type<tc>, window_params = [{transform_indices = @transform_0, window_bounds = array<i64: 1, 2, 256>}, {transform_indices = @transform_1, window_bounds = array<i64: 1, 49, 2, 256>}, {transform_indices = @transform_2, window_bounds = array<i64: 1, 49, 2, 256>}, {transform_indices = @transform_3, window_bounds = array<i64: 49, 2, 256>}, {transform_indices = @transform_4, window_bounds = array<i64: 1, 2, 256>}]} {
    %c0_i32 = arith.constant 0 : i32
    %0 = arith.cmpi eq, %arg2, %c0_i32 : i32
    %1 = arith.extui %0 : i1 to i32
    %c0_i32_0 = arith.constant 0 : i32
    %2 = arith.cmpi ne, %1, %c0_i32_0 : i32
    scf.if %2 {
      %cst_32 = arith.constant 0xFF800000 : f32
      %45 = vector.broadcast %cst_32 : f32 to vector<1x256xf32>
      %c0_33 = arith.constant 0 : index
      %c0_34 = arith.constant 0 : index
      %46 = vector.load %arg8[%c0_33, %c0_34] : memref<1x256xf32, #tpu.memory_space<vmem>>, vector<1x256xf32>
      tpu.vector_store %arg8[%c0_33, %c0_34], %45 {strides = array<i32>} : memref<1x256xf32, #tpu.memory_space<vmem>>, vector<1x256xf32>,
      %cst_35 = arith.constant 0.000000e+00 : f32
      %47 = vector.broadcast %cst_35 : f32 to vector<1x256xf32>
      %c0_36 = arith.constant 0 : index
      %c0_37 = arith.constant 0 : index
      %48 = vector.load %arg9[%c0_36, %c0_37] : memref<1x256xf32, #tpu.memory_space<vmem>>, vector<1x256xf32>
      tpu.vector_store %arg9[%c0_36, %c0_37], %47 {strides = array<i32>} : memref<1x256xf32, #tpu.memory_space<vmem>>, vector<1x256xf32>,
      %cst_38 = arith.constant 0.000000e+00 : f32
      %49 = vector.broadcast %cst_38 : f32 to vector<2x256xf32>
      %c0_39 = arith.constant 0 : index
      %c0_40 = arith.constant 0 : index
      %50 = vector.load %arg10[%c0_39, %c0_40] : memref<2x256xf32, #tpu.memory_space<vmem>>, vector<2x256xf32>
      tpu.vector_store %arg10[%c0_39, %c0_40], %49 {strides = array<i32>} : memref<2x256xf32, #tpu.memory_space<vmem>>, vector<2x256xf32>,
    } else {
    }
    %c0 = arith.constant 0 : index
    %c0_1 = arith.constant 0 : index
    %c0_2 = arith.constant 0 : index
    %3 = vector.load %arg3[%c0, %c0_1, %c0_2] : memref<1x2x256xf32, #tpu.memory_space<vmem>>, vector<1x2x256xf32>
    %4 = vector.shape_cast %3 : vector<1x2x256xf32> to vector<2x256xf32>
    %cst = arith.constant 0.707106769 : f32
    %5 = vector.broadcast %cst : f32 to vector<2x256xf32>
    %6 = arith.mulf %4, %5 : vector<2x256xf32>
    %c0_3 = arith.constant 0 : index
    %c0_4 = arith.constant 0 : index
    %c0_5 = arith.constant 0 : index
    %c0_6 = arith.constant 0 : index
    %7 = vector.load %arg4[%c0_3, %c0_4, %c0_5, %c0_6] : memref<1x49x2x256xf32, #tpu.memory_space<vmem>>, vector<1x49x2x256xf32>
    %8 = vector.shape_cast %7 : vector<1x49x2x256xf32> to vector<49x2x256xf32>
    %c0_7 = arith.constant 0 : index
    %c0_8 = arith.constant 0 : index
    %c0_9 = arith.constant 0 : index
    %9 = vector.load %arg6[%c0_7, %c0_8, %c0_9] : memref<49x2x256xf32, #tpu.memory_space<vmem>>, vector<49x2x256xf32>
    %10 = arith.addf %8, %9 : vector<49x2x256xf32>
    %11 = vector.shape_cast %6 : vector<2x256xf32> to vector<1x2x256xf32>
    %12 = vector.broadcast %11 : vector<1x2x256xf32> to vector<49x2x256xf32>
    %13 = arith.mulf %10, %12 : vector<49x2x256xf32>
    %cst_10 = arith.constant dense<0.000000e+00> : vector<49x256xf32>
    %14 = vector.multi_reduction <add>, %13, %cst_10 [1] : vector<49x2x256xf32> to vector<49x256xf32>
    %c0_11 = arith.constant 0 : index
    %c0_12 = arith.constant 0 : index
    %15 = vector.load %arg8[%c0_11, %c0_12] : memref<1x256xf32, #tpu.memory_space<vmem>>, vector<1x256xf32>
    %cst_13 = arith.constant dense<0xFF800000> : vector<256xf32>
    %16 = vector.multi_reduction <maximumf>, %14, %cst_13 [0] : vector<49x256xf32> to vector<256xf32>
    %17 = vector.shape_cast %16 : vector<256xf32> to vector<1x256xf32>
    %18 = arith.maximumf %15, %17 : vector<1x256xf32>
    %19 = arith.subf %15, %18 : vector<1x256xf32>
    %20 = math.exp %19 : vector<1x256xf32>
    %21 = vector.broadcast %18 : vector<1x256xf32> to vector<49x256xf32>
    %22 = arith.subf %14, %21 : vector<49x256xf32>
    %23 = math.exp %22 : vector<49x256xf32>
    %c0_14 = arith.constant 0 : index
    %c0_15 = arith.constant 0 : index
    %24 = vector.load %arg9[%c0_14, %c0_15] : memref<1x256xf32, #tpu.memory_space<vmem>>, vector<1x256xf32>
    %25 = arith.mulf %20, %24 : vector<1x256xf32>
    %cst_16 = arith.constant dense<0.000000e+00> : vector<256xf32>
    %26 = vector.multi_reduction <add>, %23, %cst_16 [0] : vector<49x256xf32> to vector<256xf32>
    %27 = vector.shape_cast %26 : vector<256xf32> to vector<1x256xf32>
    %28 = arith.addf %25, %27 : vector<1x256xf32>
    %c0_17 = arith.constant 0 : index
    %c0_18 = arith.constant 0 : index
    %29 = vector.load %arg9[%c0_17, %c0_18] : memref<1x256xf32, #tpu.memory_space<vmem>>, vector<1x256xf32>
    tpu.vector_store %arg9[%c0_17, %c0_18], %28 {strides = array<i32>} : memref<1x256xf32, #tpu.memory_space<vmem>>, vector<1x256xf32>,
    %c0_19 = arith.constant 0 : index
    %c0_20 = arith.constant 0 : index
    %30 = vector.load %arg10[%c0_19, %c0_20] : memref<2x256xf32, #tpu.memory_space<vmem>>, vector<2x256xf32>
    %31 = vector.broadcast %20 : vector<1x256xf32> to vector<2x256xf32>
    %32 = arith.mulf %31, %30 : vector<2x256xf32>
    %33 = vector.shape_cast %23 : vector<49x256xf32> to vector<49x1x256xf32>
    %c0_21 = arith.constant 0 : index
    %c0_22 = arith.constant 0 : index
    %c0_23 = arith.constant 0 : index
    %c0_24 = arith.constant 0 : index
    %34 = vector.load %arg5[%c0_21, %c0_22, %c0_23, %c0_24] : memref<1x49x2x256xf32, #tpu.memory_space<vmem>>, vector<1x49x2x256xf32>
    %35 = vector.shape_cast %34 : vector<1x49x2x256xf32> to vector<49x2x256xf32>
    %36 = vector.broadcast %33 : vector<49x1x256xf32> to vector<49x2x256xf32>
    %37 = arith.mulf %36, %35 : vector<49x2x256xf32>
    %cst_25 = arith.constant dense<0.000000e+00> : vector<2x256xf32>
    %38 = vector.multi_reduction <add>, %37, %cst_25 [0] : vector<49x2x256xf32> to vector<2x256xf32>
    %39 = arith.addf %32, %38 : vector<2x256xf32>
    %c0_26 = arith.constant 0 : index
    %c0_27 = arith.constant 0 : index
    %40 = vector.load %arg10[%c0_26, %c0_27] : memref<2x256xf32, #tpu.memory_space<vmem>>, vector<2x256xf32>
    tpu.vector_store %arg10[%c0_26, %c0_27], %39 {strides = array<i32>} : memref<2x256xf32, #tpu.memory_space<vmem>>, vector<2x256xf32>,
    %c0_28 = arith.constant 0 : index
    %c0_29 = arith.constant 0 : index
    %41 = vector.load %arg8[%c0_28, %c0_29] : memref<1x256xf32, #tpu.memory_space<vmem>>, vector<1x256xf32>
    tpu.vector_store %arg8[%c0_28, %c0_29], %18 {strides = array<i32>} : memref<1x256xf32, #tpu.memory_space<vmem>>, vector<1x256xf32>,
    %c0_i32_30 = arith.constant 0 : i32
    %42 = arith.cmpi eq, %arg2, %c0_i32_30 : i32
    %43 = arith.extui %42 : i1 to i32
    %c0_i32_31 = arith.constant 0 : i32
    %44 = arith.cmpi ne, %43, %c0_i32_31 : i32
    scf.if %44 {
      %c0_32 = arith.constant 0 : index
      %c0_33 = arith.constant 0 : index
      %45 = vector.load %arg9[%c0_32, %c0_33] : memref<1x256xf32, #tpu.memory_space<vmem>>, vector<1x256xf32>
      %46 = tpu.reciprocal %45 {approx = true} : vector<1x256xf32> -> vector<1x256xf32>
      %c0_34 = arith.constant 0 : index
      %c0_35 = arith.constant 0 : index
      %47 = vector.load %arg10[%c0_34, %c0_35] : memref<2x256xf32, #tpu.memory_space<vmem>>, vector<2x256xf32>
      %48 = vector.broadcast %46 : vector<1x256xf32> to vector<2x256xf32>
      %49 = arith.mulf %47, %48 : vector<2x256xf32>
      %c0_36 = arith.constant 0 : index
      %c0_37 = arith.constant 0 : index
      %c0_38 = arith.constant 0 : index
      %50 = vector.load %arg7[%c0_36, %c0_37, %c0_38] : memref<1x2x256xf32, #tpu.memory_space<vmem>>, vector<1x2x256xf32>
      %51 = vector.shape_cast %50 : vector<1x2x256xf32> to vector<2x256xf32>
      %52 = vector.shape_cast %49 : vector<2x256xf32> to vector<1x2x256xf32>
      tpu.vector_store %arg7[%c0_36, %c0_37, %c0_38], %52 {strides = array<i32>} : memref<1x2x256xf32, #tpu.memory_space<vmem>>, vector<1x2x256xf32>,
    } else {
    }
    return
  }
  func.func @transform_0(%arg0: i32, %arg1: i32, %arg2: i32) -> (i32, i32, i32) {
    %c0_i32 = arith.constant 0 : i32
    %c0_i32_0 = arith.constant 0 : i32
    return %arg0, %c0_i32, %arg1 : i32, i32, i32
  }
  func.func @transform_1(%arg0: i32, %arg1: i32, %arg2: i32) -> (i32, i32, i32, i32) {
    %c0_i32 = arith.constant 0 : i32
    %c0_i32_0 = arith.constant 0 : i32
    return %arg0, %arg2, %c0_i32, %arg1 : i32, i32, i32, i32
  }
  func.func @transform_2(%arg0: i32, %arg1: i32, %arg2: i32) -> (i32, i32, i32, i32) {
    %c0_i32 = arith.constant 0 : i32
    %c0_i32_0 = arith.constant 0 : i32
    return %arg0, %arg2, %c0_i32, %arg1 : i32, i32, i32, i32
  }
  func.func @transform_3(%arg0: i32, %arg1: i32, %arg2: i32) -> (i32, i32, i32) {
    %c0_i32 = arith.constant 0 : i32
    %c0_i32_0 = arith.constant 0 : i32
    return %arg2, %c0_i32, %arg1 : i32, i32, i32
  }
  func.func @transform_4(%arg0: i32, %arg1: i32, %arg2: i32) -> (i32, i32, i32) {
    %c0_i32 = arith.constant 0 : i32
    %c0_i32_0 = arith.constant 0 : i32
    return %arg0, %c0_i32, %arg1 : i32, i32, i32
  }
}

module attributes {stable_mosaic.version = 11 : i64} {
  func.func @_depconv_kernel(%arg0: i32, %arg1: i32, %arg2: i32, %arg3: memref<1x1x81x256xbf16, #tpu.memory_space<vmem>>, %arg4: memref<1x4x81xbf16, #tpu.memory_space<vmem>>, %arg5: memref<1x1x4x256xf32, #tpu.memory_space<vmem>>, %arg6: memref<2xf32, #tpu.memory_space<smem>>, %arg7: memref<1x1x4x256xf32, #tpu.memory_space<vmem>>) attributes {dimension_semantics = [#tpu.dimension_semantics<parallel>, #tpu.dimension_semantics<parallel>, #tpu.dimension_semantics<parallel>], iteration_bounds = array<i64: 2, 2, 1>, scalar_prefetch = 0 : i64, scratch_operands = 0 : i64, tpu.core_type = #tpu.core_type<tc>, window_params = [{transform_indices = @transform_0, window_bounds = array<i64: 1, 1, 81, 256>}, {transform_indices = @transform_1, window_bounds = array<i64: 1, 4, 81>}, {transform_indices = @transform_2, window_bounds = array<i64: 1, 1, 4, 256>}, {transform_indices = @transform_3, window_bounds = array<i64: 2>}, {transform_indices = @transform_4, window_bounds = array<i64: 1, 1, 4, 256>}]} {
    %c0 = arith.constant 0 : index
    %c0_0 = arith.constant 0 : index
    %c0_1 = arith.constant 0 : index
    %0 = vector.load %arg4[%c0, %c0_0, %c0_1] : memref<1x4x81xbf16, #tpu.memory_space<vmem>>, vector<1x4x81xbf16>
    %1 = vector.shape_cast %0 : vector<1x4x81xbf16> to vector<4x81xbf16>
    %c0_2 = arith.constant 0 : index
    %c0_3 = arith.constant 0 : index
    %c0_4 = arith.constant 0 : index
    %c0_5 = arith.constant 0 : index
    %2 = vector.load %arg3[%c0_2, %c0_3, %c0_4, %c0_5] : memref<1x1x81x256xbf16, #tpu.memory_space<vmem>>, vector<1x1x81x256xbf16>
    %3 = vector.shape_cast %2 : vector<1x1x81x256xbf16> to vector<81x256xbf16>
    %cst = arith.constant dense<0.000000e+00> : vector<4x256xf32>
    %4 = tpu.matmul %1, %3, %cst {dimension_numbers = #tpu.dot_dimension_numbers<[1], [0], [0], [1], [0, 0, 1, 1], [], []>} : vector<4x81xbf16>, vector<81x256xbf16>, vector<4x256xf32> -> vector<4x256xf32>
    %c0_6 = arith.constant 0 : index
    %5 = memref.load %arg6[%c0_6] : memref<2xf32, #tpu.memory_space<smem>>
    %c0_7 = arith.constant 0 : index
    %c0_8 = arith.constant 0 : index
    %c0_9 = arith.constant 0 : index
    %c0_10 = arith.constant 0 : index
    %6 = vector.load %arg5[%c0_7, %c0_8, %c0_9, %c0_10] : memref<1x1x4x256xf32, #tpu.memory_space<vmem>>, vector<1x1x4x256xf32>
    %7 = vector.shape_cast %6 : vector<1x1x4x256xf32> to vector<4x256xf32>
    %8 = vector.broadcast %5 : f32 to vector<4x256xf32>
    %9 = arith.mulf %8, %7 : vector<4x256xf32>
    %c1 = arith.constant 1 : index
    %10 = memref.load %arg6[%c1] : memref<2xf32, #tpu.memory_space<smem>>
    %11 = vector.broadcast %10 : f32 to vector<4x256xf32>
    %12 = arith.mulf %11, %4 : vector<4x256xf32>
    %13 = arith.addf %9, %12 : vector<4x256xf32>
    %c0_11 = arith.constant 0 : index
    %c0_12 = arith.constant 0 : index
    %c0_13 = arith.constant 0 : index
    %c0_14 = arith.constant 0 : index
    %14 = vector.load %arg7[%c0_11, %c0_12, %c0_13, %c0_14] : memref<1x1x4x256xf32, #tpu.memory_space<vmem>>, vector<1x1x4x256xf32>
    %15 = vector.shape_cast %14 : vector<1x1x4x256xf32> to vector<4x256xf32>
    %16 = vector.shape_cast %13 : vector<4x256xf32> to vector<1x1x4x256xf32>
    tpu.vector_store %arg7[%c0_11, %c0_12, %c0_13, %c0_14], %16 {strides = array<i32>} : memref<1x1x4x256xf32, #tpu.memory_space<vmem>>, vector<1x1x4x256xf32>,
    return
  }
  func.func @transform_0(%arg0: i32, %arg1: i32, %arg2: i32) -> (i32, i32, i32, i32) {
    %c0_i32 = arith.constant 0 : i32
    %c0_i32_0 = arith.constant 0 : i32
    return %arg0, %arg1, %c0_i32, %arg2 : i32, i32, i32, i32
  }
  func.func @transform_1(%arg0: i32, %arg1: i32, %arg2: i32) -> (i32, i32, i32) {
    %c0_i32 = arith.constant 0 : i32
    %c0_i32_0 = arith.constant 0 : i32
    %c0_i32_1 = arith.constant 0 : i32
    return %arg1, %c0_i32, %c0_i32_0 : i32, i32, i32
  }
  func.func @transform_2(%arg0: i32, %arg1: i32, %arg2: i32) -> (i32, i32, i32, i32) {
    %c0_i32 = arith.constant 0 : i32
    %c0_i32_0 = arith.constant 0 : i32
    return %arg0, %arg1, %c0_i32, %arg2 : i32, i32, i32, i32
  }
  func.func @transform_3(%arg0: i32, %arg1: i32, %arg2: i32) -> i32 {
    %c0_i32 = arith.constant 0 : i32
    %c0_i32_0 = arith.constant 0 : i32
    return %c0_i32 : i32
  }
  func.func @transform_4(%arg0: i32, %arg1: i32, %arg2: i32) -> (i32, i32, i32, i32) {
    %c0_i32 = arith.constant 0 : i32
    %c0_i32_0 = arith.constant 0 : i32
    return %arg0, %arg1, %c0_i32, %arg2 : i32, i32, i32, i32
  }
}

</mosaic_0001>

<llo_original>
// kernel: squeeze.1
$region0: #{squeeze.1}
  %s0 = inlined_call_operand.vmem [shape: f32[1,2,256], index: 0, kind: input, shape index: {}]
  %s1 = inlined_call_operand.vmem [shape: f32[2,16,16], index: 1, kind: output, shape index: {}]
  $region1: #{squeeze.1} parent=0
    #allocation0 [shape = 'u8[8192]{0}', space=vmem, size = 0x2000, scoped, tag = 'scoped mem for input reshape']
    %s3 = sshllo.u32 0, 2
    %s4 = scalar_lea.vmem %s0, 2
    %v5 = vld [vmem:[%s4] sm:%s3]
    %s6 = scalar_lea.vmem [#allocation0], 8
    %7 = vst [vmem:[%s6] sm:%s3] %v5
    %v8 = vld [vmem:[%s0] sm:%s3]
    %9 = vst [vmem:[#allocation0] sm:%s3] %v8
    %v10 = vld [vmem:[#allocation0] sm:$0x3]
    %vm11 = vcmask 130048
    %12 = vst.msk [vmem:[%s1] ss:$16 sm:$0x3] %vm11, %v10
    %s13 = scalar_lea.vmem [#allocation0], 8
    %v14 = vld [vmem:[%s13] sm:$0x3]
    %vm15 = vcmask 130048
    %s16 = scalar_lea.vmem %s1, 8
    %17 = vst.msk [vmem:[%s16] ss:$16 sm:$0x3] %vm15, %v14
    %v18 = vld.sshfl [vmem:[#allocation0] sm:$0xff pattern:$0x99999180]
    %19 = vrot.lane.b32.xlu0 %v18, 112
    %v20 = vpop.permute.xlu0 %19
    %vm21 = vcmask 130048
    %s22 = scalar_lea.vmem %s1, 1
    %23 = vst.msk [vmem:[%s22] ss:$8 sm:$0xf] %vm21, %v20
    %v24 = vld.sshfl [vmem:[#allocation0] sm:$0xff pattern:$0x99999180]
    %25 = vrot.lane.b32.xlu0 %v24, 96
    %v26 = vpop.permute.xlu0 %25
    %vm27 = vcmask 130048
    %s28 = scalar_lea.vmem %s1, 2
    %29 = vst.msk [vmem:[%s28] ss:$8 sm:$0xf] %vm27, %v26
    %v30 = vld.sshfl [vmem:[#allocation0] sm:$0xff pattern:$0x99999180]
    %31 = vrot.lane.b32.xlu0 %v30, 80
    %v32 = vpop.permute.xlu0 %31
    %vm33 = vcmask 130048
    %s34 = scalar_lea.vmem %s1, 3
    %35 = vst.msk [vmem:[%s34] ss:$8 sm:$0xf] %vm33, %v32
    %v36 = vld.sshfl [vmem:[#allocation0] sm:$0xff pattern:$0x99999180]
    %37 = vrot.lane.b32.xlu0 %v36, 64
    %v38 = vpop.permute.xlu0 %37
    %vm39 = vcmask 130048
    %s40 = scalar_lea.vmem %s1, 4
    %41 = vst.msk [vmem:[%s40] ss:$8 sm:$0xf] %vm39, %v38
    %v42 = vld.sshfl [vmem:[#allocation0] sm:$0xff pattern:$0x99999180]
    %43 = vrot.lane.b32.xlu0 %v42, 48
    %v44 = vpop.permute.xlu0 %43
    %vm45 = vcmask 130048
    %s46 = scalar_lea.vmem %s1, 5
    %47 = vst.msk [vmem:[%s46] ss:$8 sm:$0xf] %vm45, %v44
    %v48 = vld.sshfl [vmem:[#allocation0] sm:$0xff pattern:$0x99999180]
    %49 = vrot.lane.b32.xlu0 %v48, 32
    %v50 = vpop.permute.xlu0 %49
    %vm51 = vcmask 130048
    %s52 = scalar_lea.vmem %s1, 6
    %53 = vst.msk [vmem:[%s52] ss:$8 sm:$0xf] %vm51, %v50
    %v54 = vld.sshfl [vmem:[#allocation0] sm:$0xff pattern:$0x99999180]
    %55 = vrot.lane.b32.xlu0 %v54, 16
    %v56 = vpop.permute.xlu0 %55
    %vm57 = vcmask 130048
    %s58 = scalar_lea.vmem %s1, 7
    %59 = vst.msk [vmem:[%s58] ss:$8 sm:$0xf] %vm57, %v56

// kernel: acmix_forward.5
$region0: #{acmix_forward.5}
  #allocation0 [shape = 'u32[]', space=smem, size = 0x4, offset = 0x4, fixed_abs, tag = 'smem constant byte address 0x4 - core index']
  #allocation1 [shape = 'u32[144,128]{1,0:T(1,128)}', space=vmem, size = 0x12000, scoped, tag = 'internal scratch']
  %s0 = inlined_call_operand.vmem [shape: bf16[2,4,256], index: 0, kind: input, shape index: {}]
  %s1 = inlined_call_operand.vmem [shape: bf16[24,4], index: 1, kind: input, shape index: {}]
  %s2 = inlined_call_operand.vmem [shape: f32[24,1], index: 2, kind: input, shape index: {}]
  %s3 = inlined_call_operand.vmem [shape: f32[2,24,256], index: 3, kind: output, shape index: {}]
  %s4 = sld [smem:[#allocation0]]
  $region45: #{acmix_forward.5} parent=0
    _
  %s6 = ssub.s32 1, %s4
  %s7 = scalar_select 0, %s6, %s4
  loop: start=0, step=1, limit=4
  $region2: #{acmix_forward.5} parent=0 // loop_pre_header
    _
  $region3: #{acmix_forward.5} parent=0 // loop_header
    %s9 = sphi 0, %s13
    %p10 = scmp.ge.s32.totalorder %s9, 4
    %s16 = sphi 0, %s28
    %s17 = sphi 0, %s24
    %s18 = sphi 0, %s16
    %s19 = sphi 0, %s17
    %s20 = sphi 0, %s18
    %s21 = sphi 0, %s19
    %s33 = sphi 0, %s35
    %s36 = sphi 0, %s33
    %s37 = sphi 0, %s36
    %s53 = sphi 0, %s37
    %s57 = sphi 0, %s57
    %s59 = sphi 0, %s57
    %s60 = sphi 0, %s59
    %s74 = sphi 0, %s60
    %s78 = sphi 0, %s78
    %s80 = sphi 0, %s78
    %s81 = sphi 0, %s80
    %s95 = sphi 0, %s81
    %s103 = sphi 0, %s105
    %s106 = sphi 0, %s103
    %s107 = sphi 0, %s106
    %s123 = sphi 0, %s107
  $region4: #{acmix_forward.5} parent=0 // loop_header_branch
    %12 = sbr.rel (%p10) target = $region8
  $region5: #{acmix_forward.5} parent=0 // loop_body
    %s14 = ssub.s32 %s9, 1
    %s15 = ssub.s32 %s9, 2
    %s22 = sadd.s32 1, %s17
    %p23 = scmp.ge.s32.totalorder %s22, 1
    %s24 = scalar_select %p23, 0, %s22
    %s25 = sadd.s32 1, %s16
    %s26 = scalar_select %p23, %s25, %s16
    %p27 = scmp.ge.s32.totalorder %s26, 2
    %s28 = scalar_select %p27, 0, %s26
    %s29 = ssub.s32 %s16, %s28
    %s30 = ssub.s32 %s17, %s24
    %s31 = sor.u32 %s29, %s30
    %p32 = scmp.eq.s32.totalorder %s31, 0
    %s34 = sadd.s32 %s33, 1
    %s35 = scalar_select %p32, %s33, %s34
    %p38 = pneg %p32
    %p39 = scmp.eq.s32.totalorder %s9, 1
    %p40 = por %p38, %p39
    %p41 = scmp.ne.s32.totalorder %s33, %s36
    %p42 = scmp.eq.s32.totalorder %s9, 0
    %p43 = por %p41, %p42
    %p44 = scmp.ne.s32.totalorder %s33, %s36
    %p45 = scmp.eq.s32.totalorder %s14, 1
    %p46 = por %p44, %p45
    %p47 = scmp.ne.s32.totalorder %s36, %s37
    %p48 = scmp.eq.s32.totalorder %s14, 0
    %p49 = por %p47, %p48
    %p50 = scmp.ne.s32.totalorder %s36, %s37
    %p51 = scmp.eq.s32.totalorder %s15, 1
    %p52 = por %p50, %p51
    %p54 = scmp.ne.s32.totalorder %s37, %s53
    %p55 = scmp.eq.s32.totalorder %s15, 0
    %p56 = por %p54, %p55
    %s58 = sadd.s32 %s57, 1
    %p61 = scmp.eq.s32.totalorder %s9, 1
    %p62 = scmp.ne.s32.totalorder %s57, %s59
    %p63 = scmp.eq.s32.totalorder %s9, 0
    %p64 = por %p62, %p63
    %p65 = scmp.ne.s32.totalorder %s57, %s59
    %p66 = scmp.eq.s32.totalorder %s14, 1
    %p67 = por %p65, %p66
    %p68 = scmp.ne.s32.totalorder %s59, %s60
    %p69 = scmp.eq.s32.totalorder %s14, 0
    %p70 = por %p68, %p69
    %p71 = scmp.ne.s32.totalorder %s59, %s60
    %p72 = scmp.eq.s32.totalorder %s15, 1
    %p73 = por %p71, %p72
    %p75 = scmp.ne.s32.totalorder %s60, %s74
    %p76 = scmp.eq.s32.totalorder %s15, 0
    %p77 = por %p75, %p76
    %s79 = sadd.s32 %s78, 1
    %p82 = scmp.eq.s32.totalorder %s9, 1
    %p83 = scmp.ne.s32.totalorder %s78, %s80
    %p84 = scmp.eq.s32.totalorder %s9, 0
    %p85 = por %p83, %p84
    %p86 = scmp.ne.s32.totalorder %s78, %s80
    %p87 = scmp.eq.s32.totalorder %s14, 1
    %p88 = por %p86, %p87
    %p89 = scmp.ne.s32.totalorder %s80, %s81
    %p90 = scmp.eq.s32.totalorder %s14, 0
    %p91 = por %p89, %p90
    %p92 = scmp.ne.s32.totalorder %s80, %s81
    %p93 = scmp.eq.s32.totalorder %s15, 1
    %p94 = por %p92, %p93
    %p96 = scmp.ne.s32.totalorder %s81, %s95
    %p97 = scmp.eq.s32.totalorder %s15, 0
    %p98 = por %p96, %p97
    %s99 = ssub.s32 %s16, %s28
    %s100 = ssub.s32 %s17, %s24
    %s101 = sor.u32 %s99, %s100
    %p102 = scmp.eq.s32.totalorder %s101, 0
    %s104 = sadd.s32 %s103, 1
    %s105 = scalar_select %p102, %s103, %s104
    %p108 = pneg %p102
    %p109 = scmp.eq.s32.totalorder %s9, 1
    %p110 = por %p108, %p109
    %p111 = scmp.ne.s32.totalorder %s103, %s106
    %p112 = scmp.eq.s32.totalorder %s9, 0
    %p113 = por %p111, %p112
    %p114 = scmp.ne.s32.totalorder %s103, %s106
    %p115 = scmp.eq.s32.totalorder %s14, 1
    %p116 = por %p114, %p115
    %p117 = scmp.ne.s32.totalorder %s106, %s107
    %p118 = scmp.eq.s32.totalorder %s14, 0
    %p119 = por %p117, %p118
    %p120 = scmp.ne.s32.totalorder %s106, %s107
    %p121 = scmp.eq.s32.totalorder %s15, 1
    %p122 = por %p120, %p121
    %p124 = scmp.ne.s32.totalorder %s107, %s123
    %p125 = scmp.eq.s32.totalorder %s15, 0
    %p126 = por %p124, %p125
    %p127 = scmp.le.s32.totalorder 1, %s9
    %p128 = scmp.lt.s32.totalorder %s9, 3
    %p129 = pnand %p127, %p128
    %p130 = pneg %p129
    // Predicated region
    $region9: #{acmix_forward.5} parent=5 // pred_check
      _
    $region10: #{acmix_forward.5} parent=5 // pred_check_branch
      %132 = sbr.rel (%p129) target = $region12
    $region11: #{acmix_forward.5} parent=5 // pred_region
      %s133 = ssub.s32 %s9, 1
      // Predicated region
      $region13: #{acmix_forward.5} parent=11 // pred_check
        %p134 = pneg %p70
      $region14: #{acmix_forward.5} parent=11 // pred_check_branch
        %136 = sbr.rel (%p134) target = $region16
      $region15: #{acmix_forward.5} parent=11 // pred_region
        _
      $region16: #{acmix_forward.5} parent=11 // pred_fallthru
        _
      // Predicated region
      $region17: #{acmix_forward.5} parent=11 // pred_check
        %p137 = pneg %p91
      $region18: #{acmix_forward.5} parent=11 // pred_check_branch
        %139 = sbr.rel (%p137) target = $region20
      $region19: #{acmix_forward.5} parent=11 // pred_region
        _
      $region20: #{acmix_forward.5} parent=11 // pred_fallthru
        _
    $region12: #{acmix_forward.5} parent=5 // pred_fallthru
      _
    %p140 = scmp.lt.s32.totalorder %s9, 2
    // Predicated region
    $region21: #{acmix_forward.5} parent=5 // pred_check
      %p141 = pneg %p140
    $region22: #{acmix_forward.5} parent=5 // pred_check_branch
      %143 = sbr.rel (%p141) target = $region24
    $region23: #{acmix_forward.5} parent=5 // pred_region
      // Predicated region
      $region25: #{acmix_forward.5} parent=23 // pred_check
        %p144 = pneg %p43
      $region26: #{acmix_forward.5} parent=23 // pred_check_branch
        %146 = sbr.rel (%p144) target = $region28
      $region27: #{acmix_forward.5} parent=23 // pred_region
        %s147 = smul.u32 2, %s17
        %p148 = scmp.lt.s32.totalorder %s16, 1
        %s149 = scalar_select %p148, %s16, 1
        %p150 = scmp.lt.s32.totalorder %s147, 1
        %s151 = scalar_select %p150, %s147, 1
        %s152 = smul.addr %s149, 2
        %s153 = sadd.s32 %s151, %s152
        %s154 = smul.addr %s153, 2
        %s155 = scalar_lea.vmem %s0, %s154
        %s156 = smul.u32 2, %s17
      $region28: #{acmix_forward.5} parent=23 // pred_fallthru
        _
    $region24: #{acmix_forward.5} parent=5 // pred_fallthru
      _
    %p157 = scmp.le.s32.totalorder 1, %s9
    %p158 = scmp.lt.s32.totalorder %s9, 3
    %p159 = pnand %p157, %p158
    %p160 = pneg %p159
    // Predicated region
    $region29: #{acmix_forward.5} parent=5 // pred_check
      _
    $region30: #{acmix_forward.5} parent=5 // pred_check_branch
      %162 = sbr.rel (%p159) target = $region32
    $region31: #{acmix_forward.5} parent=5 // pred_region
      %s163 = ssub.s32 %s9, 1
      %s164 = smul.u32 2, %s19
      %p165 = scmp.lt.s32.totalorder %s18, 1
      %s166 = scalar_select %p165, %s18, 1
      %p167 = scmp.lt.s32.totalorder %s164, 1
      %s168 = scalar_select %p167, %s164, 1
      %s169 = smul.addr %s166, 2
      %s170 = sadd.s32 %s168, %s169
      %s171 = smul.addr %s170, 2
      %s172 = scalar_lea.vmem %s0, %s171
      %p173 = pneg %p49
      %p174 = pneg %p46
      %p175 = pneg %p70
      %p176 = pneg %p67
      %p177 = pneg %p91
      %p178 = pneg %p88
      %p179 = pneg %p119
      %p180 = pneg %p116
      %s181 = smul.u32 2, %s19
      %p182 = scmp.lt.s32.totalorder %s18, 1
      %s183 = scalar_select %p182, %s18, 1
      %p184 = scmp.lt.s32.totalorder %s181, 1
      %s185 = scalar_select %p184, %s181, 1
      %s186 = smul.addr %s183, 6
      %s187 = sadd.s32 %s185, %s186
      %s188 = smul.addr %s187, 8
      %s189 = scalar_lea.vmem %s3, %s188
      %s190 = smul.u32 2, %s19
      %p191 = scmp.lt.s32.totalorder %s18, 1
      %s192 = scalar_select %p191, %s18, 1
      %p193 = scmp.lt.s32.totalorder %s190, 1
      %s194 = scalar_select %p193, %s190, 1
      %s195 = smul.addr %s192, 2
      %s196 = sadd.s32 %s194, %s195
      %s197 = smul.addr %s196, 2
      %s198 = scalar_lea.vmem %s0, %s197
      %s199 = smul.u32 2, %s19
      %s200 = smul.u32 2, %s19
      %p201 = scmp.lt.s32.totalorder %s18, 1
      %s202 = scalar_select %p201, %s18, 1
      %p203 = scmp.lt.s32.totalorder %s200, 1
      %s204 = scalar_select %p203, %s200, 1
      %s205 = smul.addr %s202, 6
      %s206 = sadd.s32 %s204, %s205
      %s207 = smul.addr %s206, 8
      %s208 = scalar_lea.vmem %s3, %s207
      %s209 = smul.u32 2, %s19
      %v211 = vld [vmem:[%s1] sm:$0xf]
      %v212 = vld [vmem:[%s1 + $0x4] sm:$0xf]
      %v213 = vld [vmem:[%s1 + $0x8] sm:$0xf]
      %v214 = vld [vmem:[%s198] sm:$0xf]
      %v215 = vld [vmem:[%s2] sm:$0xff]
      %v216 = vld [vmem:[%s2 + $0x8] sm:$0xff]
      %v217 = vld [vmem:[%s2 + $0x10] sm:$0xff]
      %219 = vset.pattern.permute.xlu0 0
      %220 = vperm.xlu0 %219, %v215
      %v221 = vpop.permute.xlu0 %220
      %224 = vset.pattern.permute.xlu0 0
      %225 = vperm.xlu0 %224, %v216
      %v226 = vpop.permute.xlu0 %225
      %229 = vset.pattern.permute.xlu0 0
      %230 = vperm.xlu0 %229, %v217
      %v231 = vpop.permute.xlu0 %230
      %v236 = vunpack.c.l.b16 %v211
      %v237 = vunpack.c.l.b16 %v212
      %v238 = vunpack.c.l.b16 %v213
      %v239 = vpack.c.b16 %v237, %v236
      %v240 = vpack.c.b16 %v238, %v238
      %v243 = vunpack.c.l.s4 1983009808
      %v244 = vunpack.c.0.s8 %v243
      %v245 = vlaneseq
      %v246 = vshrl.u32 %v245, 7
      %v247 = vsub.s32 %v244, %v246
      %v248 = vrot.slane %v214, %v247
      %v249 = vcombine.high %v248, %v248
      %vm250 = vcmask 31744
      %v252 = vsel %vm250, %v239, 0
      %v255 = vsel %vm250, %v240, 0
      %vm257 = vcmask 1041408
      %v259 = vsel %vm257, %v248, 0
      %v262 = vsel %vm257, %v249, 0
      %264 = vmatprep.subr.bf16.mxu0 %v262
      %265 = vmatpush1.bf16.msra.mxu0 %v259
      %266 = vmatprep.subr.bf16.mxu0 0
      %267 = vmatpush1.bf16.msra.mxu0 0
      %268 = vmatprep.subr.bf16.mxu0 0
      %269 = vmatpush1.bf16.msra.mxu0 0
      %270 = vmatprep.subr.bf16.mxu0 0
      %271 = vmatpush1.bf16.msra.mxu0 0
      %272 = vmatprep.subr.bf16.mxu0 0
      %273 = vmatpush1.bf16.msra.mxu0 0
      %274 = vmatprep.subr.bf16.mxu0 0
      %275 = vmatpush1.bf16.msra.mxu0 0
      %276 = vmatprep.subr.bf16.mxu0 0
      %277 = vmatpush1.bf16.msra.mxu0 0
      %278 = vmatprep.subr.bf16.mxu0 0
      %279 = vmatpush1.bf16.msra.mxu0 0
      %280 = vmatprep.subr.bf16.mxu0 0
      %281 = vmatpush1.bf16.msra.mxu0 0
      %282 = vmatprep.subr.bf16.mxu0 0
      %283 = vmatpush1.bf16.msra.mxu0 0
      %284 = vmatprep.subr.bf16.mxu0 0
      %285 = vmatpush1.bf16.msra.mxu0 0
      %286 = vmatprep.subr.bf16.mxu0 0
      %287 = vmatpush1.bf16.msra.mxu0 0
      %288 = vmatprep.subr.bf16.mxu0 0
      %289 = vmatpush1.bf16.msra.mxu0 0
      %290 = vmatprep.subr.bf16.mxu0 0
      %291 = vmatpush1.bf16.msra.mxu0 0
      %292 = vmatprep.subr.bf16.mxu0 0
      %293 = vmatpush1.bf16.msra.mxu0 0
      %294 = vmatprep.subr.bf16.mxu0 0
      %295 = vmatpush1.bf16.msra.mxu0 0
      %296 = vmatprep.mubr.bf16.mxu0 0
      %297 = vmatmul.mubr.bf16.gmra.mrb[0].mxu0 %v252
      %v298 = vpop.f32.mrb[0].mxu0
      %v299 = vadd.f32 %v221, %v298
      %v300 = vpop.f32.mrb[0].mxu0
      %v301 = vadd.f32 %v221, %v300
      %v302 = vpop.f32.mrb[0].mxu0
      %v303 = vadd.f32 %v226, %v302
      %v304 = vpop.f32.mrb[0].mxu0
      %v305 = vadd.f32 %v226, %v304
      %306 = vmatprep.mubr.bf16.mxu0 0
      %307 = vmatmul.mubr.bf16.gmra.mrb[0].mxu0 %v255
      %v308 = vpop.f32.mrb[0].mxu0
      %v309 = vadd.f32 %v231, %v308
      %v310 = vpop.f32.mrb[0].mxu0
      %v311 = vadd.f32 %v231, %v310
      %v312 = vpop.f32.mrb[0].mxu0
      %v313 = vpop.f32.mrb[0].mxu0
      %314 = vdwg.mxu0
      %315 = vst [vmem:[%s208] sm:$0xff] %v299
      %316 = vst [vmem:[%s208 + $0x8] sm:$0xff] %v301
      %317 = vst [vmem:[%s208 + $0x10] sm:$0xff] %v303
      %318 = vst [vmem:[%s208 + $0x18] sm:$0xff] %v305
      %319 = vst [vmem:[%s208 + $0x20] sm:$0xff] %v309
      %320 = vst [vmem:[%s208 + $0x28] sm:$0xff] %v311
      %s321 = smul.u32 2, %s19
      %p322 = scmp.lt.s32.totalorder %s18, 1
      %s323 = scalar_select %p322, %s18, 1
      %p324 = scmp.lt.s32.totalorder %s321, 1
      %s325 = scalar_select %p324, %s321, 1
      %s326 = smul.addr %s323, 6
      %s327 = sadd.s32 %s325, %s326
      %s328 = smul.addr %s327, 8
      %s329 = scalar_lea.vmem %s3, %s328
      // Predicated region
      $region33: #{acmix_forward.5} parent=31 // pred_check
        %p330 = pneg %p116
      $region34: #{acmix_forward.5} parent=31 // pred_check_branch
        %332 = sbr.rel (%p330) target = $region36
      $region35: #{acmix_forward.5} parent=31 // pred_region
        %s333 = smul.u32 2, %s19
      $region36: #{acmix_forward.5} parent=31 // pred_fallthru
        _
    $region32: #{acmix_forward.5} parent=5 // pred_fallthru
      _
    %p334 = scmp.le.s32.totalorder 2, %s9
    // Predicated region
    $region37: #{acmix_forward.5} parent=5 // pred_check
      %p335 = pneg %p334
    $region38: #{acmix_forward.5} parent=5 // pred_check_branch
      %337 = sbr.rel (%p335) target = $region40
    $region39: #{acmix_forward.5} parent=5 // pred_region
      %s338 = ssub.s32 %s9, 2
      // Predicated region
      $region41: #{acmix_forward.5} parent=39 // pred_check
        %p339 = pneg %p122
      $region42: #{acmix_forward.5} parent=39 // pred_check_branch
        %341 = sbr.rel (%p339) target = $region44
      $region43: #{acmix_forward.5} parent=39 // pred_region
        %s342 = smul.u32 2, %s21
        %p343 = scmp.lt.s32.totalorder %s20, 1
        %s344 = scalar_select %p343, %s20, 1
        %p345 = scmp.lt.s32.totalorder %s342, 1
        %s346 = scalar_select %p345, %s342, 1
        %s347 = smul.addr %s344, 6
        %s348 = sadd.s32 %s346, %s347
        %s349 = smul.addr %s348, 8
        %s350 = scalar_lea.vmem %s3, %s349
      $region44: #{acmix_forward.5} parent=39 // pred_fallthru
        _
    $region40: #{acmix_forward.5} parent=5 // pred_fallthru
      _
  $region6: #{acmix_forward.5} parent=0 // loop_footer
    %s13 = sadd.s32 1, %s9
  $region7: #{acmix_forward.5} parent=0 // loop_footer_branch
    %8 = sbr.rel target = $region3
  $region8: #{acmix_forward.5} parent=0 // loop_exit
    _

// kernel: acmix_forward.6
$region0: #{acmix_forward.6}
  #allocation0 [shape = 'u32[]', space=smem, size = 0x4, offset = 0x4, fixed_abs, tag = 'smem constant byte address 0x4 - core index']
  #allocation1 [shape = 'u32[144,128]{1,0:T(1,128)}', space=vmem, size = 0x12000, scoped, tag = 'internal scratch']
  %s0 = inlined_call_operand.vmem [shape: bf16[1,3,256], index: 0, kind: input, shape index: {}]
  %s1 = inlined_call_operand.vmem [shape: bf16[2,3], index: 1, kind: input, shape index: {}]
  %s2 = inlined_call_operand.vmem [shape: f32[2,1], index: 2, kind: input, shape index: {}]
  %s3 = inlined_call_operand.vmem [shape: f32[1,2,256], index: 3, kind: output, shape index: {}]
  %s4 = sld [smem:[#allocation0]]
  $region22: #{acmix_forward.6} parent=0
    _
  %s6 = ssub.s32 1, %s4
  %s7 = scalar_select 0, %s6, %s4
  // Predicated region
  $region2: #{acmix_forward.6} parent=0 // pred_check
    _
  $region3: #{acmix_forward.6} parent=0 // pred_check_branch
    %9 = sbr.rel (0) target = $region5
  $region4: #{acmix_forward.6} parent=0 // pred_region
    _
  $region5: #{acmix_forward.6} parent=0 // pred_fallthru
    _
  // Predicated region
  $region6: #{acmix_forward.6} parent=0 // pred_check
    _
  $region7: #{acmix_forward.6} parent=0 // pred_check_branch
    %11 = sbr.rel (0) target = $region9
  $region8: #{acmix_forward.6} parent=0 // pred_region
    _
  $region9: #{acmix_forward.6} parent=0 // pred_fallthru
    _
  // Predicated region
  $region10: #{acmix_forward.6} parent=0 // pred_check
    _
  $region11: #{acmix_forward.6} parent=0 // pred_check_branch
    %13 = sbr.rel (0) target = $region13
  $region12: #{acmix_forward.6} parent=0 // pred_region
    _
  $region13: #{acmix_forward.6} parent=0 // pred_fallthru
    _
  %v15 = vld [vmem:[%s1] sm:$0x1]
  %v16 = vld [vmem:[%s0] sm:$0xf]
  %v17 = vld [vmem:[%s2] sm:$0x3]
  %19 = vset.pattern.permute.xlu0 0
  %20 = vperm.xlu0 %19, %v17
  %v21 = vpop.permute.xlu0 %20
  %v25 = vunpack.c.l.s4 1983009808
  %v26 = vunpack.c.0.s8 %v25
  %v27 = vlaneseq
  %v28 = vshrl.u32 %v27, 7
  %v29 = vsub.s32 %v26, %v28
  %v30 = vrot.slane %v16, %v29
  %v31 = vcombine.high %v30, %v30
  %vm32 = vcmask 23552
  %v34 = vsel %vm32, %v15, 0
  %vm36 = vcmask 1040384
  %vm37 = vcmask 1041408
  %v38 = vsel %vm36, 4294967295, 65535
  %v39 = vsel %vm37, %v38, 0
  %v41 = vand.u32 %v30, %v39
  %v44 = vand.u32 %v31, %v39
  %46 = vmatprep.subr.bf16.mxu0 %v44
  %47 = vmatpush1.bf16.msra.mxu0 %v41
  %48 = vmatprep.subr.bf16.mxu0 0
  %49 = vmatpush1.bf16.msra.mxu0 0
  %50 = vmatprep.subr.bf16.mxu0 0
  %51 = vmatpush1.bf16.msra.mxu0 0
  %52 = vmatprep.subr.bf16.mxu0 0
  %53 = vmatpush1.bf16.msra.mxu0 0
  %54 = vmatprep.subr.bf16.mxu0 0
  %55 = vmatpush1.bf16.msra.mxu0 0
  %56 = vmatprep.subr.bf16.mxu0 0
  %57 = vmatpush1.bf16.msra.mxu0 0
  %58 = vmatprep.subr.bf16.mxu0 0
  %59 = vmatpush1.bf16.msra.mxu0 0
  %60 = vmatprep.subr.bf16.mxu0 0
  %61 = vmatpush1.bf16.msra.mxu0 0
  %62 = vmatprep.subr.bf16.mxu0 0
  %63 = vmatpush1.bf16.msra.mxu0 0
  %64 = vmatprep.subr.bf16.mxu0 0
  %65 = vmatpush1.bf16.msra.mxu0 0
  %66 = vmatprep.subr.bf16.mxu0 0
  %67 = vmatpush1.bf16.msra.mxu0 0
  %68 = vmatprep.subr.bf16.mxu0 0
  %69 = vmatpush1.bf16.msra.mxu0 0
  %70 = vmatprep.subr.bf16.mxu0 0
  %71 = vmatpush1.bf16.msra.mxu0 0
  %72 = vmatprep.subr.bf16.mxu0 0
  %73 = vmatpush1.bf16.msra.mxu0 0
  %74 = vmatprep.subr.bf16.mxu0 0
  %75 = vmatpush1.bf16.msra.mxu0 0
  %76 = vmatprep.subr.bf16.mxu0 0
  %77 = vmatpush1.bf16.msra.mxu0 0
  %78 = vmatprep.mubr.bf16.mxu0 0
  %79 = vmatmul.mubr.bf16.gmra.mrb[0].mxu0 %v34
  %v80 = vpop.f32.mrb[0].mxu0
  %v81 = vadd.f32 %v21, %v80
  %v82 = vpop.f32.mrb[0].mxu0
  %v83 = vadd.f32 %v21, %v82
  %v84 = vpop.f32.mrb[0].mxu0
  %v85 = vpop.f32.mrb[0].mxu0
  %86 = vdwg.mxu0
  %v89 = vcombine.low %v81, %v83
  %v91 = vunpack.c.l.s4 1983009808
  %v92 = vunpack.c.0.s8 %v91
  %v93 = vlaneseq
  %v94 = vshrl.u32 %v93, 7
  %v95 = vsub.s32 %v92, %v94
  %v96 = vrot.slane %v89, %v95
  %98 = vst [vmem:[%s3] sm:$0xf] %v96
  // Predicated region
  $region14: #{acmix_forward.6} parent=0 // pred_check
    _
  $region15: #{acmix_forward.6} parent=0 // pred_check_branch
    %100 = sbr.rel (0) target = $region17
  $region16: #{acmix_forward.6} parent=0 // pred_region
    _
  $region17: #{acmix_forward.6} parent=0 // pred_fallthru
    _
  // Predicated region
  $region18: #{acmix_forward.6} parent=0 // pred_check
    _
  $region19: #{acmix_forward.6} parent=0 // pred_check_branch
    %102 = sbr.rel (0) target = $region21
  $region20: #{acmix_forward.6} parent=0 // pred_region
    _
  $region21: #{acmix_forward.6} parent=0 // pred_fallthru
    _

// kernel: acmix_forward.8
$region0: #{acmix_forward.8}
  #allocation0 [shape = 'u32[]', space=smem, size = 0x4, offset = 0x4, fixed_abs, tag = 'smem constant byte address 0x4 - core index']
  #allocation1 [shape = 'u32[144,128]{1,0:T(1,128)}', space=vmem, size = 0x12000, scoped, tag = 'internal scratch']
  %s0 = inlined_call_operand.vmem [shape: bf16[2,12,512], index: 0, kind: input, shape index: {}]
  %s1 = inlined_call_operand.vmem [shape: bf16[9,12], index: 1, kind: input, shape index: {}]
  %s2 = inlined_call_operand.vmem [shape: f32[9,1], index: 2, kind: input, shape index: {}]
  %s3 = inlined_call_operand.vmem [shape: f32[2,9,512], index: 3, kind: output, shape index: {}]
  %s4 = sld [smem:[#allocation0]]
  $region45: #{acmix_forward.8} parent=0
    _
  %s6 = ssub.s32 1, %s4
  %s7 = scalar_select 0, %s6, %s4
  loop: start=0, step=1, limit=4
  $region2: #{acmix_forward.8} parent=0 // loop_pre_header
    _
  $region3: #{acmix_forward.8} parent=0 // loop_header
    %s9 = sphi 0, %s13
    %p10 = scmp.ge.s32.totalorder %s9, 4
    %s16 = sphi 0, %s28
    %s17 = sphi 0, %s24
    %s18 = sphi 0, %s16
    %s19 = sphi 0, %s17
    %s20 = sphi 0, %s18
    %s21 = sphi 0, %s19
    %s33 = sphi 0, %s35
    %s36 = sphi 0, %s33
    %s37 = sphi 0, %s36
    %s53 = sphi 0, %s37
    %s57 = sphi 0, %s57
    %s59 = sphi 0, %s57
    %s60 = sphi 0, %s59
    %s74 = sphi 0, %s60
    %s78 = sphi 0, %s78
    %s80 = sphi 0, %s78
    %s81 = sphi 0, %s80
    %s95 = sphi 0, %s81
    %s103 = sphi 0, %s105
    %s106 = sphi 0, %s103
    %s107 = sphi 0, %s106
    %s123 = sphi 0, %s107
  $region4: #{acmix_forward.8} parent=0 // loop_header_branch
    %12 = sbr.rel (%p10) target = $region8
  $region5: #{acmix_forward.8} parent=0 // loop_body
    %s14 = ssub.s32 %s9, 1
    %s15 = ssub.s32 %s9, 2
    %s22 = sadd.s32 1, %s17
    %p23 = scmp.ge.s32.totalorder %s22, 1
    %s24 = scalar_select %p23, 0, %s22
    %s25 = sadd.s32 1, %s16
    %s26 = scalar_select %p23, %s25, %s16
    %p27 = scmp.ge.s32.totalorder %s26, 2
    %s28 = scalar_select %p27, 0, %s26
    %s29 = ssub.s32 %s16, %s28
    %s30 = ssub.s32 %s17, %s24
    %s31 = sor.u32 %s29, %s30
    %p32 = scmp.eq.s32.totalorder %s31, 0
    %s34 = sadd.s32 %s33, 1
    %s35 = scalar_select %p32, %s33, %s34
    %p38 = pneg %p32
    %p39 = scmp.eq.s32.totalorder %s9, 1
    %p40 = por %p38, %p39
    %p41 = scmp.ne.s32.totalorder %s33, %s36
    %p42 = scmp.eq.s32.totalorder %s9, 0
    %p43 = por %p41, %p42
    %p44 = scmp.ne.s32.totalorder %s33, %s36
    %p45 = scmp.eq.s32.totalorder %s14, 1
    %p46 = por %p44, %p45
    %p47 = scmp.ne.s32.totalorder %s36, %s37
    %p48 = scmp.eq.s32.totalorder %s14, 0
    %p49 = por %p47, %p48
    %p50 = scmp.ne.s32.totalorder %s36, %s37
    %p51 = scmp.eq.s32.totalorder %s15, 1
    %p52 = por %p50, %p51
    %p54 = scmp.ne.s32.totalorder %s37, %s53
    %p55 = scmp.eq.s32.totalorder %s15, 0
    %p56 = por %p54, %p55
    %s58 = sadd.s32 %s57, 1
    %p61 = scmp.eq.s32.totalorder %s9, 1
    %p62 = scmp.ne.s32.totalorder %s57, %s59
    %p63 = scmp.eq.s32.totalorder %s9, 0
    %p64 = por %p62, %p63
    %p65 = scmp.ne.s32.totalorder %s57, %s59
    %p66 = scmp.eq.s32.totalorder %s14, 1
    %p67 = por %p65, %p66
    %p68 = scmp.ne.s32.totalorder %s59, %s60
    %p69 = scmp.eq.s32.totalorder %s14, 0
    %p70 = por %p68, %p69
    %p71 = scmp.ne.s32.totalorder %s59, %s60
    %p72 = scmp.eq.s32.totalorder %s15, 1
    %p73 = por %p71, %p72
    %p75 = scmp.ne.s32.totalorder %s60, %s74
    %p76 = scmp.eq.s32.totalorder %s15, 0
    %p77 = por %p75, %p76
    %s79 = sadd.s32 %s78, 1
    %p82 = scmp.eq.s32.totalorder %s9, 1
    %p83 = scmp.ne.s32.totalorder %s78, %s80
    %p84 = scmp.eq.s32.totalorder %s9, 0
    %p85 = por %p83, %p84
    %p86 = scmp.ne.s32.totalorder %s78, %s80
    %p87 = scmp.eq.s32.totalorder %s14, 1
    %p88 = por %p86, %p87
    %p89 = scmp.ne.s32.totalorder %s80, %s81
    %p90 = scmp.eq.s32.totalorder %s14, 0
    %p91 = por %p89, %p90
    %p92 = scmp.ne.s32.totalorder %s80, %s81
    %p93 = scmp.eq.s32.totalorder %s15, 1
    %p94 = por %p92, %p93
    %p96 = scmp.ne.s32.totalorder %s81, %s95
    %p97 = scmp.eq.s32.totalorder %s15, 0
    %p98 = por %p96, %p97
    %s99 = ssub.s32 %s16, %s28
    %s100 = ssub.s32 %s17, %s24
    %s101 = sor.u32 %s99, %s100
    %p102 = scmp.eq.s32.totalorder %s101, 0
    %s104 = sadd.s32 %s103, 1
    %s105 = scalar_select %p102, %s103, %s104
    %p108 = pneg %p102
    %p109 = scmp.eq.s32.totalorder %s9, 1
    %p110 = por %p108, %p109
    %p111 = scmp.ne.s32.totalorder %s103, %s106
    %p112 = scmp.eq.s32.totalorder %s9, 0
    %p113 = por %p111, %p112
    %p114 = scmp.ne.s32.totalorder %s103, %s106
    %p115 = scmp.eq.s32.totalorder %s14, 1
    %p116 = por %p114, %p115
    %p117 = scmp.ne.s32.totalorder %s106, %s107
    %p118 = scmp.eq.s32.totalorder %s14, 0
    %p119 = por %p117, %p118
    %p120 = scmp.ne.s32.totalorder %s106, %s107
    %p121 = scmp.eq.s32.totalorder %s15, 1
    %p122 = por %p120, %p121
    %p124 = scmp.ne.s32.totalorder %s107, %s123
    %p125 = scmp.eq.s32.totalorder %s15, 0
    %p126 = por %p124, %p125
    %p127 = scmp.le.s32.totalorder 1, %s9
    %p128 = scmp.lt.s32.totalorder %s9, 3
    %p129 = pnand %p127, %p128
    %p130 = pneg %p129
    // Predicated region
    $region9: #{acmix_forward.8} parent=5 // pred_check
      _
    $region10: #{acmix_forward.8} parent=5 // pred_check_branch
      %132 = sbr.rel (%p129) target = $region12
    $region11: #{acmix_forward.8} parent=5 // pred_region
      %s133 = ssub.s32 %s9, 1
      // Predicated region
      $region13: #{acmix_forward.8} parent=11 // pred_check
        %p134 = pneg %p70
      $region14: #{acmix_forward.8} parent=11 // pred_check_branch
        %136 = sbr.rel (%p134) target = $region16
      $region15: #{acmix_forward.8} parent=11 // pred_region
        _
      $region16: #{acmix_forward.8} parent=11 // pred_fallthru
        _
      // Predicated region
      $region17: #{acmix_forward.8} parent=11 // pred_check
        %p137 = pneg %p91
      $region18: #{acmix_forward.8} parent=11 // pred_check_branch
        %139 = sbr.rel (%p137) target = $region20
      $region19: #{acmix_forward.8} parent=11 // pred_region
        _
      $region20: #{acmix_forward.8} parent=11 // pred_fallthru
        _
    $region12: #{acmix_forward.8} parent=5 // pred_fallthru
      _
    %p140 = scmp.lt.s32.totalorder %s9, 2
    // Predicated region
    $region21: #{acmix_forward.8} parent=5 // pred_check
      %p141 = pneg %p140
    $region22: #{acmix_forward.8} parent=5 // pred_check_branch
      %143 = sbr.rel (%p141) target = $region24
    $region23: #{acmix_forward.8} parent=5 // pred_region
      // Predicated region
      $region25: #{acmix_forward.8} parent=23 // pred_check
        %p144 = pneg %p43
      $region26: #{acmix_forward.8} parent=23 // pred_check_branch
        %146 = sbr.rel (%p144) target = $region28
      $region27: #{acmix_forward.8} parent=23 // pred_region
        %s147 = smul.u32 4, %s17
        %p148 = scmp.lt.s32.totalorder %s16, 1
        %s149 = scalar_select %p148, %s16, 1
        %p150 = scmp.lt.s32.totalorder %s147, 3
        %s151 = scalar_select %p150, %s147, 3
        %s152 = smul.addr %s149, 8
        %s153 = sadd.s32 %s151, %s152
        %s154 = smul.addr %s153, 4
        %s155 = scalar_lea.vmem %s0, %s154
        %s156 = smul.u32 4, %s17
      $region28: #{acmix_forward.8} parent=23 // pred_fallthru
        _
    $region24: #{acmix_forward.8} parent=5 // pred_fallthru
      _
    %p157 = scmp.le.s32.totalorder 1, %s9
    %p158 = scmp.lt.s32.totalorder %s9, 3
    %p159 = pnand %p157, %p158
    %p160 = pneg %p159
    // Predicated region
    $region29: #{acmix_forward.8} parent=5 // pred_check
      _
    $region30: #{acmix_forward.8} parent=5 // pred_check_branch
      %162 = sbr.rel (%p159) target = $region32
    $region31: #{acmix_forward.8} parent=5 // pred_region
      %s163 = ssub.s32 %s9, 1
      %s164 = smul.u32 4, %s19
      %p165 = scmp.lt.s32.totalorder %s18, 1
      %s166 = scalar_select %p165, %s18, 1
      %p167 = scmp.lt.s32.totalorder %s164, 3
      %s168 = scalar_select %p167, %s164, 3
      %s169 = smul.addr %s166, 8
      %s170 = sadd.s32 %s168, %s169
      %s171 = smul.addr %s170, 4
      %s172 = scalar_lea.vmem %s0, %s171
      %p173 = pneg %p49
      %p174 = pneg %p46
      %p175 = pneg %p70
      %p176 = pneg %p67
      %p177 = pneg %p91
      %p178 = pneg %p88
      %p179 = pneg %p119
      %p180 = pneg %p116
      %s181 = smul.u32 4, %s19
      %p182 = scmp.lt.s32.totalorder %s18, 1
      %s183 = scalar_select %p182, %s18, 1
      %p184 = scmp.lt.s32.totalorder %s181, 3
      %s185 = scalar_select %p184, %s181, 3
      %s186 = smul.addr %s183, 8
      %s187 = sadd.s32 %s185, %s186
      %s188 = smul.addr %s187, 8
      %s189 = scalar_lea.vmem %s3, %s188
      %s190 = smul.u32 4, %s19
      %p191 = scmp.lt.s32.totalorder %s18, 1
      %s192 = scalar_select %p191, %s18, 1
      %p193 = scmp.lt.s32.totalorder %s190, 3
      %s194 = scalar_select %p193, %s190, 3
      %s195 = smul.addr %s192, 8
      %s196 = sadd.s32 %s194, %s195
      %s197 = smul.addr %s196, 4
      %s198 = scalar_lea.vmem %s0, %s197
      %s199 = smul.u32 4, %s19
      %s200 = smul.u32 4, %s19
      %p201 = scmp.lt.s32.totalorder %s18, 1
      %s202 = scalar_select %p201, %s18, 1
      %p203 = scmp.lt.s32.totalorder %s200, 3
      %s204 = scalar_select %p203, %s200, 3
      %s205 = smul.addr %s202, 8
      %s206 = sadd.s32 %s204, %s205
      %s207 = smul.addr %s206, 8
      %s208 = scalar_lea.vmem %s3, %s207
      %s209 = smul.u32 4, %s19
      %v211 = vld [vmem:[%s1] sm:$0xf]
      %v212 = vld [vmem:[%s1 + $0x4] sm:$0x1]
      %v213 = vld [vmem:[%s198] sm:$0xff]
      %v214 = vld [vmem:[%s198 + $0x8] sm:$0xff]
      %v215 = vld [vmem:[%s198 + $0x10] sm:$0x33]
      %v216 = vld [vmem:[%s198 + $0x18] sm:$0x33]
      %v217 = vld [vmem:[%s2] sm:$0xff]
      %v218 = vld [vmem:[%s2 + $0x8] sm:$0x1]
      %220 = vset.pattern.permute.xlu0 0
      %221 = vperm.xlu0 %220, %v217
      %v222 = vpop.permute.xlu0 %221
      %225 = vset.pattern.permute.xlu0 0
      %226 = vperm.xlu0 %225, %v218
      %v227 = vpop.permute.xlu0 %226
      %v231 = vunpack.c.l.b16 %v211
      %v232 = vunpack.c.l.b16 %v212
      %v233 = vpack.c.b16 %v232, %v231
      %v238 = vunpack.c.l.b16 %v213
      %v239 = vunpack.c.h.b16 %v213
      %v240 = vunpack.c.l.b16 %v214
      %v241 = vunpack.c.h.b16 %v214
      %v242 = vunpack.c.l.b16 %v215
      %v243 = vunpack.c.h.b16 %v215
      %v244 = vunpack.c.l.b16 %v216
      %v245 = vunpack.c.h.b16 %v216
      %v246 = vpack.c.b16 %v242, %v238
      %v247 = vpack.c.b16 %v243, %v239
      %v248 = vpack.c.b16 %v244, %v240
      %v249 = vpack.c.b16 %v245, %v241
      %vm250 = vcmask 97280
      %v252 = vsel %vm250, %v233, 0
      %vm254 = vcmask 1045504
      %v256 = vsel %vm254, %v246, 0
      %v259 = vsel %vm254, %v247, 0
      %v262 = vsel %vm254, %v248, 0
      %v265 = vsel %vm254, %v249, 0
      %267 = vmatprep.subr.bf16.mxu0 %v259
      %268 = vmatpush1.bf16.msra.mxu0 %v256
      %269 = vmatprep.subr.bf16.mxu0 0
      %270 = vmatpush1.bf16.msra.mxu0 0
      %271 = vmatprep.subr.bf16.mxu0 0
      %272 = vmatpush1.bf16.msra.mxu0 0
      %273 = vmatprep.subr.bf16.mxu0 0
      %274 = vmatpush1.bf16.msra.mxu0 0
      %275 = vmatprep.subr.bf16.mxu0 0
      %276 = vmatpush1.bf16.msra.mxu0 0
      %277 = vmatprep.subr.bf16.mxu0 0
      %278 = vmatpush1.bf16.msra.mxu0 0
      %279 = vmatprep.subr.bf16.mxu0 0
      %280 = vmatpush1.bf16.msra.mxu0 0
      %281 = vmatprep.subr.bf16.mxu0 0
      %282 = vmatpush1.bf16.msra.mxu0 0
      %283 = vmatprep.subr.bf16.mxu0 0
      %284 = vmatpush1.bf16.msra.mxu0 0
      %285 = vmatprep.subr.bf16.mxu0 0
      %286 = vmatpush1.bf16.msra.mxu0 0
      %287 = vmatprep.subr.bf16.mxu0 0
      %288 = vmatpush1.bf16.msra.mxu0 0
      %289 = vmatprep.subr.bf16.mxu0 0
      %290 = vmatpush1.bf16.msra.mxu0 0
      %291 = vmatprep.subr.bf16.mxu0 0
      %292 = vmatpush1.bf16.msra.mxu0 0
      %293 = vmatprep.subr.bf16.mxu0 0
      %294 = vmatpush1.bf16.msra.mxu0 0
      %295 = vmatprep.subr.bf16.mxu0 0
      %296 = vmatpush1.bf16.msra.mxu0 0
      %297 = vmatprep.subr.bf16.mxu0 0
      %298 = vmatpush1.bf16.msra.mxu0 0
      %299 = vmatprep.mubr.bf16.mxu0 0
      %300 = vmatmul.mubr.bf16.gmra.mrb[0].mxu0 %v252
      %v301 = vpop.f32.mrb[0].mxu0
      %v302 = vadd.f32 %v222, %v301
      %v303 = vpop.f32.mrb[0].mxu0
      %v304 = vadd.f32 %v222, %v303
      %v305 = vpop.f32.mrb[0].mxu0
      %v306 = vadd.f32 %v227, %v305
      %v307 = vpop.f32.mrb[0].mxu0
      %v308 = vadd.f32 %v227, %v307
      %309 = vdwg.mxu0
      %310 = vmatprep.subr.bf16.mxu0 %v265
      %311 = vmatpush1.bf16.msra.mxu0 %v262
      %312 = vmatprep.subr.bf16.mxu0 0
      %313 = vmatpush1.bf16.msra.mxu0 0
      %314 = vmatprep.subr.bf16.mxu0 0
      %315 = vmatpush1.bf16.msra.mxu0 0
      %316 = vmatprep.subr.bf16.mxu0 0
      %317 = vmatpush1.bf16.msra.mxu0 0
      %318 = vmatprep.subr.bf16.mxu0 0
      %319 = vmatpush1.bf16.msra.mxu0 0
      %320 = vmatprep.subr.bf16.mxu0 0
      %321 = vmatpush1.bf16.msra.mxu0 0
      %322 = vmatprep.subr.bf16.mxu0 0
      %323 = vmatpush1.bf16.msra.mxu0 0
      %324 = vmatprep.subr.bf16.mxu0 0
      %325 = vmatpush1.bf16.msra.mxu0 0
      %326 = vmatprep.subr.bf16.mxu0 0
      %327 = vmatpush1.bf16.msra.mxu0 0
      %328 = vmatprep.subr.bf16.mxu0 0
      %329 = vmatpush1.bf16.msra.mxu0 0
      %330 = vmatprep.subr.bf16.mxu0 0
      %331 = vmatpush1.bf16.msra.mxu0 0
      %332 = vmatprep.subr.bf16.mxu0 0
      %333 = vmatpush1.bf16.msra.mxu0 0
      %334 = vmatprep.subr.bf16.mxu0 0
      %335 = vmatpush1.bf16.msra.mxu0 0
      %336 = vmatprep.subr.bf16.mxu0 0
      %337 = vmatpush1.bf16.msra.mxu0 0
      %338 = vmatprep.subr.bf16.mxu0 0
      %339 = vmatpush1.bf16.msra.mxu0 0
      %340 = vmatprep.subr.bf16.mxu0 0
      %341 = vmatpush1.bf16.msra.mxu0 0
      %342 = vmatprep.mubr.bf16.mxu0 0
      %343 = vmatmul.mubr.bf16.gmra.mrb[0].mxu0 %v252
      %v344 = vpop.f32.mrb[0].mxu0
      %v345 = vadd.f32 %v222, %v344
      %v346 = vpop.f32.mrb[0].mxu0
      %v347 = vadd.f32 %v222, %v346
      %v348 = vpop.f32.mrb[0].mxu0
      %v349 = vadd.f32 %v227, %v348
      %v350 = vpop.f32.mrb[0].mxu0
      %v351 = vadd.f32 %v227, %v350
      %352 = vdwg.mxu0
      %353 = vst [vmem:[%s208] sm:$0xff] %v302
      %354 = vst [vmem:[%s208 + $0x8] sm:$0xff] %v304
      %355 = vst [vmem:[%s208 + $0x10] sm:$0xff] %v345
      %356 = vst [vmem:[%s208 + $0x18] sm:$0xff] %v347
      %357 = vst [vmem:[%s208 + $0x20] sm:$0x1] %v306
      %358 = vst [vmem:[%s208 + $0x28] sm:$0x1] %v308
      %359 = vst [vmem:[%s208 + $0x30] sm:$0x1] %v349
      %360 = vst [vmem:[%s208 + $0x38] sm:$0x1] %v351
      %s361 = smul.u32 4, %s19
      %p362 = scmp.lt.s32.totalorder %s18, 1
      %s363 = scalar_select %p362, %s18, 1
      %p364 = scmp.lt.s32.totalorder %s361, 3
      %s365 = scalar_select %p364, %s361, 3
      %s366 = smul.addr %s363, 8
      %s367 = sadd.s32 %s365, %s366
      %s368 = smul.addr %s367, 8
      %s369 = scalar_lea.vmem %s3, %s368
      // Predicated region
      $region33: #{acmix_forward.8} parent=31 // pred_check
        %p370 = pneg %p116
      $region34: #{acmix_forward.8} parent=31 // pred_check_branch
        %372 = sbr.rel (%p370) target = $region36
      $region35: #{acmix_forward.8} parent=31 // pred_region
        %s373 = smul.u32 4, %s19
      $region36: #{acmix_forward.8} parent=31 // pred_fallthru
        _
    $region32: #{acmix_forward.8} parent=5 // pred_fallthru
      _
    %p374 = scmp.le.s32.totalorder 2, %s9
    // Predicated region
    $region37: #{acmix_forward.8} parent=5 // pred_check
      %p375 = pneg %p374
    $region38: #{acmix_forward.8} parent=5 // pred_check_branch
      %377 = sbr.rel (%p375) target = $region40
    $region39: #{acmix_forward.8} parent=5 // pred_region
      %s378 = ssub.s32 %s9, 2
      // Predicated region
      $region41: #{acmix_forward.8} parent=39 // pred_check
        %p379 = pneg %p122
      $region42: #{acmix_forward.8} parent=39 // pred_check_branch
        %381 = sbr.rel (%p379) target = $region44
      $region43: #{acmix_forward.8} parent=39 // pred_region
        %s382 = smul.u32 4, %s21
        %p383 = scmp.lt.s32.totalorder %s20, 1
        %s384 = scalar_select %p383, %s20, 1
        %p385 = scmp.lt.s32.totalorder %s382, 3
        %s386 = scalar_select %p385, %s382, 3
        %s387 = smul.addr %s384, 8
        %s388 = sadd.s32 %s386, %s387
        %s389 = smul.addr %s388, 8
        %s390 = scalar_lea.vmem %s3, %s389
      $region44: #{acmix_forward.8} parent=39 // pred_fallthru
        _
    $region40: #{acmix_forward.8} parent=5 // pred_fallthru
      _
  $region6: #{acmix_forward.8} parent=0 // loop_footer
    %s13 = sadd.s32 1, %s9
  $region7: #{acmix_forward.8} parent=0 // loop_footer_branch
    %8 = sbr.rel target = $region3
  $region8: #{acmix_forward.8} parent=0 // loop_exit
    _

// kernel: acmix_forward.9
$region0: #{acmix_forward.9}
  #allocation0 [shape = 'u32[]', space=smem, size = 0x4, offset = 0x4, fixed_abs, tag = 'smem constant byte address 0x4 - core index']
  #allocation1 [shape = 'u32[144,128]{1,0:T(1,128)}', space=vmem, size = 0x12000, scoped, tag = 'internal scratch']
  %s0 = inlined_call_operand.vmem [shape: bf16[2,2,81,256], index: 0, kind: input, shape index: {}]
  %s1 = inlined_call_operand.vmem [shape: bf16[2,4,81], index: 1, kind: input, shape index: {}]
  %s2 = inlined_call_operand.vmem [shape: f32[2,2,4,256], index: 2, kind: input, shape index: {}]
  %s3 = inlined_call_operand.vmem [shape: f32[2], index: 3, kind: input, shape index: {}]
  %s4 = inlined_call_operand.vmem [shape: f32[2,2,4,256], index: 4, kind: output, shape index: {}]
  %s5 = sld [smem:[#allocation0]]
  $region53: #{acmix_forward.9} parent=0
    _
  %s7 = ssub.s32 1, %s5
  %s8 = scalar_select 0, %s7, %s5
  $region1: #{acmix_forward.9} parent=0
    #allocation2 [shape = 'u8[512]{0}', space=smem, size = 0x200, scoped, tag = 'input window, operand 3, single buffered']
    #allocation3 [shape = 's32[2]{0}', space=sflag, size = 0x8, scoped, tag = 'scoped memory for acmix_forward.9']
    %9 = vsyncpa [#allocation3], 0
    loop: start=0, step=1, limit=6
    $region2: #{acmix_forward.9} parent=1 // loop_pre_header
      _
    $region3: #{acmix_forward.9} parent=1 // loop_header
      %s11 = sphi 0, %s15
      %p12 = scmp.ge.s32.totalorder %s11, 6
      %s18 = sphi 0, %s37
      %s19 = sphi 0, %s33
      %s20 = sphi 0, %s29
      %s21 = sphi 0, %s18
      %s22 = sphi 0, %s19
      %s23 = sphi 0, %s20
      %s24 = sphi 0, %s21
      %s25 = sphi 0, %s22
      %s26 = sphi 0, %s23
      %s44 = sphi 0, %s46
      %s47 = sphi 0, %s44
      %s48 = sphi 0, %s47
      %s64 = sphi 0, %s48
      %s70 = sphi 0, %s72
      %s73 = sphi 0, %s70
      %s74 = sphi 0, %s73
      %s90 = sphi 0, %s74
      %s100 = sphi 0, %s102
      %s103 = sphi 0, %s100
      %s104 = sphi 0, %s103
      %s120 = sphi 0, %s104
      %s124 = sphi 0, %s124
      %s126 = sphi 0, %s124
      %s127 = sphi 0, %s126
      %s141 = sphi 0, %s127
      %s151 = sphi 0, %s153
      %s154 = sphi 0, %s151
      %s155 = sphi 0, %s154
      %s171 = sphi 0, %s155
    $region4: #{acmix_forward.9} parent=1 // loop_header_branch
      %14 = sbr.rel (%p12) target = $region8
    $region5: #{acmix_forward.9} parent=1 // loop_body
      %s16 = ssub.s32 %s11, 1
      %s17 = ssub.s32 %s11, 2
      %s27 = sadd.s32 1, %s20
      %p28 = scmp.ge.s32.totalorder %s27, 1
      %s29 = scalar_select %p28, 0, %s27
      %s30 = sadd.s32 1, %s19
      %s31 = scalar_select %p28, %s30, %s19
      %p32 = scmp.ge.s32.totalorder %s31, 2
      %s33 = scalar_select %p32, 0, %s31
      %s34 = sadd.s32 1, %s18
      %s35 = scalar_select %p32, %s34, %s18
      %p36 = scmp.ge.s32.totalorder %s35, 2
      %s37 = scalar_select %p36, 0, %s35
      %s38 = ssub.s32 %s18, %s37
      %s39 = ssub.s32 %s19, %s33
      %s40 = sor.u32 %s38, %s39
      %s41 = ssub.s32 %s20, %s29
      %s42 = sor.u32 %s40, %s41
      %p43 = scmp.eq.s32.totalorder %s42, 0
      %s45 = sadd.s32 %s44, 1
      %s46 = scalar_select %p43, %s44, %s45
      %p49 = pneg %p43
      %p50 = scmp.eq.s32.totalorder %s11, 3
      %p51 = por %p49, %p50
      %p52 = scmp.ne.s32.totalorder %s44, %s47
      %p53 = scmp.eq.s32.totalorder %s11, 0
      %p54 = por %p52, %p53
      %p55 = scmp.ne.s32.totalorder %s44, %s47
      %p56 = scmp.eq.s32.totalorder %s16, 3
      %p57 = por %p55, %p56
      %p58 = scmp.ne.s32.totalorder %s47, %s48
      %p59 = scmp.eq.s32.totalorder %s16, 0
      %p60 = por %p58, %p59
      %p61 = scmp.ne.s32.totalorder %s47, %s48
      %p62 = scmp.eq.s32.totalorder %s17, 3
      %p63 = por %p61, %p62
      %p65 = scmp.ne.s32.totalorder %s48, %s64
      %p66 = scmp.eq.s32.totalorder %s17, 0
      %p67 = por %p65, %p66
      %s68 = ssub.s32 %s19, %s33
      %p69 = scmp.eq.s32.totalorder %s68, 0
      %s71 = sadd.s32 %s70, 1
      %s72 = scalar_select %p69, %s70, %s71
      %p75 = pneg %p69
      %p76 = scmp.eq.s32.totalorder %s11, 3
      %p77 = por %p75, %p76
      %p78 = scmp.ne.s32.totalorder %s70, %s73
      %p79 = scmp.eq.s32.totalorder %s11, 0
      %p80 = por %p78, %p79
      %p81 = scmp.ne.s32.totalorder %s70, %s73
      %p82 = scmp.eq.s32.totalorder %s16, 3
      %p83 = por %p81, %p82
      %p84 = scmp.ne.s32.totalorder %s73, %s74
      %p85 = scmp.eq.s32.totalorder %s16, 0
      %p86 = por %p84, %p85
      %p87 = scmp.ne.s32.totalorder %s73, %s74
      %p88 = scmp.eq.s32.totalorder %s17, 3
      %p89 = por %p87, %p88
      %p91 = scmp.ne.s32.totalorder %s74, %s90
      %p92 = scmp.eq.s32.totalorder %s17, 0
      %p93 = por %p91, %p92
      %s94 = ssub.s32 %s18, %s37
      %s95 = ssub.s32 %s19, %s33
      %s96 = sor.u32 %s94, %s95
      %s97 = ssub.s32 %s20, %s29
      %s98 = sor.u32 %s96, %s97
      %p99 = scmp.eq.s32.totalorder %s98, 0
      %s101 = sadd.s32 %s100, 1
      %s102 = scalar_select %p99, %s100, %s101
      %p105 = pneg %p99
      %p106 = scmp.eq.s32.totalorder %s11, 3
      %p107 = por %p105, %p106
      %p108 = scmp.ne.s32.totalorder %s100, %s103
      %p109 = scmp.eq.s32.totalorder %s11, 0
      %p110 = por %p108, %p109
      %p111 = scmp.ne.s32.totalorder %s100, %s103
      %p112 = scmp.eq.s32.totalorder %s16, 3
      %p113 = por %p111, %p112
      %p114 = scmp.ne.s32.totalorder %s103, %s104
      %p115 = scmp.eq.s32.totalorder %s16, 0
      %p116 = por %p114, %p115
      %p117 = scmp.ne.s32.totalorder %s103, %s104
      %p118 = scmp.eq.s32.totalorder %s17, 3
      %p119 = por %p117, %p118
      %p121 = scmp.ne.s32.totalorder %s104, %s120
      %p122 = scmp.eq.s32.totalorder %s17, 0
      %p123 = por %p121, %p122
      %s125 = sadd.s32 %s124, 1
      %p128 = scmp.eq.s32.totalorder %s11, 3
      %p129 = scmp.ne.s32.totalorder %s124, %s126
      %p130 = scmp.eq.s32.totalorder %s11, 0
      %p131 = por %p129, %p130
      %p132 = scmp.ne.s32.totalorder %s124, %s126
      %p133 = scmp.eq.s32.totalorder %s16, 3
      %p134 = por %p132, %p133
      %p135 = scmp.ne.s32.totalorder %s126, %s127
      %p136 = scmp.eq.s32.totalorder %s16, 0
      %p137 = por %p135, %p136
      %p138 = scmp.ne.s32.totalorder %s126, %s127
      %p139 = scmp.eq.s32.totalorder %s17, 3
      %p140 = por %p138, %p139
      %p142 = scmp.ne.s32.totalorder %s127, %s141
      %p143 = scmp.eq.s32.totalorder %s17, 0
      %p144 = por %p142, %p143
      %s145 = ssub.s32 %s18, %s37
      %s146 = ssub.s32 %s19, %s33
      %s147 = sor.u32 %s145, %s146
      %s148 = ssub.s32 %s20, %s29
      %s149 = sor.u32 %s147, %s148
      %p150 = scmp.eq.s32.totalorder %s149, 0
      %s152 = sadd.s32 %s151, 1
      %s153 = scalar_select %p150, %s151, %s152
      %p156 = pneg %p150
      %p157 = scmp.eq.s32.totalorder %s11, 3
      %p158 = por %p156, %p157
      %p159 = scmp.ne.s32.totalorder %s151, %s154
      %p160 = scmp.eq.s32.totalorder %s11, 0
      %p161 = por %p159, %p160
      %p162 = scmp.ne.s32.totalorder %s151, %s154
      %p163 = scmp.eq.s32.totalorder %s16, 3
      %p164 = por %p162, %p163
      %p165 = scmp.ne.s32.totalorder %s154, %s155
      %p166 = scmp.eq.s32.totalorder %s16, 0
      %p167 = por %p165, %p166
      %p168 = scmp.ne.s32.totalorder %s154, %s155
      %p169 = scmp.eq.s32.totalorder %s17, 3
      %p170 = por %p168, %p169
      %p172 = scmp.ne.s32.totalorder %s155, %s171
      %p173 = scmp.eq.s32.totalorder %s17, 0
      %p174 = por %p172, %p173
      %p175 = scmp.le.s32.totalorder 1, %s11
      %p176 = scmp.lt.s32.totalorder %s11, 5
      %p177 = pnand %p175, %p176
      %p178 = pneg %p177
      // Predicated region
      $region9: #{acmix_forward.9} parent=5 // pred_check
        _
      $region10: #{acmix_forward.9} parent=5 // pred_check_branch
        %180 = sbr.rel (%p177) target = $region12
      $region11: #{acmix_forward.9} parent=5 // pred_region
        %s181 = ssub.s32 %s11, 1
        // Predicated region
        $region13: #{acmix_forward.9} parent=11 // pred_check
          %p182 = pneg %p137
        $region14: #{acmix_forward.9} parent=11 // pred_check_branch
          %184 = sbr.rel (%p182) target = $region16
        $region15: #{acmix_forward.9} parent=11 // pred_region
          %s186 = ssub.s32 16, 16
          %187 = vsyncadd [#allocation3], %s186
          %s189 = sshll.u32 %s3, 4
          %s190 = int_to_ptr.vmem [resolvable:$true] %s189
          %192 = dma.vmem_to_smem %s190, 16, [#allocation2], [#allocation3]
        $region16: #{acmix_forward.9} parent=11 // pred_fallthru
          _
      $region12: #{acmix_forward.9} parent=5 // pred_fallthru
        _
      %p193 = scmp.lt.s32.totalorder %s11, 4
      // Predicated region
      $region17: #{acmix_forward.9} parent=5 // pred_check
        %p194 = pneg %p193
      $region18: #{acmix_forward.9} parent=5 // pred_check_branch
        %196 = sbr.rel (%p194) target = $region20
      $region19: #{acmix_forward.9} parent=5 // pred_region
        // Predicated region
        $region21: #{acmix_forward.9} parent=19 // pred_check
          %p197 = pneg %p54
        $region22: #{acmix_forward.9} parent=19 // pred_check_branch
          %199 = sbr.rel (%p197) target = $region24
        $region23: #{acmix_forward.9} parent=19 // pred_region
          %s200 = smul.u32 2, %s20
          %p201 = scmp.lt.s32.totalorder %s18, 1
          %s202 = scalar_select %p201, %s18, 1
          %p203 = scmp.lt.s32.totalorder %s19, 1
          %s204 = scalar_select %p203, %s19, 1
          %p205 = scmp.lt.s32.totalorder %s200, 1
          %s206 = scalar_select %p205, %s200, 1
          %s207 = smul.addr %s204, 22
          %s208 = sadd.s32 %s206, %s207
          %s209 = smul.addr %s202, 44
          %s210 = sadd.s32 %s208, %s209
          %s211 = smul.addr %s210, 4
          %s212 = scalar_lea.vmem %s0, %s211
          %s213 = smul.u32 2, %s20
        $region24: #{acmix_forward.9} parent=19 // pred_fallthru
          _
        // Predicated region
        $region25: #{acmix_forward.9} parent=19 // pred_check
          %p214 = pneg %p80
        $region26: #{acmix_forward.9} parent=19 // pred_check_branch
          %216 = sbr.rel (%p214) target = $region28
        $region27: #{acmix_forward.9} parent=19 // pred_region
          %p217 = scmp.lt.s32.totalorder %s19, 1
          %s218 = scalar_select %p217, %s19, 1
          %s219 = smul.addr %s218, 2
          %s220 = scalar_lea.vmem %s1, %s219
        $region28: #{acmix_forward.9} parent=19 // pred_fallthru
          _
        // Predicated region
        $region29: #{acmix_forward.9} parent=19 // pred_check
          %p221 = pneg %p110
        $region30: #{acmix_forward.9} parent=19 // pred_check_branch
          %223 = sbr.rel (%p221) target = $region32
        $region31: #{acmix_forward.9} parent=19 // pred_region
          %s224 = smul.u32 2, %s20
          %p225 = scmp.lt.s32.totalorder %s18, 1
          %s226 = scalar_select %p225, %s18, 1
          %p227 = scmp.lt.s32.totalorder %s19, 1
          %s228 = scalar_select %p227, %s19, 1
          %p229 = scmp.lt.s32.totalorder %s224, 1
          %s230 = scalar_select %p229, %s224, 1
          %s231 = smul.addr %s228, 2
          %s232 = sadd.s32 %s230, %s231
          %s233 = smul.addr %s226, 4
          %s234 = sadd.s32 %s232, %s233
          %s235 = smul.addr %s234, 4
          %s236 = scalar_lea.vmem %s2, %s235
          %s237 = smul.u32 2, %s20
        $region32: #{acmix_forward.9} parent=19 // pred_fallthru
          _
      $region20: #{acmix_forward.9} parent=5 // pred_fallthru
        _
      %p238 = scmp.le.s32.totalorder 1, %s11
      %p239 = scmp.lt.s32.totalorder %s11, 5
      %p240 = pnand %p238, %p239
      %p241 = pneg %p240
      // Predicated region
      $region33: #{acmix_forward.9} parent=5 // pred_check
        _
      $region34: #{acmix_forward.9} parent=5 // pred_check_branch
        %243 = sbr.rel (%p240) target = $region36
      $region35: #{acmix_forward.9} parent=5 // pred_region
        %s244 = ssub.s32 %s11, 1
        // Predicated region
        $region37: #{acmix_forward.9} parent=35 // pred_check
          %p245 = pneg %p137
        $region38: #{acmix_forward.9} parent=35 // pred_check_branch
          %247 = sbr.rel (%p245) target = $region40
        $region39: #{acmix_forward.9} parent=35 // pred_region
          %248 = dma.done [#allocation3], 16
        $region40: #{acmix_forward.9} parent=35 // pred_fallthru
          _
        %249 = sfence
        %s250 = smul.u32 2, %s23
        %p251 = scmp.lt.s32.totalorder %s21, 1
        %s252 = scalar_select %p251, %s21, 1
        %p253 = scmp.lt.s32.totalorder %s22, 1
        %s254 = scalar_select %p253, %s22, 1
        %p255 = scmp.lt.s32.totalorder %s250, 1
        %s256 = scalar_select %p255, %s250, 1
        %s257 = smul.addr %s254, 22
        %s258 = sadd.s32 %s256, %s257
        %s259 = smul.addr %s252, 44
        %s260 = sadd.s32 %s258, %s259
        %s261 = smul.addr %s260, 4
        %s262 = scalar_lea.vmem %s0, %s261
        %p263 = pneg %p60
        %p264 = pneg %p57
        %p265 = scmp.lt.s32.totalorder %s22, 1
        %s266 = scalar_select %p265, %s22, 1
        %s267 = smul.addr %s266, 2
        %s268 = scalar_lea.vmem %s1, %s267
        %p269 = pneg %p86
        %p270 = pneg %p83
        %s271 = smul.u32 2, %s23
        %p272 = scmp.lt.s32.totalorder %s21, 1
        %s273 = scalar_select %p272, %s21, 1
        %p274 = scmp.lt.s32.totalorder %s22, 1
        %s275 = scalar_select %p274, %s22, 1
        %p276 = scmp.lt.s32.totalorder %s271, 1
        %s277 = scalar_select %p276, %s271, 1
        %s278 = smul.addr %s275, 2
        %s279 = sadd.s32 %s277, %s278
        %s280 = smul.addr %s273, 4
        %s281 = sadd.s32 %s279, %s280
        %s282 = smul.addr %s281, 4
        %s283 = scalar_lea.vmem %s2, %s282
        %p284 = pneg %p116
        %p285 = pneg %p113
        %p286 = pneg %p137
        %p287 = pneg %p134
        %p288 = pneg %p167
        %p289 = pneg %p164
        %s290 = smul.u32 2, %s23
        %p291 = scmp.lt.s32.totalorder %s21, 1
        %s292 = scalar_select %p291, %s21, 1
        %p293 = scmp.lt.s32.totalorder %s22, 1
        %s294 = scalar_select %p293, %s22, 1
        %p295 = scmp.lt.s32.totalorder %s290, 1
        %s296 = scalar_select %p295, %s290, 1
        %s297 = smul.addr %s294, 2
        %s298 = sadd.s32 %s296, %s297
        %s299 = smul.addr %s292, 4
        %s300 = sadd.s32 %s298, %s299
        %s301 = smul.addr %s300, 4
        %s302 = scalar_lea.vmem %s4, %s301
        %s303 = smul.u32 2, %s23
        %p304 = scmp.lt.s32.totalorder %s21, 1
        %s305 = scalar_select %p304, %s21, 1
        %p306 = scmp.lt.s32.totalorder %s22, 1
        %s307 = scalar_select %p306, %s22, 1
        %p308 = scmp.lt.s32.totalorder %s303, 1
        %s309 = scalar_select %p308, %s303, 1
        %s310 = smul.addr %s307, 22
        %s311 = sadd.s32 %s309, %s310
        %s312 = smul.addr %s305, 44
        %s313 = sadd.s32 %s311, %s312
        %s314 = smul.addr %s313, 4
        %s315 = scalar_lea.vmem %s0, %s314
        %s316 = smul.u32 2, %s23
        %p317 = scmp.lt.s32.totalorder %s22, 1
        %s318 = scalar_select %p317, %s22, 1
        %s319 = smul.addr %s318, 2
        %s320 = scalar_lea.vmem %s1, %s319
        %s321 = smul.u32 2, %s23
        %p322 = scmp.lt.s32.totalorder %s21, 1
        %s323 = scalar_select %p322, %s21, 1
        %p324 = scmp.lt.s32.totalorder %s22, 1
        %s325 = scalar_select %p324, %s22, 1
        %p326 = scmp.lt.s32.totalorder %s321, 1
        %s327 = scalar_select %p326, %s321, 1
        %s328 = smul.addr %s325, 2
        %s329 = sadd.s32 %s327, %s328
        %s330 = smul.addr %s323, 4
        %s331 = sadd.s32 %s329, %s330
        %s332 = smul.addr %s331, 4
        %s333 = scalar_lea.vmem %s2, %s332
        %s334 = smul.u32 2, %s23
        %s335 = smul.u32 2, %s23
        %p336 = scmp.lt.s32.totalorder %s21, 1
        %s337 = scalar_select %p336, %s21, 1
        %p338 = scmp.lt.s32.totalorder %s22, 1
        %s339 = scalar_select %p338, %s22, 1
        %p340 = scmp.lt.s32.totalorder %s335, 1
        %s341 = scalar_select %p340, %s335, 1
        %s342 = smul.addr %s339, 2
        %s343 = sadd.s32 %s341, %s342
        %s344 = smul.addr %s337, 4
        %s345 = sadd.s32 %s343, %s344
        %s346 = smul.addr %s345, 4
        %s347 = scalar_lea.vmem %s4, %s346
        %s348 = smul.u32 2, %s23
        %v350 = vld [vmem:[%s320] sm:$0x3]
        %v351 = vld [vmem:[%s315] sm:$0xff]
        %v352 = vld [vmem:[%s315 + $0x8] sm:$0xff]
        %v353 = vld [vmem:[%s315 + $0x10] sm:$0xff]
        %v354 = vld [vmem:[%s315 + $0x18] sm:$0xff]
        %v355 = vld [vmem:[%s315 + $0x20] sm:$0xff]
        %v356 = vld [vmem:[%s315 + $0x28] sm:$0xff]
        %v357 = vld [vmem:[%s315 + $0x30] sm:$0xff]
        %v358 = vld [vmem:[%s315 + $0x38] sm:$0xff]
        %v359 = vld [vmem:[%s315 + $0x40] sm:$0xff]
        %v360 = vld [vmem:[%s315 + $0x48] sm:$0xff]
        %v361 = vld [vmem:[%s315 + $0x50] sm:$0x11]
        %v373 = vunpack.c.l.b16 %v351
        %v374 = vunpack.c.h.b16 %v351
        %v375 = vunpack.c.l.b16 %v352
        %v376 = vunpack.c.h.b16 %v352
        %v377 = vunpack.c.l.b16 %v353
        %v378 = vunpack.c.h.b16 %v353
        %v379 = vunpack.c.l.b16 %v354
        %v380 = vunpack.c.h.b16 %v354
        %v381 = vunpack.c.l.b16 %v355
        %v382 = vunpack.c.h.b16 %v355
        %v383 = vunpack.c.l.b16 %v356
        %v384 = vunpack.c.h.b16 %v356
        %v385 = vunpack.c.l.b16 %v357
        %v386 = vunpack.c.h.b16 %v357
        %v387 = vunpack.c.l.b16 %v358
        %v388 = vunpack.c.h.b16 %v358
        %v389 = vunpack.c.l.b16 %v359
        %v390 = vunpack.c.h.b16 %v359
        %v391 = vunpack.c.l.b16 %v360
        %v392 = vunpack.c.h.b16 %v360
        %v393 = vunpack.c.l.b16 %v361
        %v394 = vunpack.c.h.b16 %v361
        %v395 = vpack.c.b16 %v375, %v373
        %v396 = vpack.c.b16 %v376, %v374
        %v397 = vpack.c.b16 %v379, %v377
        %v398 = vpack.c.b16 %v380, %v378
        %v399 = vpack.c.b16 %v383, %v381
        %v400 = vpack.c.b16 %v384, %v382
        %v401 = vpack.c.b16 %v387, %v385
        %v402 = vpack.c.b16 %v388, %v386
        %v403 = vpack.c.b16 %v391, %v389
        %v404 = vpack.c.b16 %v392, %v390
        %v405 = vpack.c.b16 %v393, %v393
        %v406 = vpack.c.b16 %v394, %v394
        %vm417 = vcmask 662528
        %v419 = vsel %vm417, %v350, 0
        %vm421 = vcmask 1040384
        %v422 = vsel 0, 4294967295, 65535
        %v423 = vsel %vm421, %v422, 0
        %v425 = vand.u32 %v405, %v423
        %v428 = vand.u32 %v406, %v423
        %430 = vmatprep.subr.bf16.mxu0 %v396
        %431 = vmatpush1.bf16.msra.mxu0 %v395
        %432 = vmatprep.subr.bf16.mxu0 %v398
        %433 = vmatpush1.bf16.msra.mxu0 %v397
        %434 = vmatprep.subr.bf16.mxu0 %v400
        %435 = vmatpush1.bf16.msra.mxu0 %v399
        %436 = vmatprep.subr.bf16.mxu0 %v402
        %437 = vmatpush1.bf16.msra.mxu0 %v401
        %438 = vmatprep.subr.bf16.mxu0 %v404
        %439 = vmatpush1.bf16.msra.mxu0 %v403
        %440 = vmatprep.subr.bf16.mxu0 %v428
        %441 = vmatpush1.bf16.msra.mxu0 %v425
        %442 = vmatprep.subr.bf16.mxu0 0
        %443 = vmatpush1.bf16.msra.mxu0 0
        %444 = vmatprep.subr.bf16.mxu0 0
        %445 = vmatpush1.bf16.msra.mxu0 0
        %446 = vmatprep.subr.bf16.mxu0 0
        %447 = vmatpush1.bf16.msra.mxu0 0
        %448 = vmatprep.subr.bf16.mxu0 0
        %449 = vmatpush1.bf16.msra.mxu0 0
        %450 = vmatprep.subr.bf16.mxu0 0
        %451 = vmatpush1.bf16.msra.mxu0 0
        %452 = vmatprep.subr.bf16.mxu0 0
        %453 = vmatpush1.bf16.msra.mxu0 0
        %454 = vmatprep.subr.bf16.mxu0 0
        %455 = vmatpush1.bf16.msra.mxu0 0
        %456 = vmatprep.subr.bf16.mxu0 0
        %457 = vmatpush1.bf16.msra.mxu0 0
        %458 = vmatprep.subr.bf16.mxu0 0
        %459 = vmatpush1.bf16.msra.mxu0 0
        %460 = vmatprep.subr.bf16.mxu0 0
        %461 = vmatpush1.bf16.msra.mxu0 0
        %462 = vmatprep.mubr.bf16.mxu0 0
        %463 = vmatmul.mubr.bf16.gmra.mrb[0].mxu0 %v419
        %v464 = vpop.f32.mrb[0].mxu0
        %v465 = vadd.f32 0.0, %v464
        %v466 = vpop.f32.mrb[0].mxu0
        %v467 = vadd.f32 0.0, %v466
        %v468 = vpop.f32.mrb[0].mxu0
        %v469 = vpop.f32.mrb[0].mxu0
        %470 = vdwg.mxu0
        %s471 = sld [smem:[#allocation2]]
        %v472 = vld [vmem:[%s333] sm:$0xff]
        %v473 = vstv %s471
        %v474 = vmul.f32 %v473, %v472
        %s475 = sld [smem:[#allocation2 + $0x1]]
        %v476 = vstv %s475
        %v477 = vmul.f32 %v476, %v465
        %v478 = vmul.f32 %v476, %v467
        %v481 = vcombine.low %v477, %v478
        %v483 = vadd.f32 %v474, %v481
        %484 = vst [vmem:[%s347] sm:$0xff] %v483
        %s485 = smul.u32 2, %s23
        %p486 = scmp.lt.s32.totalorder %s21, 1
        %s487 = scalar_select %p486, %s21, 1
        %p488 = scmp.lt.s32.totalorder %s22, 1
        %s489 = scalar_select %p488, %s22, 1
        %p490 = scmp.lt.s32.totalorder %s485, 1
        %s491 = scalar_select %p490, %s485, 1
        %s492 = smul.addr %s489, 2
        %s493 = sadd.s32 %s491, %s492
        %s494 = smul.addr %s487, 4
        %s495 = sadd.s32 %s493, %s494
        %s496 = smul.addr %s495, 4
        %s497 = scalar_lea.vmem %s4, %s496
        // Predicated region
        $region41: #{acmix_forward.9} parent=35 // pred_check
          %p498 = pneg %p164
        $region42: #{acmix_forward.9} parent=35 // pred_check_branch
          %500 = sbr.rel (%p498) target = $region44
        $region43: #{acmix_forward.9} parent=35 // pred_region
          %s501 = smul.u32 2, %s23
        $region44: #{acmix_forward.9} parent=35 // pred_fallthru
          _
      $region36: #{acmix_forward.9} parent=5 // pred_fallthru
        _
      %p502 = scmp.le.s32.totalorder 2, %s11
      // Predicated region
      $region45: #{acmix_forward.9} parent=5 // pred_check
        %p503 = pneg %p502
      $region46: #{acmix_forward.9} parent=5 // pred_check_branch
        %505 = sbr.rel (%p503) target = $region48
      $region47: #{acmix_forward.9} parent=5 // pred_region
        %s506 = ssub.s32 %s11, 2
        // Predicated region
        $region49: #{acmix_forward.9} parent=47 // pred_check
          %p507 = pneg %p170
        $region50: #{acmix_forward.9} parent=47 // pred_check_branch
          %509 = sbr.rel (%p507) target = $region52
        $region51: #{acmix_forward.9} parent=47 // pred_region
          %s510 = smul.u32 2, %s26
          %p511 = scmp.lt.s32.totalorder %s24, 1
          %s512 = scalar_select %p511, %s24, 1
          %p513 = scmp.lt.s32.totalorder %s25, 1
          %s514 = scalar_select %p513, %s25, 1
          %p515 = scmp.lt.s32.totalorder %s510, 1
          %s516 = scalar_select %p515, %s510, 1
          %s517 = smul.addr %s514, 2
          %s518 = sadd.s32 %s516, %s517
          %s519 = smul.addr %s512, 4
          %s520 = sadd.s32 %s518, %s519
          %s521 = smul.addr %s520, 4
          %s522 = scalar_lea.vmem %s4, %s521
        $region52: #{acmix_forward.9} parent=47 // pred_fallthru
          _
      $region48: #{acmix_forward.9} parent=5 // pred_fallthru
        _
    $region6: #{acmix_forward.9} parent=1 // loop_footer
      %s15 = sadd.s32 1, %s11
    $region7: #{acmix_forward.9} parent=1 // loop_footer_branch
      %10 = sbr.rel target = $region3
    $region8: #{acmix_forward.9} parent=1 // loop_exit
      _
    %523 = vsyncpa [#allocation3], 1
    %s524 = scalar_lea.sflag [#allocation3], 1
    %525 = vsyncpa %s524, 1

// kernel: acmix_forward.7
$region0: #{acmix_forward.7}
  #allocation0 [shape = 'u32[]', space=smem, size = 0x4, offset = 0x4, fixed_abs, tag = 'smem constant byte address 0x4 - core index']
  #allocation1 [shape = 'u32[144,128]{1,0:T(1,128)}', space=vmem, size = 0x12000, scoped, tag = 'internal scratch']
  #allocation2 [shape = 'f32[1,256]{1,0:T(1,128)}', space=vmem, size = 0x400, scoped, tag = 'scratch operand']
  #allocation3 [shape = 'f32[1,256]{1,0:T(1,128)}', space=vmem, size = 0x400, scoped, tag = 'scratch operand']
  #allocation4 [shape = 'f32[2,256]{1,0:T(2,128)}', space=vmem, size = 0x800, scoped, tag = 'scratch operand']
  %s0 = inlined_call_operand.vmem [shape: f32[8,2,256], index: 0, kind: input, shape index: {}]
  %s1 = inlined_call_operand.vmem [shape: f32[8,49,2,256], index: 1, kind: input, shape index: {}]
  %s2 = inlined_call_operand.vmem [shape: f32[8,49,2,256], index: 2, kind: input, shape index: {}]
  %s3 = inlined_call_operand.vmem [shape: f32[49,2,256], index: 3, kind: input, shape index: {}]
  %s4 = inlined_call_operand.vmem [shape: f32[8,2,256], index: 4, kind: output, shape index: {}]
  %s5 = sld [smem:[#allocation0]]
  $region57: #{acmix_forward.7} parent=0
    _
  %s7 = ssub.s32 1, %s5
  %s8 = scalar_select 0, %s7, %s5
  loop: start=0, step=1, limit=10
  $region2: #{acmix_forward.7} parent=0 // loop_pre_header
    _
  $region3: #{acmix_forward.7} parent=0 // loop_header
    %s10 = sphi 0, %s14
    %p11 = scmp.ge.s32.totalorder %s10, 10
    %s17 = sphi 0, %s36
    %s18 = sphi 0, %s32
    %s19 = sphi 0, %s28
    %s20 = sphi 0, %s17
    %s21 = sphi 0, %s18
    %s22 = sphi 0, %s19
    %s23 = sphi 0, %s20
    %s24 = sphi 0, %s21
    %s25 = sphi 0, %s22
    %s41 = sphi 0, %s43
    %s44 = sphi 0, %s41
    %s45 = sphi 0, %s44
    %s61 = sphi 0, %s45
    %s71 = sphi 0, %s73
    %s74 = sphi 0, %s71
    %s75 = sphi 0, %s74
    %s91 = sphi 0, %s75
    %s101 = sphi 0, %s103
    %s104 = sphi 0, %s101
    %s105 = sphi 0, %s104
    %s121 = sphi 0, %s105
    %s129 = sphi 0, %s131
    %s132 = sphi 0, %s129
    %s133 = sphi 0, %s132
    %s149 = sphi 0, %s133
    %s157 = sphi 0, %s159
    %s160 = sphi 0, %s157
    %s161 = sphi 0, %s160
    %s177 = sphi 0, %s161
  $region4: #{acmix_forward.7} parent=0 // loop_header_branch
    %13 = sbr.rel (%p11) target = $region8
  $region5: #{acmix_forward.7} parent=0 // loop_body
    %s15 = ssub.s32 %s10, 1
    %s16 = ssub.s32 %s10, 2
    %s26 = sadd.s32 1, %s19
    %p27 = scmp.ge.s32.totalorder %s26, 1
    %s28 = scalar_select %p27, 0, %s26
    %s29 = sadd.s32 1, %s18
    %s30 = scalar_select %p27, %s29, %s18
    %p31 = scmp.ge.s32.totalorder %s30, 1
    %s32 = scalar_select %p31, 0, %s30
    %s33 = sadd.s32 1, %s17
    %s34 = scalar_select %p31, %s33, %s17
    %p35 = scmp.ge.s32.totalorder %s34, 8
    %s36 = scalar_select %p35, 0, %s34
    %s37 = ssub.s32 %s17, %s36
    %s38 = ssub.s32 %s18, %s32
    %s39 = sor.u32 %s37, %s38
    %p40 = scmp.eq.s32.totalorder %s39, 0
    %s42 = sadd.s32 %s41, 1
    %s43 = scalar_select %p40, %s41, %s42
    %p46 = pneg %p40
    %p47 = scmp.eq.s32.totalorder %s10, 7
    %p48 = por %p46, %p47
    %p49 = scmp.ne.s32.totalorder %s41, %s44
    %p50 = scmp.eq.s32.totalorder %s10, 0
    %p51 = por %p49, %p50
    %p52 = scmp.ne.s32.totalorder %s41, %s44
    %p53 = scmp.eq.s32.totalorder %s15, 7
    %p54 = por %p52, %p53
    %p55 = scmp.ne.s32.totalorder %s44, %s45
    %p56 = scmp.eq.s32.totalorder %s15, 0
    %p57 = por %p55, %p56
    %p58 = scmp.ne.s32.totalorder %s44, %s45
    %p59 = scmp.eq.s32.totalorder %s16, 7
    %p60 = por %p58, %p59
    %p62 = scmp.ne.s32.totalorder %s45, %s61
    %p63 = scmp.eq.s32.totalorder %s16, 0
    %p64 = por %p62, %p63
    %s65 = ssub.s32 %s17, %s36
    %s66 = ssub.s32 %s19, %s28
    %s67 = sor.u32 %s65, %s66
    %s68 = ssub.s32 %s18, %s32
    %s69 = sor.u32 %s67, %s68
    %p70 = scmp.eq.s32.totalorder %s69, 0
    %s72 = sadd.s32 %s71, 1
    %s73 = scalar_select %p70, %s71, %s72
    %p76 = pneg %p70
    %p77 = scmp.eq.s32.totalorder %s10, 7
    %p78 = por %p76, %p77
    %p79 = scmp.ne.s32.totalorder %s71, %s74
    %p80 = scmp.eq.s32.totalorder %s10, 0
    %p81 = por %p79, %p80
    %p82 = scmp.ne.s32.totalorder %s71, %s74
    %p83 = scmp.eq.s32.totalorder %s15, 7
    %p84 = por %p82, %p83
    %p85 = scmp.ne.s32.totalorder %s74, %s75
    %p86 = scmp.eq.s32.totalorder %s15, 0
    %p87 = por %p85, %p86
    %p88 = scmp.ne.s32.totalorder %s74, %s75
    %p89 = scmp.eq.s32.totalorder %s16, 7
    %p90 = por %p88, %p89
    %p92 = scmp.ne.s32.totalorder %s75, %s91
    %p93 = scmp.eq.s32.totalorder %s16, 0
    %p94 = por %p92, %p93
    %s95 = ssub.s32 %s17, %s36
    %s96 = ssub.s32 %s19, %s28
    %s97 = sor.u32 %s95, %s96
    %s98 = ssub.s32 %s18, %s32
    %s99 = sor.u32 %s97, %s98
    %p100 = scmp.eq.s32.totalorder %s99, 0
    %s102 = sadd.s32 %s101, 1
    %s103 = scalar_select %p100, %s101, %s102
    %p106 = pneg %p100
    %p107 = scmp.eq.s32.totalorder %s10, 7
    %p108 = por %p106, %p107
    %p109 = scmp.ne.s32.totalorder %s101, %s104
    %p110 = scmp.eq.s32.totalorder %s10, 0
    %p111 = por %p109, %p110
    %p112 = scmp.ne.s32.totalorder %s101, %s104
    %p113 = scmp.eq.s32.totalorder %s15, 7
    %p114 = por %p112, %p113
    %p115 = scmp.ne.s32.totalorder %s104, %s105
    %p116 = scmp.eq.s32.totalorder %s15, 0
    %p117 = por %p115, %p116
    %p118 = scmp.ne.s32.totalorder %s104, %s105
    %p119 = scmp.eq.s32.totalorder %s16, 7
    %p120 = por %p118, %p119
    %p122 = scmp.ne.s32.totalorder %s105, %s121
    %p123 = scmp.eq.s32.totalorder %s16, 0
    %p124 = por %p122, %p123
    %s125 = ssub.s32 %s19, %s28
    %s126 = ssub.s32 %s18, %s32
    %s127 = sor.u32 %s125, %s126
    %p128 = scmp.eq.s32.totalorder %s127, 0
    %s130 = sadd.s32 %s129, 1
    %s131 = scalar_select %p128, %s129, %s130
    %p134 = pneg %p128
    %p135 = scmp.eq.s32.totalorder %s10, 7
    %p136 = por %p134, %p135
    %p137 = scmp.ne.s32.totalorder %s129, %s132
    %p138 = scmp.eq.s32.totalorder %s10, 0
    %p139 = por %p137, %p138
    %p140 = scmp.ne.s32.totalorder %s129, %s132
    %p141 = scmp.eq.s32.totalorder %s15, 7
    %p142 = por %p140, %p141
    %p143 = scmp.ne.s32.totalorder %s132, %s133
    %p144 = scmp.eq.s32.totalorder %s15, 0
    %p145 = por %p143, %p144
    %p146 = scmp.ne.s32.totalorder %s132, %s133
    %p147 = scmp.eq.s32.totalorder %s16, 7
    %p148 = por %p146, %p147
    %p150 = scmp.ne.s32.totalorder %s133, %s149
    %p151 = scmp.eq.s32.totalorder %s16, 0
    %p152 = por %p150, %p151
    %s153 = ssub.s32 %s17, %s36
    %s154 = ssub.s32 %s18, %s32
    %s155 = sor.u32 %s153, %s154
    %p156 = scmp.eq.s32.totalorder %s155, 0
    %s158 = sadd.s32 %s157, 1
    %s159 = scalar_select %p156, %s157, %s158
    %p162 = pneg %p156
    %p163 = scmp.eq.s32.totalorder %s10, 7
    %p164 = por %p162, %p163
    %p165 = scmp.ne.s32.totalorder %s157, %s160
    %p166 = scmp.eq.s32.totalorder %s10, 0
    %p167 = por %p165, %p166
    %p168 = scmp.ne.s32.totalorder %s157, %s160
    %p169 = scmp.eq.s32.totalorder %s15, 7
    %p170 = por %p168, %p169
    %p171 = scmp.ne.s32.totalorder %s160, %s161
    %p172 = scmp.eq.s32.totalorder %s15, 0
    %p173 = por %p171, %p172
    %p174 = scmp.ne.s32.totalorder %s160, %s161
    %p175 = scmp.eq.s32.totalorder %s16, 7
    %p176 = por %p174, %p175
    %p178 = scmp.ne.s32.totalorder %s161, %s177
    %p179 = scmp.eq.s32.totalorder %s16, 0
    %p180 = por %p178, %p179
    %p181 = scmp.le.s32.totalorder 1, %s10
    %p182 = scmp.lt.s32.totalorder %s10, 9
    %p183 = pnand %p181, %p182
    %p184 = pneg %p183
    // Predicated region
    $region9: #{acmix_forward.7} parent=5 // pred_check
      _
    $region10: #{acmix_forward.7} parent=5 // pred_check_branch
      %186 = sbr.rel (%p183) target = $region12
    $region11: #{acmix_forward.7} parent=5 // pred_region
      %s187 = ssub.s32 %s10, 1
      // Predicated region
      $region13: #{acmix_forward.7} parent=11 // pred_check
        %p188 = pneg %p145
      $region14: #{acmix_forward.7} parent=11 // pred_check_branch
        %190 = sbr.rel (%p188) target = $region16
      $region15: #{acmix_forward.7} parent=11 // pred_region
        %s191 = smul.u32 49, %s22
        %s192 = smul.u32 2, %s21
        %p193 = scmp.lt.s32.totalorder %s191, 48
        %s194 = scalar_select %p193, %s191, 48
        %p195 = scmp.lt.s32.totalorder %s192, 1
        %s196 = scalar_select %p195, %s192, 1
        %s197 = smul.addr %s194, 2
        %s198 = sadd.s32 %s196, %s197
        %s199 = smul.addr %s198, 2
        %s200 = scalar_lea.vmem %s3, %s199
        %s201 = smul.u32 49, %s22
        %s202 = smul.u32 2, %s21
      $region16: #{acmix_forward.7} parent=11 // pred_fallthru
        _
    $region12: #{acmix_forward.7} parent=5 // pred_fallthru
      _
    %p203 = scmp.lt.s32.totalorder %s10, 8
    // Predicated region
    $region17: #{acmix_forward.7} parent=5 // pred_check
      %p204 = pneg %p203
    $region18: #{acmix_forward.7} parent=5 // pred_check_branch
      %206 = sbr.rel (%p204) target = $region20
    $region19: #{acmix_forward.7} parent=5 // pred_region
      // Predicated region
      $region21: #{acmix_forward.7} parent=19 // pred_check
        %p207 = pneg %p51
      $region22: #{acmix_forward.7} parent=19 // pred_check_branch
        %209 = sbr.rel (%p207) target = $region24
      $region23: #{acmix_forward.7} parent=19 // pred_region
        %s210 = smul.u32 2, %s18
        %p211 = scmp.lt.s32.totalorder %s17, 7
        %s212 = scalar_select %p211, %s17, 7
        %p213 = scmp.lt.s32.totalorder %s210, 1
        %s214 = scalar_select %p213, %s210, 1
        %s215 = smul.addr %s212, 2
        %s216 = sadd.s32 %s214, %s215
        %s217 = smul.addr %s216, 2
        %s218 = scalar_lea.vmem %s0, %s217
        %s219 = smul.u32 2, %s18
      $region24: #{acmix_forward.7} parent=19 // pred_fallthru
        _
      // Predicated region
      $region25: #{acmix_forward.7} parent=19 // pred_check
        %p220 = pneg %p81
      $region26: #{acmix_forward.7} parent=19 // pred_check_branch
        %222 = sbr.rel (%p220) target = $region28
      $region27: #{acmix_forward.7} parent=19 // pred_region
        %s223 = smul.u32 49, %s19
        %s224 = smul.u32 2, %s18
        %p225 = scmp.lt.s32.totalorder %s17, 7
        %s226 = scalar_select %p225, %s17, 7
        %p227 = scmp.lt.s32.totalorder %s223, 48
        %s228 = scalar_select %p227, %s223, 48
        %p229 = scmp.lt.s32.totalorder %s224, 1
        %s230 = scalar_select %p229, %s224, 1
        %s231 = smul.addr %s228, 2
        %s232 = sadd.s32 %s230, %s231
        %s233 = smul.addr %s226, 98
        %s234 = sadd.s32 %s232, %s233
        %s235 = smul.addr %s234, 2
        %s236 = scalar_lea.vmem %s1, %s235
        %s237 = smul.u32 49, %s19
        %s238 = smul.u32 2, %s18
      $region28: #{acmix_forward.7} parent=19 // pred_fallthru
        _
      // Predicated region
      $region29: #{acmix_forward.7} parent=19 // pred_check
        %p239 = pneg %p111
      $region30: #{acmix_forward.7} parent=19 // pred_check_branch
        %241 = sbr.rel (%p239) target = $region32
      $region31: #{acmix_forward.7} parent=19 // pred_region
        %s242 = smul.u32 49, %s19
        %s243 = smul.u32 2, %s18
        %p244 = scmp.lt.s32.totalorder %s17, 7
        %s245 = scalar_select %p244, %s17, 7
        %p246 = scmp.lt.s32.totalorder %s242, 48
        %s247 = scalar_select %p246, %s242, 48
        %p248 = scmp.lt.s32.totalorder %s243, 1
        %s249 = scalar_select %p248, %s243, 1
        %s250 = smul.addr %s247, 2
        %s251 = sadd.s32 %s249, %s250
        %s252 = smul.addr %s245, 98
        %s253 = sadd.s32 %s251, %s252
        %s254 = smul.addr %s253, 2
        %s255 = scalar_lea.vmem %s2, %s254
        %s256 = smul.u32 49, %s19
        %s257 = smul.u32 2, %s18
      $region32: #{acmix_forward.7} parent=19 // pred_fallthru
        _
    $region20: #{acmix_forward.7} parent=5 // pred_fallthru
      _
    %p258 = scmp.le.s32.totalorder 1, %s10
    %p259 = scmp.lt.s32.totalorder %s10, 9
    %p260 = pnand %p258, %p259
    %p261 = pneg %p260
    // Predicated region
    $region33: #{acmix_forward.7} parent=5 // pred_check
      _
    $region34: #{acmix_forward.7} parent=5 // pred_check_branch
      %263 = sbr.rel (%p260) target = $region36
    $region35: #{acmix_forward.7} parent=5 // pred_region
      %s264 = ssub.s32 %s10, 1
      %s265 = smul.u32 2, %s21
      %p266 = scmp.lt.s32.totalorder %s20, 7
      %s267 = scalar_select %p266, %s20, 7
      %p268 = scmp.lt.s32.totalorder %s265, 1
      %s269 = scalar_select %p268, %s265, 1
      %s270 = smul.addr %s267, 2
      %s271 = sadd.s32 %s269, %s270
      %s272 = smul.addr %s271, 2
      %s273 = scalar_lea.vmem %s0, %s272
      %p274 = pneg %p57
      %p275 = pneg %p54
      %s276 = smul.u32 49, %s22
      %s277 = smul.u32 2, %s21
      %p278 = scmp.lt.s32.totalorder %s20, 7
      %s279 = scalar_select %p278, %s20, 7
      %p280 = scmp.lt.s32.totalorder %s276, 48
      %s281 = scalar_select %p280, %s276, 48
      %p282 = scmp.lt.s32.totalorder %s277, 1
      %s283 = scalar_select %p282, %s277, 1
      %s284 = smul.addr %s281, 2
      %s285 = sadd.s32 %s283, %s284
      %s286 = smul.addr %s279, 98
      %s287 = sadd.s32 %s285, %s286
      %s288 = smul.addr %s287, 2
      %s289 = scalar_lea.vmem %s1, %s288
      %p290 = pneg %p87
      %p291 = pneg %p84
      %s292 = smul.u32 49, %s22
      %s293 = smul.u32 2, %s21
      %p294 = scmp.lt.s32.totalorder %s20, 7
      %s295 = scalar_select %p294, %s20, 7
      %p296 = scmp.lt.s32.totalorder %s292, 48
      %s297 = scalar_select %p296, %s292, 48
      %p298 = scmp.lt.s32.totalorder %s293, 1
      %s299 = scalar_select %p298, %s293, 1
      %s300 = smul.addr %s297, 2
      %s301 = sadd.s32 %s299, %s300
      %s302 = smul.addr %s295, 98
      %s303 = sadd.s32 %s301, %s302
      %s304 = smul.addr %s303, 2
      %s305 = scalar_lea.vmem %s2, %s304
      %p306 = pneg %p117
      %p307 = pneg %p114
      %s308 = smul.u32 49, %s22
      %s309 = smul.u32 2, %s21
      %p310 = scmp.lt.s32.totalorder %s308, 48
      %s311 = scalar_select %p310, %s308, 48
      %p312 = scmp.lt.s32.totalorder %s309, 1
      %s313 = scalar_select %p312, %s309, 1
      %s314 = smul.addr %s311, 2
      %s315 = sadd.s32 %s313, %s314
      %s316 = smul.addr %s315, 2
      %s317 = scalar_lea.vmem %s3, %s316
      %p318 = pneg %p145
      %p319 = pneg %p142
      %p320 = pneg %p173
      %p321 = pneg %p170
      %s322 = smul.u32 2, %s21
      %p323 = scmp.lt.s32.totalorder %s20, 7
      %s324 = scalar_select %p323, %s20, 7
      %p325 = scmp.lt.s32.totalorder %s322, 1
      %s326 = scalar_select %p325, %s322, 1
      %s327 = smul.addr %s324, 2
      %s328 = sadd.s32 %s326, %s327
      %s329 = smul.addr %s328, 2
      %s330 = scalar_lea.vmem %s4, %s329
      %s331 = smul.u32 2, %s21
      %p332 = scmp.lt.s32.totalorder %s20, 7
      %s333 = scalar_select %p332, %s20, 7
      %p334 = scmp.lt.s32.totalorder %s331, 1
      %s335 = scalar_select %p334, %s331, 1
      %s336 = smul.addr %s333, 2
      %s337 = sadd.s32 %s335, %s336
      %s338 = smul.addr %s337, 2
      %s339 = scalar_lea.vmem %s0, %s338
      %s340 = smul.u32 2, %s21
      %s341 = smul.u32 49, %s22
      %s342 = smul.u32 2, %s21
      %p343 = scmp.lt.s32.totalorder %s20, 7
      %s344 = scalar_select %p343, %s20, 7
      %p345 = scmp.lt.s32.totalorder %s341, 48
      %s346 = scalar_select %p345, %s341, 48
      %p347 = scmp.lt.s32.totalorder %s342, 1
      %s348 = scalar_select %p347, %s342, 1
      %s349 = smul.addr %s346, 2
      %s350 = sadd.s32 %s348, %s349
      %s351 = smul.addr %s344, 98
      %s352 = sadd.s32 %s350, %s351
      %s353 = smul.addr %s352, 2
      %s354 = scalar_lea.vmem %s1, %s353
      %s355 = smul.u32 49, %s22
      %s356 = smul.u32 2, %s21
      %s357 = smul.u32 49, %s22
      %s358 = smul.u32 2, %s21
      %p359 = scmp.lt.s32.totalorder %s20, 7
      %s360 = scalar_select %p359, %s20, 7
      %p361 = scmp.lt.s32.totalorder %s357, 48
      %s362 = scalar_select %p361, %s357, 48
      %p363 = scmp.lt.s32.totalorder %s358, 1
      %s364 = scalar_select %p363, %s358, 1
      %s365 = smul.addr %s362, 2
      %s366 = sadd.s32 %s364, %s365
      %s367 = smul.addr %s360, 98
      %s368 = sadd.s32 %s366, %s367
      %s369 = smul.addr %s368, 2
      %s370 = scalar_lea.vmem %s2, %s369
      %s371 = smul.u32 49, %s22
      %s372 = smul.u32 2, %s21
      %s373 = smul.u32 49, %s22
      %s374 = smul.u32 2, %s21
      %p375 = scmp.lt.s32.totalorder %s373, 48
      %s376 = scalar_select %p375, %s373, 48
      %p377 = scmp.lt.s32.totalorder %s374, 1
      %s378 = scalar_select %p377, %s374, 1
      %s379 = smul.addr %s376, 2
      %s380 = sadd.s32 %s378, %s379
      %s381 = smul.addr %s380, 2
      %s382 = scalar_lea.vmem %s3, %s381
      %s383 = smul.u32 49, %s22
      %s384 = smul.u32 2, %s21
      %s385 = smul.u32 2, %s21
      %p386 = scmp.lt.s32.totalorder %s20, 7
      %s387 = scalar_select %p386, %s20, 7
      %p388 = scmp.lt.s32.totalorder %s385, 1
      %s389 = scalar_select %p388, %s385, 1
      %s390 = smul.addr %s387, 2
      %s391 = sadd.s32 %s389, %s390
      %s392 = smul.addr %s391, 2
      %s393 = scalar_lea.vmem %s4, %s392
      %s394 = smul.u32 2, %s21
      %p395 = scmp.eq.s32.totalorder %s22, 0
      // Predicated region
      $region37: #{acmix_forward.7} parent=35 // pred_check
        %p396 = pneg %p395
      $region38: #{acmix_forward.7} parent=35 // pred_check_branch
        %398 = sbr.rel (%p396) target = $region40
      $region39: #{acmix_forward.7} parent=35 // pred_region
        %v399 = vlaneseq
        %vm400 = vcmp.ge.s32.totalorder %v399, 0
        %vm401 = vcmp.lt.s32.totalorder %v399, 256
        %vm402 = vmand %vm400, %vm401
        %403 = vst.msk [vmem:[#allocation2] sm:$0x3] %vm402, -inf
        %404 = vst.msk [vmem:[#allocation3] sm:$0x3] %vm402, 0.0
        %405 = vst [vmem:[#allocation4] sm:$0xf] 0.0
      $region40: #{acmix_forward.7} parent=35 // pred_fallthru
        _
      %v406 = vld [vmem:[%s339] sm:$0xf]
      %v407 = vmul.f32 %v406, 0.70710677
      %v408 = vld [vmem:[%s354] sm:$0xf]
      %v409 = vld [vmem:[%s354 + $0x4] sm:$0xf]
      %v410 = vld [vmem:[%s354 + $0x8] sm:$0xf]
      %v411 = vld [vmem:[%s354 + $0xc] sm:$0xf]
      %v412 = vld [vmem:[%s354 + $0x10] sm:$0xf]
      %v413 = vld [vmem:[%s354 + $0x14] sm:$0xf]
      %v414 = vld [vmem:[%s354 + $0x18] sm:$0xf]
      %v415 = vld [vmem:[%s354 + $0x1c] sm:$0xf]
      %v416 = vld [vmem:[%s354 + $0x20] sm:$0xf]
      %v417 = vld [vmem:[%s354 + $0x24] sm:$0xf]
      %v418 = vld [vmem:[%s354 + $0x28] sm:$0xf]
      %v419 = vld [vmem:[%s354 + $0x2c] sm:$0xf]
      %v420 = vld [vmem:[%s354 + $0x30] sm:$0xf]
      %v421 = vld [vmem:[%s354 + $0x34] sm:$0xf]
      %v422 = vld [vmem:[%s354 + $0x38] sm:$0xf]
      %v423 = vld [vmem:[%s354 + $0x3c] sm:$0xf]
      %v424 = vld [vmem:[%s354 + $0x40] sm:$0xf]
      %v425 = vld [vmem:[%s354 + $0x44] sm:$0xf]
      %v426 = vld [vmem:[%s354 + $0x48] sm:$0xf]
      %v427 = vld [vmem:[%s354 + $0x4c] sm:$0xf]
      %v428 = vld [vmem:[%s354 + $0x50] sm:$0xf]
      %v429 = vld [vmem:[%s354 + $0x54] sm:$0xf]
      %v430 = vld [vmem:[%s354 + $0x58] sm:$0xf]
      %v431 = vld [vmem:[%s354 + $0x5c] sm:$0xf]
      %v432 = vld [vmem:[%s354 + $0x60] sm:$0xf]
      %v433 = vld [vmem:[%s354 + $0x64] sm:$0xf]
      %v434 = vld [vmem:[%s354 + $0x68] sm:$0xf]
      %v435 = vld [vmem:[%s354 + $0x6c] sm:$0xf]
      %v436 = vld [vmem:[%s354 + $0x70] sm:$0xf]
      %v437 = vld [vmem:[%s354 + $0x74] sm:$0xf]
      %v438 = vld [vmem:[%s354 + $0x78] sm:$0xf]
      %v439 = vld [vmem:[%s354 + $0x7c] sm:$0xf]
      %v440 = vld [vmem:[%s354 + $0x80] sm:$0xf]
      %v441 = vld [vmem:[%s354 + $0x84] sm:$0xf]
      %v442 = vld [vmem:[%s354 + $0x88] sm:$0xf]
      %v443 = vld [vmem:[%s354 + $0x8c] sm:$0xf]
      %v444 = vld [vmem:[%s354 + $0x90] sm:$0xf]
      %v445 = vld [vmem:[%s354 + $0x94] sm:$0xf]
      %v446 = vld [vmem:[%s354 + $0x98] sm:$0xf]
      %v447 = vld [vmem:[%s354 + $0x9c] sm:$0xf]
      %v448 = vld [vmem:[%s354 + $0xa0] sm:$0xf]
      %v449 = vld [vmem:[%s354 + $0xa4] sm:$0xf]
      %v450 = vld [vmem:[%s354 + $0xa8] sm:$0xf]
      %v451 = vld [vmem:[%s354 + $0xac] sm:$0xf]
      %v452 = vld [vmem:[%s354 + $0xb0] sm:$0xf]
      %v453 = vld [vmem:[%s354 + $0xb4] sm:$0xf]
      %v454 = vld [vmem:[%s354 + $0xb8] sm:$0xf]
      %v455 = vld [vmem:[%s354 + $0xbc] sm:$0xf]
      %v456 = vld [vmem:[%s354 + $0xc0] sm:$0xf]
      %v457 = vld [vmem:[%s382] sm:$0xf]
      %v458 = vld [vmem:[%s382 + $0x4] sm:$0xf]
      %v459 = vld [vmem:[%s382 + $0x8] sm:$0xf]
      %v460 = vld [vmem:[%s382 + $0xc] sm:$0xf]
      %v461 = vld [vmem:[%s382 + $0x10] sm:$0xf]
      %v462 = vld [vmem:[%s382 + $0x14] sm:$0xf]
      %v463 = vld [vmem:[%s382 + $0x18] sm:$0xf]
      %v464 = vld [vmem:[%s382 + $0x1c] sm:$0xf]
      %v465 = vld [vmem:[%s382 + $0x20] sm:$0xf]
      %v466 = vld [vmem:[%s382 + $0x24] sm:$0xf]
      %v467 = vld [vmem:[%s382 + $0x28] sm:$0xf]
      %v468 = vld [vmem:[%s382 + $0x2c] sm:$0xf]
      %v469 = vld [vmem:[%s382 + $0x30] sm:$0xf]
      %v470 = vld [vmem:[%s382 + $0x34] sm:$0xf]
      %v471 = vld [vmem:[%s382 + $0x38] sm:$0xf]
      %v472 = vld [vmem:[%s382 + $0x3c] sm:$0xf]
      %v473 = vld [vmem:[%s382 + $0x40] sm:$0xf]
      %v474 = vld [vmem:[%s382 + $0x44] sm:$0xf]
      %v475 = vld [vmem:[%s382 + $0x48] sm:$0xf]
      %v476 = vld [vmem:[%s382 + $0x4c] sm:$0xf]
      %v477 = vld [vmem:[%s382 + $0x50] sm:$0xf]
      %v478 = vld [vmem:[%s382 + $0x54] sm:$0xf]
      %v479 = vld [vmem:[%s382 + $0x58] sm:$0xf]
      %v480 = vld [vmem:[%s382 + $0x5c] sm:$0xf]
      %v481 = vld [vmem:[%s382 + $0x60] sm:$0xf]
      %v482 = vld [vmem:[%s382 + $0x64] sm:$0xf]
      %v483 = vld [vmem:[%s382 + $0x68] sm:$0xf]
      %v484 = vld [vmem:[%s382 + $0x6c] sm:$0xf]
      %v485 = vld [vmem:[%s382 + $0x70] sm:$0xf]
      %v486 = vld [vmem:[%s382 + $0x74] sm:$0xf]
      %v487 = vld [vmem:[%s382 + $0x78] sm:$0xf]
      %v488 = vld [vmem:[%s382 + $0x7c] sm:$0xf]
      %v489 = vld [vmem:[%s382 + $0x80] sm:$0xf]
      %v490 = vld [vmem:[%s382 + $0x84] sm:$0xf]
      %v491 = vld [vmem:[%s382 + $0x88] sm:$0xf]
      %v492 = vld [vmem:[%s382 + $0x8c] sm:$0xf]
      %v493 = vld [vmem:[%s382 + $0x90] sm:$0xf]
      %v494 = vld [vmem:[%s382 + $0x94] sm:$0xf]
      %v495 = vld [vmem:[%s382 + $0x98] sm:$0xf]
      %v496 = vld [vmem:[%s382 + $0x9c] sm:$0xf]
      %v497 = vld [vmem:[%s382 + $0xa0] sm:$0xf]
      %v498 = vld [vmem:[%s382 + $0xa4] sm:$0xf]
      %v499 = vld [vmem:[%s382 + $0xa8] sm:$0xf]
      %v500 = vld [vmem:[%s382 + $0xac] sm:$0xf]
      %v501 = vld [vmem:[%s382 + $0xb0] sm:$0xf]
      %v502 = vld [vmem:[%s382 + $0xb4] sm:$0xf]
      %v503 = vld [vmem:[%s382 + $0xb8] sm:$0xf]
      %v504 = vld [vmem:[%s382 + $0xbc] sm:$0xf]
      %v505 = vld [vmem:[%s382 + $0xc0] sm:$0xf]
      %v506 = vadd.f32 %v408, %v457
      %v507 = vadd.f32 %v409, %v458
      %v508 = vadd.f32 %v410, %v459
      %v509 = vadd.f32 %v411, %v460
      %v510 = vadd.f32 %v412, %v461
      %v511 = vadd.f32 %v413, %v462
      %v512 = vadd.f32 %v414, %v463
      %v513 = vadd.f32 %v415, %v464
      %v514 = vadd.f32 %v416, %v465
      %v515 = vadd.f32 %v417, %v466
      %v516 = vadd.f32 %v418, %v467
      %v517 = vadd.f32 %v419, %v468
      %v518 = vadd.f32 %v420, %v469
      %v519 = vadd.f32 %v421, %v470
      %v520 = vadd.f32 %v422, %v471
      %v521 = vadd.f32 %v423, %v472
      %v522 = vadd.f32 %v424, %v473
      %v523 = vadd.f32 %v425, %v474
      %v524 = vadd.f32 %v426, %v475
      %v525 = vadd.f32 %v427, %v476
      %v526 = vadd.f32 %v428, %v477
      %v527 = vadd.f32 %v429, %v478
      %v528 = vadd.f32 %v430, %v479
      %v529 = vadd.f32 %v431, %v480
      %v530 = vadd.f32 %v432, %v481
      %v531 = vadd.f32 %v433, %v482
      %v532 = vadd.f32 %v434, %v483
      %v533 = vadd.f32 %v435, %v484
      %v534 = vadd.f32 %v436, %v485
      %v535 = vadd.f32 %v437, %v486
      %v536 = vadd.f32 %v438, %v487
      %v537 = vadd.f32 %v439, %v488
      %v538 = vadd.f32 %v440, %v489
      %v539 = vadd.f32 %v441, %v490
      %v540 = vadd.f32 %v442, %v491
      %v541 = vadd.f32 %v443, %v492
      %v542 = vadd.f32 %v444, %v493
      %v543 = vadd.f32 %v445, %v494
      %v544 = vadd.f32 %v446, %v495
      %v545 = vadd.f32 %v447, %v496
      %v546 = vadd.f32 %v448, %v497
      %v547 = vadd.f32 %v449, %v498
      %v548 = vadd.f32 %v450, %v499
      %v549 = vadd.f32 %v451, %v500
      %v550 = vadd.f32 %v452, %v501
      %v551 = vadd.f32 %v453, %v502
      %v552 = vadd.f32 %v454, %v503
      %v553 = vadd.f32 %v455, %v504
      %v554 = vadd.f32 %v456, %v505
      %v555 = vmul.f32 %v506, %v407
      %v556 = vmul.f32 %v507, %v407
      %v557 = vmul.f32 %v508, %v407
      %v558 = vmul.f32 %v509, %v407
      %v559 = vmul.f32 %v510, %v407
      %v560 = vmul.f32 %v511, %v407
      %v561 = vmul.f32 %v512, %v407
      %v562 = vmul.f32 %v513, %v407
      %v563 = vmul.f32 %v514, %v407
      %v564 = vmul.f32 %v515, %v407
      %v565 = vmul.f32 %v516, %v407
      %v566 = vmul.f32 %v517, %v407
      %v567 = vmul.f32 %v518, %v407
      %v568 = vmul.f32 %v519, %v407
      %v569 = vmul.f32 %v520, %v407
      %v570 = vmul.f32 %v521, %v407
      %v571 = vmul.f32 %v522, %v407
      %v572 = vmul.f32 %v523, %v407
      %v573 = vmul.f32 %v524, %v407
      %v574 = vmul.f32 %v525, %v407
      %v575 = vmul.f32 %v526, %v407
      %v576 = vmul.f32 %v527, %v407
      %v577 = vmul.f32 %v528, %v407
      %v578 = vmul.f32 %v529, %v407
      %v579 = vmul.f32 %v530, %v407
      %v580 = vmul.f32 %v531, %v407
      %v581 = vmul.f32 %v532, %v407
      %v582 = vmul.f32 %v533, %v407
      %v583 = vmul.f32 %v534, %v407
      %v584 = vmul.f32 %v535, %v407
      %v585 = vmul.f32 %v536, %v407
      %v586 = vmul.f32 %v537, %v407
      %v587 = vmul.f32 %v538, %v407
      %v588 = vmul.f32 %v539, %v407
      %v589 = vmul.f32 %v540, %v407
      %v590 = vmul.f32 %v541, %v407
      %v591 = vmul.f32 %v542, %v407
      %v592 = vmul.f32 %v543, %v407
      %v593 = vmul.f32 %v544, %v407
      %v594 = vmul.f32 %v545, %v407
      %v595 = vmul.f32 %v546, %v407
      %v596 = vmul.f32 %v547, %v407
      %v597 = vmul.f32 %v548, %v407
      %v598 = vmul.f32 %v549, %v407
      %v599 = vmul.f32 %v550, %v407
      %v600 = vmul.f32 %v551, %v407
      %v601 = vmul.f32 %v552, %v407
      %v602 = vmul.f32 %v553, %v407
      %v603 = vmul.f32 %v554, %v407
      %v654 = vunpack.c.l.s4 1983009808
      %v655 = vunpack.c.0.s8 %v654
      %v656 = vlaneseq
      %v657 = vshrl.u32 %v656, 7
      %v658 = vsub.s32 %v655, %v657
      %v659 = vrot.slane %v555, %v658
      %v660 = vcombine.high %v659, %v659
      %v662 = vunpack.c.l.s4 1983009808
      %v663 = vunpack.c.0.s8 %v662
      %v664 = vlaneseq
      %v665 = vshrl.u32 %v664, 7
      %v666 = vsub.s32 %v663, %v665
      %v667 = vrot.slane %v556, %v666
      %v668 = vcombine.high %v667, %v667
      %v670 = vunpack.c.l.s4 1983009808
      %v671 = vunpack.c.0.s8 %v670
      %v672 = vlaneseq
      %v673 = vshrl.u32 %v672, 7
      %v674 = vsub.s32 %v671, %v673
      %v675 = vrot.slane %v557, %v674
      %v676 = vcombine.high %v675, %v675
      %v678 = vunpack.c.l.s4 1983009808
      %v679 = vunpack.c.0.s8 %v678
      %v680 = vlaneseq
      %v681 = vshrl.u32 %v680, 7
      %v682 = vsub.s32 %v679, %v681
      %v683 = vrot.slane %v558, %v682
      %v684 = vcombine.high %v683, %v683
      %v686 = vunpack.c.l.s4 1983009808
      %v687 = vunpack.c.0.s8 %v686
      %v688 = vlaneseq
      %v689 = vshrl.u32 %v688, 7
      %v690 = vsub.s32 %v687, %v689
      %v691 = vrot.slane %v559, %v690
      %v692 = vcombine.high %v691, %v691
      %v694 = vunpack.c.l.s4 1983009808
      %v695 = vunpack.c.0.s8 %v694
      %v696 = vlaneseq
      %v697 = vshrl.u32 %v696, 7
      %v698 = vsub.s32 %v695, %v697
      %v699 = vrot.slane %v560, %v698
      %v700 = vcombine.high %v699, %v699
      %v702 = vunpack.c.l.s4 1983009808
      %v703 = vunpack.c.0.s8 %v702
      %v704 = vlaneseq
      %v705 = vshrl.u32 %v704, 7
      %v706 = vsub.s32 %v703, %v705
      %v707 = vrot.slane %v561, %v706
      %v708 = vcombine.high %v707, %v707
      %v710 = vunpack.c.l.s4 1983009808
      %v711 = vunpack.c.0.s8 %v710
      %v712 = vlaneseq
      %v713 = vshrl.u32 %v712, 7
      %v714 = vsub.s32 %v711, %v713
      %v715 = vrot.slane %v562, %v714
      %v716 = vcombine.high %v715, %v715
      %v718 = vunpack.c.l.s4 1983009808
      %v719 = vunpack.c.0.s8 %v718
      %v720 = vlaneseq
      %v721 = vshrl.u32 %v720, 7
      %v722 = vsub.s32 %v719, %v721
      %v723 = vrot.slane %v563, %v722
      %v724 = vcombine.high %v723, %v723
      %v726 = vunpack.c.l.s4 1983009808
      %v727 = vunpack.c.0.s8 %v726
      %v728 = vlaneseq
      %v729 = vshrl.u32 %v728, 7
      %v730 = vsub.s32 %v727, %v729
      %v731 = vrot.slane %v564, %v730
      %v732 = vcombine.high %v731, %v731
      %v734 = vunpack.c.l.s4 1983009808
      %v735 = vunpack.c.0.s8 %v734
      %v736 = vlaneseq
      %v737 = vshrl.u32 %v736, 7
      %v738 = vsub.s32 %v735, %v737
      %v739 = vrot.slane %v565, %v738
      %v740 = vcombine.high %v739, %v739
      %v742 = vunpack.c.l.s4 1983009808
      %v743 = vunpack.c.0.s8 %v742
      %v744 = vlaneseq
      %v745 = vshrl.u32 %v744, 7
      %v746 = vsub.s32 %v743, %v745
      %v747 = vrot.slane %v566, %v746
      %v748 = vcombine.high %v747, %v747
      %v750 = vunpack.c.l.s4 1983009808
      %v751 = vunpack.c.0.s8 %v750
      %v752 = vlaneseq
      %v753 = vshrl.u32 %v752, 7
      %v754 = vsub.s32 %v751, %v753
      %v755 = vrot.slane %v567, %v754
      %v756 = vcombine.high %v755, %v755
      %v758 = vunpack.c.l.s4 1983009808
      %v759 = vunpack.c.0.s8 %v758
      %v760 = vlaneseq
      %v761 = vshrl.u32 %v760, 7
      %v762 = vsub.s32 %v759, %v761
      %v763 = vrot.slane %v568, %v762
      %v764 = vcombine.high %v763, %v763
      %v766 = vunpack.c.l.s4 1983009808
      %v767 = vunpack.c.0.s8 %v766
      %v768 = vlaneseq
      %v769 = vshrl.u32 %v768, 7
      %v770 = vsub.s32 %v767, %v769
      %v771 = vrot.slane %v569, %v770
      %v772 = vcombine.high %v771, %v771
      %v774 = vunpack.c.l.s4 1983009808
      %v775 = vunpack.c.0.s8 %v774
      %v776 = vlaneseq
      %v777 = vshrl.u32 %v776, 7
      %v778 = vsub.s32 %v775, %v777
      %v779 = vrot.slane %v570, %v778
      %v780 = vcombine.high %v779, %v779
      %v782 = vunpack.c.l.s4 1983009808
      %v783 = vunpack.c.0.s8 %v782
      %v784 = vlaneseq
      %v785 = vshrl.u32 %v784, 7
      %v786 = vsub.s32 %v783, %v785
      %v787 = vrot.slane %v571, %v786
      %v788 = vcombine.high %v787, %v787
      %v790 = vunpack.c.l.s4 1983009808
      %v791 = vunpack.c.0.s8 %v790
      %v792 = vlaneseq
      %v793 = vshrl.u32 %v792, 7
      %v794 = vsub.s32 %v791, %v793
      %v795 = vrot.slane %v572, %v794
      %v796 = vcombine.high %v795, %v795
      %v798 = vunpack.c.l.s4 1983009808
      %v799 = vunpack.c.0.s8 %v798
      %v800 = vlaneseq
      %v801 = vshrl.u32 %v800, 7
      %v802 = vsub.s32 %v799, %v801
      %v803 = vrot.slane %v573, %v802
      %v804 = vcombine.high %v803, %v803
      %v806 = vunpack.c.l.s4 1983009808
      %v807 = vunpack.c.0.s8 %v806
      %v808 = vlaneseq
      %v809 = vshrl.u32 %v808, 7
      %v810 = vsub.s32 %v807, %v809
      %v811 = vrot.slane %v574, %v810
      %v812 = vcombine.high %v811, %v811
      %v814 = vunpack.c.l.s4 1983009808
      %v815 = vunpack.c.0.s8 %v814
      %v816 = vlaneseq
      %v817 = vshrl.u32 %v816, 7
      %v818 = vsub.s32 %v815, %v817
      %v819 = vrot.slane %v575, %v818
      %v820 = vcombine.high %v819, %v819
      %v822 = vunpack.c.l.s4 1983009808
      %v823 = vunpack.c.0.s8 %v822
      %v824 = vlaneseq
      %v825 = vshrl.u32 %v824, 7
      %v826 = vsub.s32 %v823, %v825
      %v827 = vrot.slane %v576, %v826
      %v828 = vcombine.high %v827, %v827
      %v830 = vunpack.c.l.s4 1983009808
      %v831 = vunpack.c.0.s8 %v830
      %v832 = vlaneseq
      %v833 = vshrl.u32 %v832, 7
      %v834 = vsub.s32 %v831, %v833
      %v835 = vrot.slane %v577, %v834
      %v836 = vcombine.high %v835, %v835
      %v838 = vunpack.c.l.s4 1983009808
      %v839 = vunpack.c.0.s8 %v838
      %v840 = vlaneseq
      %v841 = vshrl.u32 %v840, 7
      %v842 = vsub.s32 %v839, %v841
      %v843 = vrot.slane %v578, %v842
      %v844 = vcombine.high %v843, %v843
      %v846 = vunpack.c.l.s4 1983009808
      %v847 = vunpack.c.0.s8 %v846
      %v848 = vlaneseq
      %v849 = vshrl.u32 %v848, 7
      %v850 = vsub.s32 %v847, %v849
      %v851 = vrot.slane %v579, %v850
      %v852 = vcombine.high %v851, %v851
      %v854 = vunpack.c.l.s4 1983009808
      %v855 = vunpack.c.0.s8 %v854
      %v856 = vlaneseq
      %v857 = vshrl.u32 %v856, 7
      %v858 = vsub.s32 %v855, %v857
      %v859 = vrot.slane %v580, %v858
      %v860 = vcombine.high %v859, %v859
      %v862 = vunpack.c.l.s4 1983009808
      %v863 = vunpack.c.0.s8 %v862
      %v864 = vlaneseq
      %v865 = vshrl.u32 %v864, 7
      %v866 = vsub.s32 %v863, %v865
      %v867 = vrot.slane %v581, %v866
      %v868 = vcombine.high %v867, %v867
      %v870 = vunpack.c.l.s4 1983009808
      %v871 = vunpack.c.0.s8 %v870
      %v872 = vlaneseq
      %v873 = vshrl.u32 %v872, 7
      %v874 = vsub.s32 %v871, %v873
      %v875 = vrot.slane %v582, %v874
      %v876 = vcombine.high %v875, %v875
      %v878 = vunpack.c.l.s4 1983009808
      %v879 = vunpack.c.0.s8 %v878
      %v880 = vlaneseq
      %v881 = vshrl.u32 %v880, 7
      %v882 = vsub.s32 %v879, %v881
      %v883 = vrot.slane %v583, %v882
      %v884 = vcombine.high %v883, %v883
      %v886 = vunpack.c.l.s4 1983009808
      %v887 = vunpack.c.0.s8 %v886
      %v888 = vlaneseq
      %v889 = vshrl.u32 %v888, 7
      %v890 = vsub.s32 %v887, %v889
      %v891 = vrot.slane %v584, %v890
      %v892 = vcombine.high %v891, %v891
      %v894 = vunpack.c.l.s4 1983009808
      %v895 = vunpack.c.0.s8 %v894
      %v896 = vlaneseq
      %v897 = vshrl.u32 %v896, 7
      %v898 = vsub.s32 %v895, %v897
      %v899 = vrot.slane %v585, %v898
      %v900 = vcombine.high %v899, %v899
      %v902 = vunpack.c.l.s4 1983009808
      %v903 = vunpack.c.0.s8 %v902
      %v904 = vlaneseq
      %v905 = vshrl.u32 %v904, 7
      %v906 = vsub.s32 %v903, %v905
      %v907 = vrot.slane %v586, %v906
      %v908 = vcombine.high %v907, %v907
      %v910 = vunpack.c.l.s4 1983009808
      %v911 = vunpack.c.0.s8 %v910
      %v912 = vlaneseq
      %v913 = vshrl.u32 %v912, 7
      %v914 = vsub.s32 %v911, %v913
      %v915 = vrot.slane %v587, %v914
      %v916 = vcombine.high %v915, %v915
      %v918 = vunpack.c.l.s4 1983009808
      %v919 = vunpack.c.0.s8 %v918
      %v920 = vlaneseq
      %v921 = vshrl.u32 %v920, 7
      %v922 = vsub.s32 %v919, %v921
      %v923 = vrot.slane %v588, %v922
      %v924 = vcombine.high %v923, %v923
      %v926 = vunpack.c.l.s4 1983009808
      %v927 = vunpack.c.0.s8 %v926
      %v928 = vlaneseq
      %v929 = vshrl.u32 %v928, 7
      %v930 = vsub.s32 %v927, %v929
      %v931 = vrot.slane %v589, %v930
      %v932 = vcombine.high %v931, %v931
      %v934 = vunpack.c.l.s4 1983009808
      %v935 = vunpack.c.0.s8 %v934
      %v936 = vlaneseq
      %v937 = vshrl.u32 %v936, 7
      %v938 = vsub.s32 %v935, %v937
      %v939 = vrot.slane %v590, %v938
      %v940 = vcombine.high %v939, %v939
      %v942 = vunpack.c.l.s4 1983009808
      %v943 = vunpack.c.0.s8 %v942
      %v944 = vlaneseq
      %v945 = vshrl.u32 %v944, 7
      %v946 = vsub.s32 %v943, %v945
      %v947 = vrot.slane %v591, %v946
      %v948 = vcombine.high %v947, %v947
      %v950 = vunpack.c.l.s4 1983009808
      %v951 = vunpack.c.0.s8 %v950
      %v952 = vlaneseq
      %v953 = vshrl.u32 %v952, 7
      %v954 = vsub.s32 %v951, %v953
      %v955 = vrot.slane %v592, %v954
      %v956 = vcombine.high %v955, %v955
      %v958 = vunpack.c.l.s4 1983009808
      %v959 = vunpack.c.0.s8 %v958
      %v960 = vlaneseq
      %v961 = vshrl.u32 %v960, 7
      %v962 = vsub.s32 %v959, %v961
      %v963 = vrot.slane %v593, %v962
      %v964 = vcombine.high %v963, %v963
      %v966 = vunpack.c.l.s4 1983009808
      %v967 = vunpack.c.0.s8 %v966
      %v968 = vlaneseq
      %v969 = vshrl.u32 %v968, 7
      %v970 = vsub.s32 %v967, %v969
      %v971 = vrot.slane %v594, %v970
      %v972 = vcombine.high %v971, %v971
      %v974 = vunpack.c.l.s4 1983009808
      %v975 = vunpack.c.0.s8 %v974
      %v976 = vlaneseq
      %v977 = vshrl.u32 %v976, 7
      %v978 = vsub.s32 %v975, %v977
      %v979 = vrot.slane %v595, %v978
      %v980 = vcombine.high %v979, %v979
      %v982 = vunpack.c.l.s4 1983009808
      %v983 = vunpack.c.0.s8 %v982
      %v984 = vlaneseq
      %v985 = vshrl.u32 %v984, 7
      %v986 = vsub.s32 %v983, %v985
      %v987 = vrot.slane %v596, %v986
      %v988 = vcombine.high %v987, %v987
      %v990 = vunpack.c.l.s4 1983009808
      %v991 = vunpack.c.0.s8 %v990
      %v992 = vlaneseq
      %v993 = vshrl.u32 %v992, 7
      %v994 = vsub.s32 %v991, %v993
      %v995 = vrot.slane %v597, %v994
      %v996 = vcombine.high %v995, %v995
      %v998 = vunpack.c.l.s4 1983009808
      %v999 = vunpack.c.0.s8 %v998
      %v1000 = vlaneseq
      %v1001 = vshrl.u32 %v1000, 7
      %v1002 = vsub.s32 %v999, %v1001
      %v1003 = vrot.slane %v598, %v1002
      %v1004 = vcombine.high %v1003, %v1003
      %v1006 = vunpack.c.l.s4 1983009808
      %v1007 = vunpack.c.0.s8 %v1006
      %v1008 = vlaneseq
      %v1009 = vshrl.u32 %v1008, 7
      %v1010 = vsub.s32 %v1007, %v1009
      %v1011 = vrot.slane %v599, %v1010
      %v1012 = vcombine.high %v1011, %v1011
      %v1014 = vunpack.c.l.s4 1983009808
      %v1015 = vunpack.c.0.s8 %v1014
      %v1016 = vlaneseq
      %v1017 = vshrl.u32 %v1016, 7
      %v1018 = vsub.s32 %v1015, %v1017
      %v1019 = vrot.slane %v600, %v1018
      %v1020 = vcombine.high %v1019, %v1019
      %v1022 = vunpack.c.l.s4 1983009808
      %v1023 = vunpack.c.0.s8 %v1022
      %v1024 = vlaneseq
      %v1025 = vshrl.u32 %v1024, 7
      %v1026 = vsub.s32 %v1023, %v1025
      %v1027 = vrot.slane %v601, %v1026
      %v1028 = vcombine.high %v1027, %v1027
      %v1030 = vunpack.c.l.s4 1983009808
      %v1031 = vunpack.c.0.s8 %v1030
      %v1032 = vlaneseq
      %v1033 = vshrl.u32 %v1032, 7
      %v1034 = vsub.s32 %v1031, %v1033
      %v1035 = vrot.slane %v602, %v1034
      %v1036 = vcombine.high %v1035, %v1035
      %v1038 = vunpack.c.l.s4 1983009808
      %v1039 = vunpack.c.0.s8 %v1038
      %v1040 = vlaneseq
      %v1041 = vshrl.u32 %v1040, 7
      %v1042 = vsub.s32 %v1039, %v1041
      %v1043 = vrot.slane %v603, %v1042
      %v1044 = vcombine.high %v1043, %v1043
      %vm1143 = vcmask 1041408
      %v1144 = vsel %vm1143, %v659, 0.0
      %v1145 = vrot.slane %v1144, 4
      %v1146 = vadd.f32 %v1144, %v1145
      %v1147 = vrot.slane %v1146, 2
      %v1148 = vadd.f32 %v1146, %v1147
      %v1149 = vrot.slane %v1148, 1
      %v1150 = vadd.f32 %v1148, %v1149
      %v1151 = vsel %vm1143, %v660, 0.0
      %v1152 = vrot.slane %v1151, 4
      %v1153 = vadd.f32 %v1151, %v1152
      %v1154 = vrot.slane %v1153, 2
      %v1155 = vadd.f32 %v1153, %v1154
      %v1156 = vrot.slane %v1155, 1
      %v1157 = vadd.f32 %v1155, %v1156
      %v1158 = vsel %vm1143, %v667, 0.0
      %v1159 = vrot.slane %v1158, 4
      %v1160 = vadd.f32 %v1158, %v1159
      %v1161 = vrot.slane %v1160, 2
      %v1162 = vadd.f32 %v1160, %v1161
      %v1163 = vrot.slane %v1162, 1
      %v1164 = vadd.f32 %v1162, %v1163
      %v1165 = vsel %vm1143, %v668, 0.0
      %v1166 = vrot.slane %v1165, 4
      %v1167 = vadd.f32 %v1165, %v1166
      %v1168 = vrot.slane %v1167, 2
      %v1169 = vadd.f32 %v1167, %v1168
      %v1170 = vrot.slane %v1169, 1
      %v1171 = vadd.f32 %v1169, %v1170
      %v1172 = vsel %vm1143, %v675, 0.0
      %v1173 = vrot.slane %v1172, 4
      %v1174 = vadd.f32 %v1172, %v1173
      %v1175 = vrot.slane %v1174, 2
      %v1176 = vadd.f32 %v1174, %v1175
      %v1177 = vrot.slane %v1176, 1
      %v1178 = vadd.f32 %v1176, %v1177
      %v1179 = vsel %vm1143, %v676, 0.0
      %v1180 = vrot.slane %v1179, 4
      %v1181 = vadd.f32 %v1179, %v1180
      %v1182 = vrot.slane %v1181, 2
      %v1183 = vadd.f32 %v1181, %v1182
      %v1184 = vrot.slane %v1183, 1
      %v1185 = vadd.f32 %v1183, %v1184
      %v1186 = vsel %vm1143, %v683, 0.0
      %v1187 = vrot.slane %v1186, 4
      %v1188 = vadd.f32 %v1186, %v1187
      %v1189 = vrot.slane %v1188, 2
      %v1190 = vadd.f32 %v1188, %v1189
      %v1191 = vrot.slane %v1190, 1
      %v1192 = vadd.f32 %v1190, %v1191
      %v1193 = vsel %vm1143, %v684, 0.0
      %v1194 = vrot.slane %v1193, 4
      %v1195 = vadd.f32 %v1193, %v1194
      %v1196 = vrot.slane %v1195, 2
      %v1197 = vadd.f32 %v1195, %v1196
      %v1198 = vrot.slane %v1197, 1
      %v1199 = vadd.f32 %v1197, %v1198
      %v1200 = vsel %vm1143, %v691, 0.0
      %v1201 = vrot.slane %v1200, 4
      %v1202 = vadd.f32 %v1200, %v1201
      %v1203 = vrot.slane %v1202, 2
      %v1204 = vadd.f32 %v1202, %v1203
      %v1205 = vrot.slane %v1204, 1
      %v1206 = vadd.f32 %v1204, %v1205
      %v1207 = vsel %vm1143, %v692, 0.0
      %v1208 = vrot.slane %v1207, 4
      %v1209 = vadd.f32 %v1207, %v1208
      %v1210 = vrot.slane %v1209, 2
      %v1211 = vadd.f32 %v1209, %v1210
      %v1212 = vrot.slane %v1211, 1
      %v1213 = vadd.f32 %v1211, %v1212
      %v1214 = vsel %vm1143, %v699, 0.0
      %v1215 = vrot.slane %v1214, 4
      %v1216 = vadd.f32 %v1214, %v1215
      %v1217 = vrot.slane %v1216, 2
      %v1218 = vadd.f32 %v1216, %v1217
      %v1219 = vrot.slane %v1218, 1
      %v1220 = vadd.f32 %v1218, %v1219
      %v1221 = vsel %vm1143, %v700, 0.0
      %v1222 = vrot.slane %v1221, 4
      %v1223 = vadd.f32 %v1221, %v1222
      %v1224 = vrot.slane %v1223, 2
      %v1225 = vadd.f32 %v1223, %v1224
      %v1226 = vrot.slane %v1225, 1
      %v1227 = vadd.f32 %v1225, %v1226
      %v1228 = vsel %vm1143, %v707, 0.0
      %v1229 = vrot.slane %v1228, 4
      %v1230 = vadd.f32 %v1228, %v1229
      %v1231 = vrot.slane %v1230, 2
      %v1232 = vadd.f32 %v1230, %v1231
      %v1233 = vrot.slane %v1232, 1
      %v1234 = vadd.f32 %v1232, %v1233
      %v1235 = vsel %vm1143, %v708, 0.0
      %v1236 = vrot.slane %v1235, 4
      %v1237 = vadd.f32 %v1235, %v1236
      %v1238 = vrot.slane %v1237, 2
      %v1239 = vadd.f32 %v1237, %v1238
      %v1240 = vrot.slane %v1239, 1
      %v1241 = vadd.f32 %v1239, %v1240
      %v1242 = vsel %vm1143, %v715, 0.0
      %v1243 = vrot.slane %v1242, 4
      %v1244 = vadd.f32 %v1242, %v1243
      %v1245 = vrot.slane %v1244, 2
      %v1246 = vadd.f32 %v1244, %v1245
      %v1247 = vrot.slane %v1246, 1
      %v1248 = vadd.f32 %v1246, %v1247
      %v1249 = vsel %vm1143, %v716, 0.0
      %v1250 = vrot.slane %v1249, 4
      %v1251 = vadd.f32 %v1249, %v1250
      %v1252 = vrot.slane %v1251, 2
      %v1253 = vadd.f32 %v1251, %v1252
      %v1254 = vrot.slane %v1253, 1
      %v1255 = vadd.f32 %v1253, %v1254
      %v1256 = vsel %vm1143, %v723, 0.0
      %v1257 = vrot.slane %v1256, 4
      %v1258 = vadd.f32 %v1256, %v1257
      %v1259 = vrot.slane %v1258, 2
      %v1260 = vadd.f32 %v1258, %v1259
      %v1261 = vrot.slane %v1260, 1
      %v1262 = vadd.f32 %v1260, %v1261
      %v1263 = vsel %vm1143, %v724, 0.0
      %v1264 = vrot.slane %v1263, 4
      %v1265 = vadd.f32 %v1263, %v1264
      %v1266 = vrot.slane %v1265, 2
      %v1267 = vadd.f32 %v1265, %v1266
      %v1268 = vrot.slane %v1267, 1
      %v1269 = vadd.f32 %v1267, %v1268
      %v1270 = vsel %vm1143, %v731, 0.0
      %v1271 = vrot.slane %v1270, 4
      %v1272 = vadd.f32 %v1270, %v1271
      %v1273 = vrot.slane %v1272, 2
      %v1274 = vadd.f32 %v1272, %v1273
      %v1275 = vrot.slane %v1274, 1
      %v1276 = vadd.f32 %v1274, %v1275
      %v1277 = vsel %vm1143, %v732, 0.0
      %v1278 = vrot.slane %v1277, 4
      %v1279 = vadd.f32 %v1277, %v1278
      %v1280 = vrot.slane %v1279, 2
      %v1281 = vadd.f32 %v1279, %v1280
      %v1282 = vrot.slane %v1281, 1
      %v1283 = vadd.f32 %v1281, %v1282
      %v1284 = vsel %vm1143, %v739, 0.0
      %v1285 = vrot.slane %v1284, 4
      %v1286 = vadd.f32 %v1284, %v1285
      %v1287 = vrot.slane %v1286, 2
      %v1288 = vadd.f32 %v1286, %v1287
      %v1289 = vrot.slane %v1288, 1
      %v1290 = vadd.f32 %v1288, %v1289
      %v1291 = vsel %vm1143, %v740, 0.0
      %v1292 = vrot.slane %v1291, 4
      %v1293 = vadd.f32 %v1291, %v1292
      %v1294 = vrot.slane %v1293, 2
      %v1295 = vadd.f32 %v1293, %v1294
      %v1296 = vrot.slane %v1295, 1
      %v1297 = vadd.f32 %v1295, %v1296
      %v1298 = vsel %vm1143, %v747, 0.0
      %v1299 = vrot.slane %v1298, 4
      %v1300 = vadd.f32 %v1298, %v1299
      %v1301 = vrot.slane %v1300, 2
      %v1302 = vadd.f32 %v1300, %v1301
      %v1303 = vrot.slane %v1302, 1
      %v1304 = vadd.f32 %v1302, %v1303
      %v1305 = vsel %vm1143, %v748, 0.0
      %v1306 = vrot.slane %v1305, 4
      %v1307 = vadd.f32 %v1305, %v1306
      %v1308 = vrot.slane %v1307, 2
      %v1309 = vadd.f32 %v1307, %v1308
      %v1310 = vrot.slane %v1309, 1
      %v1311 = vadd.f32 %v1309, %v1310
      %v1312 = vsel %vm1143, %v755, 0.0
      %v1313 = vrot.slane %v1312, 4
      %v1314 = vadd.f32 %v1312, %v1313
      %v1315 = vrot.slane %v1314, 2
      %v1316 = vadd.f32 %v1314, %v1315
      %v1317 = vrot.slane %v1316, 1
      %v1318 = vadd.f32 %v1316, %v1317
      %v1319 = vsel %vm1143, %v756, 0.0
      %v1320 = vrot.slane %v1319, 4
      %v1321 = vadd.f32 %v1319, %v1320
      %v1322 = vrot.slane %v1321, 2
      %v1323 = vadd.f32 %v1321, %v1322
      %v1324 = vrot.slane %v1323, 1
      %v1325 = vadd.f32 %v1323, %v1324
      %v1326 = vsel %vm1143, %v763, 0.0
      %v1327 = vrot.slane %v1326, 4
      %v1328 = vadd.f32 %v1326, %v1327
      %v1329 = vrot.slane %v1328, 2
      %v1330 = vadd.f32 %v1328, %v1329
      %v1331 = vrot.slane %v1330, 1
      %v1332 = vadd.f32 %v1330, %v1331
      %v1333 = vsel %vm1143, %v764, 0.0
      %v1334 = vrot.slane %v1333, 4
      %v1335 = vadd.f32 %v1333, %v1334
      %v1336 = vrot.slane %v1335, 2
      %v1337 = vadd.f32 %v1335, %v1336
      %v1338 = vrot.slane %v1337, 1
      %v1339 = vadd.f32 %v1337, %v1338
      %v1340 = vsel %vm1143, %v771, 0.0
      %v1341 = vrot.slane %v1340, 4
      %v1342 = vadd.f32 %v1340, %v1341
      %v1343 = vrot.slane %v1342, 2
      %v1344 = vadd.f32 %v1342, %v1343
      %v1345 = vrot.slane %v1344, 1
      %v1346 = vadd.f32 %v1344, %v1345
      %v1347 = vsel %vm1143, %v772, 0.0
      %v1348 = vrot.slane %v1347, 4
      %v1349 = vadd.f32 %v1347, %v1348
      %v1350 = vrot.slane %v1349, 2
      %v1351 = vadd.f32 %v1349, %v1350
      %v1352 = vrot.slane %v1351, 1
      %v1353 = vadd.f32 %v1351, %v1352
      %v1354 = vsel %vm1143, %v779, 0.0
      %v1355 = vrot.slane %v1354, 4
      %v1356 = vadd.f32 %v1354, %v1355
      %v1357 = vrot.slane %v1356, 2
      %v1358 = vadd.f32 %v1356, %v1357
      %v1359 = vrot.slane %v1358, 1
      %v1360 = vadd.f32 %v1358, %v1359
      %v1361 = vsel %vm1143, %v780, 0.0
      %v1362 = vrot.slane %v1361, 4
      %v1363 = vadd.f32 %v1361, %v1362
      %v1364 = vrot.slane %v1363, 2
      %v1365 = vadd.f32 %v1363, %v1364
      %v1366 = vrot.slane %v1365, 1
      %v1367 = vadd.f32 %v1365, %v1366
      %v1368 = vsel %vm1143, %v787, 0.0
      %v1369 = vrot.slane %v1368, 4
      %v1370 = vadd.f32 %v1368, %v1369
      %v1371 = vrot.slane %v1370, 2
      %v1372 = vadd.f32 %v1370, %v1371
      %v1373 = vrot.slane %v1372, 1
      %v1374 = vadd.f32 %v1372, %v1373
      %v1375 = vsel %vm1143, %v788, 0.0
      %v1376 = vrot.slane %v1375, 4
      %v1377 = vadd.f32 %v1375, %v1376
      %v1378 = vrot.slane %v1377, 2
      %v1379 = vadd.f32 %v1377, %v1378
      %v1380 = vrot.slane %v1379, 1
      %v1381 = vadd.f32 %v1379, %v1380
      %v1382 = vsel %vm1143, %v795, 0.0
      %v1383 = vrot.slane %v1382, 4
      %v1384 = vadd.f32 %v1382, %v1383
      %v1385 = vrot.slane %v1384, 2
      %v1386 = vadd.f32 %v1384, %v1385
      %v1387 = vrot.slane %v1386, 1
      %v1388 = vadd.f32 %v1386, %v1387
      %v1389 = vsel %vm1143, %v796, 0.0
      %v1390 = vrot.slane %v1389, 4
      %v1391 = vadd.f32 %v1389, %v1390
      %v1392 = vrot.slane %v1391, 2
      %v1393 = vadd.f32 %v1391, %v1392
      %v1394 = vrot.slane %v1393, 1
      %v1395 = vadd.f32 %v1393, %v1394
      %v1396 = vsel %vm1143, %v803, 0.0
      %v1397 = vrot.slane %v1396, 4
      %v1398 = vadd.f32 %v1396, %v1397
      %v1399 = vrot.slane %v1398, 2
      %v1400 = vadd.f32 %v1398, %v1399
      %v1401 = vrot.slane %v1400, 1
      %v1402 = vadd.f32 %v1400, %v1401
      %v1403 = vsel %vm1143, %v804, 0.0
      %v1404 = vrot.slane %v1403, 4
      %v1405 = vadd.f32 %v1403, %v1404
      %v1406 = vrot.slane %v1405, 2
      %v1407 = vadd.f32 %v1405, %v1406
      %v1408 = vrot.slane %v1407, 1
      %v1409 = vadd.f32 %v1407, %v1408
      %v1410 = vsel %vm1143, %v811, 0.0
      %v1411 = vrot.slane %v1410, 4
      %v1412 = vadd.f32 %v1410, %v1411
      %v1413 = vrot.slane %v1412, 2
      %v1414 = vadd.f32 %v1412, %v1413
      %v1415 = vrot.slane %v1414, 1
      %v1416 = vadd.f32 %v1414, %v1415
      %v1417 = vsel %vm1143, %v812, 0.0
      %v1418 = vrot.slane %v1417, 4
      %v1419 = vadd.f32 %v1417, %v1418
      %v1420 = vrot.slane %v1419, 2
      %v1421 = vadd.f32 %v1419, %v1420
      %v1422 = vrot.slane %v1421, 1
      %v1423 = vadd.f32 %v1421, %v1422
      %v1424 = vsel %vm1143, %v819, 0.0
      %v1425 = vrot.slane %v1424, 4
      %v1426 = vadd.f32 %v1424, %v1425
      %v1427 = vrot.slane %v1426, 2
      %v1428 = vadd.f32 %v1426, %v1427
      %v1429 = vrot.slane %v1428, 1
      %v1430 = vadd.f32 %v1428, %v1429
      %v1431 = vsel %vm1143, %v820, 0.0
      %v1432 = vrot.slane %v1431, 4
      %v1433 = vadd.f32 %v1431, %v1432
      %v1434 = vrot.slane %v1433, 2
      %v1435 = vadd.f32 %v1433, %v1434
      %v1436 = vrot.slane %v1435, 1
      %v1437 = vadd.f32 %v1435, %v1436
      %v1438 = vsel %vm1143, %v827, 0.0
      %v1439 = vrot.slane %v1438, 4
      %v1440 = vadd.f32 %v1438, %v1439
      %v1441 = vrot.slane %v1440, 2
      %v1442 = vadd.f32 %v1440, %v1441
      %v1443 = vrot.slane %v1442, 1
      %v1444 = vadd.f32 %v1442, %v1443
      %v1445 = vsel %vm1143, %v828, 0.0
      %v1446 = vrot.slane %v1445, 4
      %v1447 = vadd.f32 %v1445, %v1446
      %v1448 = vrot.slane %v1447, 2
      %v1449 = vadd.f32 %v1447, %v1448
      %v1450 = vrot.slane %v1449, 1
      %v1451 = vadd.f32 %v1449, %v1450
      %v1452 = vsel %vm1143, %v835, 0.0
      %v1453 = vrot.slane %v1452, 4
      %v1454 = vadd.f32 %v1452, %v1453
      %v1455 = vrot.slane %v1454, 2
      %v1456 = vadd.f32 %v1454, %v1455
      %v1457 = vrot.slane %v1456, 1
      %v1458 = vadd.f32 %v1456, %v1457
      %v1459 = vsel %vm1143, %v836, 0.0
      %v1460 = vrot.slane %v1459, 4
      %v1461 = vadd.f32 %v1459, %v1460
      %v1462 = vrot.slane %v1461, 2
      %v1463 = vadd.f32 %v1461, %v1462
      %v1464 = vrot.slane %v1463, 1
      %v1465 = vadd.f32 %v1463, %v1464
      %v1466 = vsel %vm1143, %v843, 0.0
      %v1467 = vrot.slane %v1466, 4
      %v1468 = vadd.f32 %v1466, %v1467
      %v1469 = vrot.slane %v1468, 2
      %v1470 = vadd.f32 %v1468, %v1469
      %v1471 = vrot.slane %v1470, 1
      %v1472 = vadd.f32 %v1470, %v1471
      %v1473 = vsel %vm1143, %v844, 0.0
      %v1474 = vrot.slane %v1473, 4
      %v1475 = vadd.f32 %v1473, %v1474
      %v1476 = vrot.slane %v1475, 2
      %v1477 = vadd.f32 %v1475, %v1476
      %v1478 = vrot.slane %v1477, 1
      %v1479 = vadd.f32 %v1477, %v1478
      %v1480 = vsel %vm1143, %v851, 0.0
      %v1481 = vrot.slane %v1480, 4
      %v1482 = vadd.f32 %v1480, %v1481
      %v1483 = vrot.slane %v1482, 2
      %v1484 = vadd.f32 %v1482, %v1483
      %v1485 = vrot.slane %v1484, 1
      %v1486 = vadd.f32 %v1484, %v1485
      %v1487 = vsel %vm1143, %v852, 0.0
      %v1488 = vrot.slane %v1487, 4
      %v1489 = vadd.f32 %v1487, %v1488
      %v1490 = vrot.slane %v1489, 2
      %v1491 = vadd.f32 %v1489, %v1490
      %v1492 = vrot.slane %v1491, 1
      %v1493 = vadd.f32 %v1491, %v1492
      %v1494 = vsel %vm1143, %v859, 0.0
      %v1495 = vrot.slane %v1494, 4
      %v1496 = vadd.f32 %v1494, %v1495
      %v1497 = vrot.slane %v1496, 2
      %v1498 = vadd.f32 %v1496, %v1497
      %v1499 = vrot.slane %v1498, 1
      %v1500 = vadd.f32 %v1498, %v1499
      %v1501 = vsel %vm1143, %v860, 0.0
      %v1502 = vrot.slane %v1501, 4
      %v1503 = vadd.f32 %v1501, %v1502
      %v1504 = vrot.slane %v1503, 2
      %v1505 = vadd.f32 %v1503, %v1504
      %v1506 = vrot.slane %v1505, 1
      %v1507 = vadd.f32 %v1505, %v1506
      %v1508 = vsel %vm1143, %v867, 0.0
      %v1509 = vrot.slane %v1508, 4
      %v1510 = vadd.f32 %v1508, %v1509
      %v1511 = vrot.slane %v1510, 2
      %v1512 = vadd.f32 %v1510, %v1511
      %v1513 = vrot.slane %v1512, 1
      %v1514 = vadd.f32 %v1512, %v1513
      %v1515 = vsel %vm1143, %v868, 0.0
      %v1516 = vrot.slane %v1515, 4
      %v1517 = vadd.f32 %v1515, %v1516
      %v1518 = vrot.slane %v1517, 2
      %v1519 = vadd.f32 %v1517, %v1518
      %v1520 = vrot.slane %v1519, 1
      %v1521 = vadd.f32 %v1519, %v1520
      %v1522 = vsel %vm1143, %v875, 0.0
      %v1523 = vrot.slane %v1522, 4
      %v1524 = vadd.f32 %v1522, %v1523
      %v1525 = vrot.slane %v1524, 2
      %v1526 = vadd.f32 %v1524, %v1525
      %v1527 = vrot.slane %v1526, 1
      %v1528 = vadd.f32 %v1526, %v1527
      %v1529 = vsel %vm1143, %v876, 0.0
      %v1530 = vrot.slane %v1529, 4
      %v1531 = vadd.f32 %v1529, %v1530
      %v1532 = vrot.slane %v1531, 2
      %v1533 = vadd.f32 %v1531, %v1532
      %v1534 = vrot.slane %v1533, 1
      %v1535 = vadd.f32 %v1533, %v1534
      %v1536 = vsel %vm1143, %v883, 0.0
      %v1537 = vrot.slane %v1536, 4
      %v1538 = vadd.f32 %v1536, %v1537
      %v1539 = vrot.slane %v1538, 2
      %v1540 = vadd.f32 %v1538, %v1539
      %v1541 = vrot.slane %v1540, 1
      %v1542 = vadd.f32 %v1540, %v1541
      %v1543 = vsel %vm1143, %v884, 0.0
      %v1544 = vrot.slane %v1543, 4
      %v1545 = vadd.f32 %v1543, %v1544
      %v1546 = vrot.slane %v1545, 2
      %v1547 = vadd.f32 %v1545, %v1546
      %v1548 = vrot.slane %v1547, 1
      %v1549 = vadd.f32 %v1547, %v1548
      %v1550 = vsel %vm1143, %v891, 0.0
      %v1551 = vrot.slane %v1550, 4
      %v1552 = vadd.f32 %v1550, %v1551
      %v1553 = vrot.slane %v1552, 2
      %v1554 = vadd.f32 %v1552, %v1553
      %v1555 = vrot.slane %v1554, 1
      %v1556 = vadd.f32 %v1554, %v1555
      %v1557 = vsel %vm1143, %v892, 0.0
      %v1558 = vrot.slane %v1557, 4
      %v1559 = vadd.f32 %v1557, %v1558
      %v1560 = vrot.slane %v1559, 2
      %v1561 = vadd.f32 %v1559, %v1560
      %v1562 = vrot.slane %v1561, 1
      %v1563 = vadd.f32 %v1561, %v1562
      %v1564 = vsel %vm1143, %v899, 0.0
      %v1565 = vrot.slane %v1564, 4
      %v1566 = vadd.f32 %v1564, %v1565
      %v1567 = vrot.slane %v1566, 2
      %v1568 = vadd.f32 %v1566, %v1567
      %v1569 = vrot.slane %v1568, 1
      %v1570 = vadd.f32 %v1568, %v1569
      %v1571 = vsel %vm1143, %v900, 0.0
      %v1572 = vrot.slane %v1571, 4
      %v1573 = vadd.f32 %v1571, %v1572
      %v1574 = vrot.slane %v1573, 2
      %v1575 = vadd.f32 %v1573, %v1574
      %v1576 = vrot.slane %v1575, 1
      %v1577 = vadd.f32 %v1575, %v1576
      %v1578 = vsel %vm1143, %v907, 0.0
      %v1579 = vrot.slane %v1578, 4
      %v1580 = vadd.f32 %v1578, %v1579
      %v1581 = vrot.slane %v1580, 2
      %v1582 = vadd.f32 %v1580, %v1581
      %v1583 = vrot.slane %v1582, 1
      %v1584 = vadd.f32 %v1582, %v1583
      %v1585 = vsel %vm1143, %v908, 0.0
      %v1586 = vrot.slane %v1585, 4
      %v1587 = vadd.f32 %v1585, %v1586
      %v1588 = vrot.slane %v1587, 2
      %v1589 = vadd.f32 %v1587, %v1588
      %v1590 = vrot.slane %v1589, 1
      %v1591 = vadd.f32 %v1589, %v1590
      %v1592 = vsel %vm1143, %v915, 0.0
      %v1593 = vrot.slane %v1592, 4
      %v1594 = vadd.f32 %v1592, %v1593
      %v1595 = vrot.slane %v1594, 2
      %v1596 = vadd.f32 %v1594, %v1595
      %v1597 = vrot.slane %v1596, 1
      %v1598 = vadd.f32 %v1596, %v1597
      %v1599 = vsel %vm1143, %v916, 0.0
      %v1600 = vrot.slane %v1599, 4
      %v1601 = vadd.f32 %v1599, %v1600
      %v1602 = vrot.slane %v1601, 2
      %v1603 = vadd.f32 %v1601, %v1602
      %v1604 = vrot.slane %v1603, 1
      %v1605 = vadd.f32 %v1603, %v1604
      %v1606 = vsel %vm1143, %v923, 0.0
      %v1607 = vrot.slane %v1606, 4
      %v1608 = vadd.f32 %v1606, %v1607
      %v1609 = vrot.slane %v1608, 2
      %v1610 = vadd.f32 %v1608, %v1609
      %v1611 = vrot.slane %v1610, 1
      %v1612 = vadd.f32 %v1610, %v1611
      %v1613 = vsel %vm1143, %v924, 0.0
      %v1614 = vrot.slane %v1613, 4
      %v1615 = vadd.f32 %v1613, %v1614
      %v1616 = vrot.slane %v1615, 2
      %v1617 = vadd.f32 %v1615, %v1616
      %v1618 = vrot.slane %v1617, 1
      %v1619 = vadd.f32 %v1617, %v1618
      %v1620 = vsel %vm1143, %v931, 0.0
      %v1621 = vrot.slane %v1620, 4
      %v1622 = vadd.f32 %v1620, %v1621
      %v1623 = vrot.slane %v1622, 2
      %v1624 = vadd.f32 %v1622, %v1623
      %v1625 = vrot.slane %v1624, 1
      %v1626 = vadd.f32 %v1624, %v1625
      %v1627 = vsel %vm1143, %v932, 0.0
      %v1628 = vrot.slane %v1627, 4
      %v1629 = vadd.f32 %v1627, %v1628
      %v1630 = vrot.slane %v1629, 2
      %v1631 = vadd.f32 %v1629, %v1630
      %v1632 = vrot.slane %v1631, 1
      %v1633 = vadd.f32 %v1631, %v1632
      %v1634 = vsel %vm1143, %v939, 0.0
      %v1635 = vrot.slane %v1634, 4
      %v1636 = vadd.f32 %v1634, %v1635
      %v1637 = vrot.slane %v1636, 2
      %v1638 = vadd.f32 %v1636, %v1637
      %v1639 = vrot.slane %v1638, 1
      %v1640 = vadd.f32 %v1638, %v1639
      %v1641 = vsel %vm1143, %v940, 0.0
      %v1642 = vrot.slane %v1641, 4
      %v1643 = vadd.f32 %v1641, %v1642
      %v1644 = vrot.slane %v1643, 2
      %v1645 = vadd.f32 %v1643, %v1644
      %v1646 = vrot.slane %v1645, 1
      %v1647 = vadd.f32 %v1645, %v1646
      %v1648 = vsel %vm1143, %v947, 0.0
      %v1649 = vrot.slane %v1648, 4
      %v1650 = vadd.f32 %v1648, %v1649
      %v1651 = vrot.slane %v1650, 2
      %v1652 = vadd.f32 %v1650, %v1651
      %v1653 = vrot.slane %v1652, 1
      %v1654 = vadd.f32 %v1652, %v1653
      %v1655 = vsel %vm1143, %v948, 0.0
      %v1656 = vrot.slane %v1655, 4
      %v1657 = vadd.f32 %v1655, %v1656
      %v1658 = vrot.slane %v1657, 2
      %v1659 = vadd.f32 %v1657, %v1658
      %v1660 = vrot.slane %v1659, 1
      %v1661 = vadd.f32 %v1659, %v1660
      %v1662 = vsel %vm1143, %v955, 0.0
      %v1663 = vrot.slane %v1662, 4
      %v1664 = vadd.f32 %v1662, %v1663
      %v1665 = vrot.slane %v1664, 2
      %v1666 = vadd.f32 %v1664, %v1665
      %v1667 = vrot.slane %v1666, 1
      %v1668 = vadd.f32 %v1666, %v1667
      %v1669 = vsel %vm1143, %v956, 0.0
      %v1670 = vrot.slane %v1669, 4
      %v1671 = vadd.f32 %v1669, %v1670
      %v1672 = vrot.slane %v1671, 2
      %v1673 = vadd.f32 %v1671, %v1672
      %v1674 = vrot.slane %v1673, 1
      %v1675 = vadd.f32 %v1673, %v1674
      %v1676 = vsel %vm1143, %v963, 0.0
      %v1677 = vrot.slane %v1676, 4
      %v1678 = vadd.f32 %v1676, %v1677
      %v1679 = vrot.slane %v1678, 2
      %v1680 = vadd.f32 %v1678, %v1679
      %v1681 = vrot.slane %v1680, 1
      %v1682 = vadd.f32 %v1680, %v1681
      %v1683 = vsel %vm1143, %v964, 0.0
      %v1684 = vrot.slane %v1683, 4
      %v1685 = vadd.f32 %v1683, %v1684
      %v1686 = vrot.slane %v1685, 2
      %v1687 = vadd.f32 %v1685, %v1686
      %v1688 = vrot.slane %v1687, 1
      %v1689 = vadd.f32 %v1687, %v1688
      %v1690 = vsel %vm1143, %v971, 0.0
      %v1691 = vrot.slane %v1690, 4
      %v1692 = vadd.f32 %v1690, %v1691
      %v1693 = vrot.slane %v1692, 2
      %v1694 = vadd.f32 %v1692, %v1693
      %v1695 = vrot.slane %v1694, 1
      %v1696 = vadd.f32 %v1694, %v1695
      %v1697 = vsel %vm1143, %v972, 0.0
      %v1698 = vrot.slane %v1697, 4
      %v1699 = vadd.f32 %v1697, %v1698
      %v1700 = vrot.slane %v1699, 2
      %v1701 = vadd.f32 %v1699, %v1700
      %v1702 = vrot.slane %v1701, 1
      %v1703 = vadd.f32 %v1701, %v1702
      %v1704 = vsel %vm1143, %v979, 0.0
      %v1705 = vrot.slane %v1704, 4
      %v1706 = vadd.f32 %v1704, %v1705
      %v1707 = vrot.slane %v1706, 2
      %v1708 = vadd.f32 %v1706, %v1707
      %v1709 = vrot.slane %v1708, 1
      %v1710 = vadd.f32 %v1708, %v1709
      %v1711 = vsel %vm1143, %v980, 0.0
      %v1712 = vrot.slane %v1711, 4
      %v1713 = vadd.f32 %v1711, %v1712
      %v1714 = vrot.slane %v1713, 2
      %v1715 = vadd.f32 %v1713, %v1714
      %v1716 = vrot.slane %v1715, 1
      %v1717 = vadd.f32 %v1715, %v1716
      %v1718 = vsel %vm1143, %v987, 0.0
      %v1719 = vrot.slane %v1718, 4
      %v1720 = vadd.f32 %v1718, %v1719
      %v1721 = vrot.slane %v1720, 2
      %v1722 = vadd.f32 %v1720, %v1721
      %v1723 = vrot.slane %v1722, 1
      %v1724 = vadd.f32 %v1722, %v1723
      %v1725 = vsel %vm1143, %v988, 0.0
      %v1726 = vrot.slane %v1725, 4
      %v1727 = vadd.f32 %v1725, %v1726
      %v1728 = vrot.slane %v1727, 2
      %v1729 = vadd.f32 %v1727, %v1728
      %v1730 = vrot.slane %v1729, 1
      %v1731 = vadd.f32 %v1729, %v1730
      %v1732 = vsel %vm1143, %v995, 0.0
      %v1733 = vrot.slane %v1732, 4
      %v1734 = vadd.f32 %v1732, %v1733
      %v1735 = vrot.slane %v1734, 2
      %v1736 = vadd.f32 %v1734, %v1735
      %v1737 = vrot.slane %v1736, 1
      %v1738 = vadd.f32 %v1736, %v1737
      %v1739 = vsel %vm1143, %v996, 0.0
      %v1740 = vrot.slane %v1739, 4
      %v1741 = vadd.f32 %v1739, %v1740
      %v1742 = vrot.slane %v1741, 2
      %v1743 = vadd.f32 %v1741, %v1742
      %v1744 = vrot.slane %v1743, 1
      %v1745 = vadd.f32 %v1743, %v1744
      %v1746 = vsel %vm1143, %v1003, 0.0
      %v1747 = vrot.slane %v1746, 4
      %v1748 = vadd.f32 %v1746, %v1747
      %v1749 = vrot.slane %v1748, 2
      %v1750 = vadd.f32 %v1748, %v1749
      %v1751 = vrot.slane %v1750, 1
      %v1752 = vadd.f32 %v1750, %v1751
      %v1753 = vsel %vm1143, %v1004, 0.0
      %v1754 = vrot.slane %v1753, 4
      %v1755 = vadd.f32 %v1753, %v1754
      %v1756 = vrot.slane %v1755, 2
      %v1757 = vadd.f32 %v1755, %v1756
      %v1758 = vrot.slane %v1757, 1
      %v1759 = vadd.f32 %v1757, %v1758
      %v1760 = vsel %vm1143, %v1011, 0.0
      %v1761 = vrot.slane %v1760, 4
      %v1762 = vadd.f32 %v1760, %v1761
      %v1763 = vrot.slane %v1762, 2
      %v1764 = vadd.f32 %v1762, %v1763
      %v1765 = vrot.slane %v1764, 1
      %v1766 = vadd.f32 %v1764, %v1765
      %v1767 = vsel %vm1143, %v1012, 0.0
      %v1768 = vrot.slane %v1767, 4
      %v1769 = vadd.f32 %v1767, %v1768
      %v1770 = vrot.slane %v1769, 2
      %v1771 = vadd.f32 %v1769, %v1770
      %v1772 = vrot.slane %v1771, 1
      %v1773 = vadd.f32 %v1771, %v1772
      %v1774 = vsel %vm1143, %v1019, 0.0
      %v1775 = vrot.slane %v1774, 4
      %v1776 = vadd.f32 %v1774, %v1775
      %v1777 = vrot.slane %v1776, 2
      %v1778 = vadd.f32 %v1776, %v1777
      %v1779 = vrot.slane %v1778, 1
      %v1780 = vadd.f32 %v1778, %v1779
      %v1781 = vsel %vm1143, %v1020, 0.0
      %v1782 = vrot.slane %v1781, 4
      %v1783 = vadd.f32 %v1781, %v1782
      %v1784 = vrot.slane %v1783, 2
      %v1785 = vadd.f32 %v1783, %v1784
      %v1786 = vrot.slane %v1785, 1
      %v1787 = vadd.f32 %v1785, %v1786
      %v1788 = vsel %vm1143, %v1027, 0.0
      %v1789 = vrot.slane %v1788, 4
      %v1790 = vadd.f32 %v1788, %v1789
      %v1791 = vrot.slane %v1790, 2
      %v1792 = vadd.f32 %v1790, %v1791
      %v1793 = vrot.slane %v1792, 1
      %v1794 = vadd.f32 %v1792, %v1793
      %v1795 = vsel %vm1143, %v1028, 0.0
      %v1796 = vrot.slane %v1795, 4
      %v1797 = vadd.f32 %v1795, %v1796
      %v1798 = vrot.slane %v1797, 2
      %v1799 = vadd.f32 %v1797, %v1798
      %v1800 = vrot.slane %v1799, 1
      %v1801 = vadd.f32 %v1799, %v1800
      %v1802 = vsel %vm1143, %v1035, 0.0
      %v1803 = vrot.slane %v1802, 4
      %v1804 = vadd.f32 %v1802, %v1803
      %v1805 = vrot.slane %v1804, 2
      %v1806 = vadd.f32 %v1804, %v1805
      %v1807 = vrot.slane %v1806, 1
      %v1808 = vadd.f32 %v1806, %v1807
      %v1809 = vsel %vm1143, %v1036, 0.0
      %v1810 = vrot.slane %v1809, 4
      %v1811 = vadd.f32 %v1809, %v1810
      %v1812 = vrot.slane %v1811, 2
      %v1813 = vadd.f32 %v1811, %v1812
      %v1814 = vrot.slane %v1813, 1
      %v1815 = vadd.f32 %v1813, %v1814
      %v1816 = vsel %vm1143, %v1043, 0.0
      %v1817 = vrot.slane %v1816, 4
      %v1818 = vadd.f32 %v1816, %v1817
      %v1819 = vrot.slane %v1818, 2
      %v1820 = vadd.f32 %v1818, %v1819
      %v1821 = vrot.slane %v1820, 1
      %v1822 = vadd.f32 %v1820, %v1821
      %v1823 = vsel %vm1143, %v1044, 0.0
      %v1824 = vrot.slane %v1823, 4
      %v1825 = vadd.f32 %v1823, %v1824
      %v1826 = vrot.slane %v1825, 2
      %v1827 = vadd.f32 %v1825, %v1826
      %v1828 = vrot.slane %v1827, 1
      %v1829 = vadd.f32 %v1827, %v1828
      %v1830 = vld [vmem:[#allocation2] sm:$0x3]
      %v1831 = vmax.f32 %v1150, %v1178
      %v1832 = vmax.f32 %v1164, %v1192
      %v1833 = vmax.f32 %v1831, %v1206
      %v1834 = vmax.f32 %v1832, %v1220
      %v1835 = vmax.f32 %v1833, %v1234
      %v1836 = vmax.f32 %v1834, %v1248
      %v1837 = vmax.f32 %v1835, %v1262
      %v1838 = vmax.f32 %v1836, %v1276
      %v1839 = vmax.f32 %v1837, %v1290
      %v1840 = vmax.f32 %v1838, %v1304
      %v1841 = vmax.f32 %v1839, %v1318
      %v1842 = vmax.f32 %v1840, %v1332
      %v1843 = vmax.f32 %v1841, %v1346
      %v1844 = vmax.f32 %v1842, %v1360
      %v1845 = vmax.f32 %v1843, %v1374
      %v1846 = vmax.f32 %v1844, %v1388
      %v1847 = vmax.f32 %v1845, %v1402
      %v1848 = vmax.f32 %v1846, %v1416
      %v1849 = vmax.f32 %v1847, %v1430
      %v1850 = vmax.f32 %v1848, %v1444
      %v1851 = vmax.f32 %v1849, %v1458
      %v1852 = vmax.f32 %v1850, %v1472
      %v1853 = vmax.f32 %v1851, %v1486
      %v1854 = vmax.f32 %v1852, %v1500
      %v1855 = vmax.f32 %v1853, %v1514
      %v1856 = vmax.f32 %v1854, %v1528
      %v1857 = vmax.f32 %v1855, %v1542
      %v1858 = vmax.f32 %v1856, %v1556
      %v1859 = vmax.f32 %v1857, %v1570
      %v1860 = vmax.f32 %v1858, %v1584
      %v1861 = vmax.f32 %v1859, %v1598
      %v1862 = vmax.f32 %v1860, %v1612
      %v1863 = vmax.f32 %v1861, %v1626
      %v1864 = vmax.f32 %v1862, %v1640
      %v1865 = vmax.f32 %v1863, %v1654
      %v1866 = vmax.f32 %v1864, %v1668
      %v1867 = vmax.f32 %v1865, %v1682
      %v1868 = vmax.f32 %v1866, %v1696
      %v1869 = vmax.f32 %v1867, %v1710
      %v1870 = vmax.f32 %v1868, %v1724
      %v1871 = vmax.f32 %v1869, %v1738
      %v1872 = vmax.f32 %v1870, %v1752
      %v1873 = vmax.f32 %v1871, %v1766
      %v1874 = vmax.f32 %v1872, %v1780
      %v1875 = vmax.f32 %v1873, %v1794
      %v1876 = vmax.f32 %v1874, %v1808
      %v1877 = vmax.f32 %v1875, %v1822
      %v1878 = vmax.f32 %v1877, %v1876
      %v1879 = vmax.f32 %v1157, %v1185
      %v1880 = vmax.f32 %v1171, %v1199
      %v1881 = vmax.f32 %v1879, %v1213
      %v1882 = vmax.f32 %v1880, %v1227
      %v1883 = vmax.f32 %v1881, %v1241
      %v1884 = vmax.f32 %v1882, %v1255
      %v1885 = vmax.f32 %v1883, %v1269
      %v1886 = vmax.f32 %v1884, %v1283
      %v1887 = vmax.f32 %v1885, %v1297
      %v1888 = vmax.f32 %v1886, %v1311
      %v1889 = vmax.f32 %v1887, %v1325
      %v1890 = vmax.f32 %v1888, %v1339
      %v1891 = vmax.f32 %v1889, %v1353
      %v1892 = vmax.f32 %v1890, %v1367
      %v1893 = vmax.f32 %v1891, %v1381
      %v1894 = vmax.f32 %v1892, %v1395
      %v1895 = vmax.f32 %v1893, %v1409
      %v1896 = vmax.f32 %v1894, %v1423
      %v1897 = vmax.f32 %v1895, %v1437
      %v1898 = vmax.f32 %v1896, %v1451
      %v1899 = vmax.f32 %v1897, %v1465
      %v1900 = vmax.f32 %v1898, %v1479
      %v1901 = vmax.f32 %v1899, %v1493
      %v1902 = vmax.f32 %v1900, %v1507
      %v1903 = vmax.f32 %v1901, %v1521
      %v1904 = vmax.f32 %v1902, %v1535
      %v1905 = vmax.f32 %v1903, %v1549
      %v1906 = vmax.f32 %v1904, %v1563
      %v1907 = vmax.f32 %v1905, %v1577
      %v1908 = vmax.f32 %v1906, %v1591
      %v1909 = vmax.f32 %v1907, %v1605
      %v1910 = vmax.f32 %v1908, %v1619
      %v1911 = vmax.f32 %v1909, %v1633
      %v1912 = vmax.f32 %v1910, %v1647
      %v1913 = vmax.f32 %v1911, %v1661
      %v1914 = vmax.f32 %v1912, %v1675
      %v1915 = vmax.f32 %v1913, %v1689
      %v1916 = vmax.f32 %v1914, %v1703
      %v1917 = vmax.f32 %v1915, %v1717
      %v1918 = vmax.f32 %v1916, %v1731
      %v1919 = vmax.f32 %v1917, %v1745
      %v1920 = vmax.f32 %v1918, %v1759
      %v1921 = vmax.f32 %v1919, %v1773
      %v1922 = vmax.f32 %v1920, %v1787
      %v1923 = vmax.f32 %v1921, %v1801
      %v1924 = vmax.f32 %v1922, %v1815
      %v1925 = vmax.f32 %v1923, %v1829
      %v1926 = vmax.f32 %v1925, %v1924
      %v1929 = vcombine.low %v1878, %v1926
      %v1931 = vunpack.c.l.s4 1966171168
      %v1932 = vunpack.c.0.s8 %v1931
      %v1933 = vlaneseq
      %v1934 = vshrl.u32 %v1933, 7
      %v1935 = vsub.s32 %v1932, %v1934
      %v1936 = vrot.slane %v1929, %v1935
      %v1938 = vunpack.c.l.s4 1966171168
      %v1939 = vunpack.c.0.s8 %v1938
      %v1940 = vlaneseq
      %v1941 = vshrl.u32 %v1940, 7
      %v1942 = vsub.s32 %v1939, %v1941
      %v1943 = vrot.slane %v1936, %v1942
      %v1945 = vmax.f32 %v1830, %v1943
      %v1946 = vsub.f32 %v1830, %v1945
      %v1947 = vmul.f32 %v1946, 1.442695
      %v1948 = vpow.pop %v1947
      %v1950 = vlaneseq
      %v1951 = vshrl.u32 %v1950, 7
      %v1952 = vsub.s32 0, %v1951
      %v1953 = vrot.slane %v1945, %v1952
      %v1954 = vlaneseq
      %v1955 = vshrl.u32 %v1954, 7
      %v1956 = vsub.s32 1, %v1955
      %v1957 = vrot.slane %v1945, %v1956
      %v1960 = vsub.f32 %v1150, %v1953
      %v1961 = vsub.f32 %v1157, %v1957
      %v1962 = vsub.f32 %v1164, %v1953
      %v1963 = vsub.f32 %v1171, %v1957
      %v1964 = vsub.f32 %v1178, %v1953
      %v1965 = vsub.f32 %v1185, %v1957
      %v1966 = vsub.f32 %v1192, %v1953
      %v1967 = vsub.f32 %v1199, %v1957
      %v1968 = vsub.f32 %v1206, %v1953
      %v1969 = vsub.f32 %v1213, %v1957
      %v1970 = vsub.f32 %v1220, %v1953
      %v1971 = vsub.f32 %v1227, %v1957
      %v1972 = vsub.f32 %v1234, %v1953
      %v1973 = vsub.f32 %v1241, %v1957
      %v1974 = vsub.f32 %v1248, %v1953
      %v1975 = vsub.f32 %v1255, %v1957
      %v1976 = vsub.f32 %v1262, %v1953
      %v1977 = vsub.f32 %v1269, %v1957
      %v1978 = vsub.f32 %v1276, %v1953
      %v1979 = vsub.f32 %v1283, %v1957
      %v1980 = vsub.f32 %v1290, %v1953
      %v1981 = vsub.f32 %v1297, %v1957
      %v1982 = vsub.f32 %v1304, %v1953
      %v1983 = vsub.f32 %v1311, %v1957
      %v1984 = vsub.f32 %v1318, %v1953
      %v1985 = vsub.f32 %v1325, %v1957
      %v1986 = vsub.f32 %v1332, %v1953
      %v1987 = vsub.f32 %v1339, %v1957
      %v1988 = vsub.f32 %v1346, %v1953
      %v1989 = vsub.f32 %v1353, %v1957
      %v1990 = vsub.f32 %v1360, %v1953
      %v1991 = vsub.f32 %v1367, %v1957
      %v1992 = vsub.f32 %v1374, %v1953
      %v1993 = vsub.f32 %v1381, %v1957
      %v1994 = vsub.f32 %v1388, %v1953
      %v1995 = vsub.f32 %v1395, %v1957
      %v1996 = vsub.f32 %v1402, %v1953
      %v1997 = vsub.f32 %v1409, %v1957
      %v1998 = vsub.f32 %v1416, %v1953
      %v1999 = vsub.f32 %v1423, %v1957
      %v2000 = vsub.f32 %v1430, %v1953
      %v2001 = vsub.f32 %v1437, %v1957
      %v2002 = vsub.f32 %v1444, %v1953
      %v2003 = vsub.f32 %v1451, %v1957
      %v2004 = vsub.f32 %v1458, %v1953
      %v2005 = vsub.f32 %v1465, %v1957
      %v2006 = vsub.f32 %v1472, %v1953
      %v2007 = vsub.f32 %v1479, %v1957
      %v2008 = vsub.f32 %v1486, %v1953
      %v2009 = vsub.f32 %v1493, %v1957
      %v2010 = vsub.f32 %v1500, %v1953
      %v2011 = vsub.f32 %v1507, %v1957
      %v2012 = vsub.f32 %v1514, %v1953
      %v2013 = vsub.f32 %v1521, %v1957
      %v2014 = vsub.f32 %v1528, %v1953
      %v2015 = vsub.f32 %v1535, %v1957
      %v2016 = vsub.f32 %v1542, %v1953
      %v2017 = vsub.f32 %v1549, %v1957
      %v2018 = vsub.f32 %v1556, %v1953
      %v2019 = vsub.f32 %v1563, %v1957
      %v2020 = vsub.f32 %v1570, %v1953
      %v2021 = vsub.f32 %v1577, %v1957
      %v2022 = vsub.f32 %v1584, %v1953
      %v2023 = vsub.f32 %v1591, %v1957
      %v2024 = vsub.f32 %v1598, %v1953
      %v2025 = vsub.f32 %v1605, %v1957
      %v2026 = vsub.f32 %v1612, %v1953
      %v2027 = vsub.f32 %v1619, %v1957
      %v2028 = vsub.f32 %v1626, %v1953
      %v2029 = vsub.f32 %v1633, %v1957
      %v2030 = vsub.f32 %v1640, %v1953
      %v2031 = vsub.f32 %v1647, %v1957
      %v2032 = vsub.f32 %v1654, %v1953
      %v2033 = vsub.f32 %v1661, %v1957
      %v2034 = vsub.f32 %v1668, %v1953
      %v2035 = vsub.f32 %v1675, %v1957
      %v2036 = vsub.f32 %v1682, %v1953
      %v2037 = vsub.f32 %v1689, %v1957
      %v2038 = vsub.f32 %v1696, %v1953
      %v2039 = vsub.f32 %v1703, %v1957
      %v2040 = vsub.f32 %v1710, %v1953
      %v2041 = vsub.f32 %v1717, %v1957
      %v2042 = vsub.f32 %v1724, %v1953
      %v2043 = vsub.f32 %v1731, %v1957
      %v2044 = vsub.f32 %v1738, %v1953
      %v2045 = vsub.f32 %v1745, %v1957
      %v2046 = vsub.f32 %v1752, %v1953
      %v2047 = vsub.f32 %v1759, %v1957
      %v2048 = vsub.f32 %v1766, %v1953
      %v2049 = vsub.f32 %v1773, %v1957
      %v2050 = vsub.f32 %v1780, %v1953
      %v2051 = vsub.f32 %v1787, %v1957
      %v2052 = vsub.f32 %v1794, %v1953
      %v2053 = vsub.f32 %v1801, %v1957
      %v2054 = vsub.f32 %v1808, %v1953
      %v2055 = vsub.f32 %v1815, %v1957
      %v2056 = vsub.f32 %v1822, %v1953
      %v2057 = vsub.f32 %v1829, %v1957
      %v2058 = vmul.f32 %v1960, 1.442695
      %v2059 = vpow.pop %v2058
      %v2060 = vmul.f32 %v1961, 1.442695
      %v2061 = vpow.pop %v2060
      %v2062 = vmul.f32 %v1962, 1.442695
      %v2063 = vpow.pop %v2062
      %v2064 = vmul.f32 %v1963, 1.442695
      %v2065 = vpow.pop %v2064
      %v2066 = vmul.f32 %v1964, 1.442695
      %v2067 = vpow.pop %v2066
      %v2068 = vmul.f32 %v1965, 1.442695
      %v2069 = vpow.pop %v2068
      %v2070 = vmul.f32 %v1966, 1.442695
      %v2071 = vpow.pop %v2070
      %v2072 = vmul.f32 %v1967, 1.442695
      %v2073 = vpow.pop %v2072
      %v2074 = vmul.f32 %v1968, 1.442695
      %v2075 = vpow.pop %v2074
      %v2076 = vmul.f32 %v1969, 1.442695
      %v2077 = vpow.pop %v2076
      %v2078 = vmul.f32 %v1970, 1.442695
      %v2079 = vpow.pop %v2078
      %v2080 = vmul.f32 %v1971, 1.442695
      %v2081 = vpow.pop %v2080
      %v2082 = vmul.f32 %v1972, 1.442695
      %v2083 = vpow.pop %v2082
      %v2084 = vmul.f32 %v1973, 1.442695
      %v2085 = vpow.pop %v2084
      %v2086 = vmul.f32 %v1974, 1.442695
      %v2087 = vpow.pop %v2086
      %v2088 = vmul.f32 %v1975, 1.442695
      %v2089 = vpow.pop %v2088
      %v2090 = vmul.f32 %v1976, 1.442695
      %v2091 = vpow.pop %v2090
      %v2092 = vmul.f32 %v1977, 1.442695
      %v2093 = vpow.pop %v2092
      %v2094 = vmul.f32 %v1978, 1.442695
      %v2095 = vpow.pop %v2094
      %v2096 = vmul.f32 %v1979, 1.442695
      %v2097 = vpow.pop %v2096
      %v2098 = vmul.f32 %v1980, 1.442695
      %v2099 = vpow.pop %v2098
      %v2100 = vmul.f32 %v1981, 1.442695
      %v2101 = vpow.pop %v2100
      %v2102 = vmul.f32 %v1982, 1.442695
      %v2103 = vpow.pop %v2102
      %v2104 = vmul.f32 %v1983, 1.442695
      %v2105 = vpow.pop %v2104
      %v2106 = vmul.f32 %v1984, 1.442695
      %v2107 = vpow.pop %v2106
      %v2108 = vmul.f32 %v1985, 1.442695
      %v2109 = vpow.pop %v2108
      %v2110 = vmul.f32 %v1986, 1.442695
      %v2111 = vpow.pop %v2110
      %v2112 = vmul.f32 %v1987, 1.442695
      %v2113 = vpow.pop %v2112
      %v2114 = vmul.f32 %v1988, 1.442695
      %v2115 = vpow.pop %v2114
      %v2116 = vmul.f32 %v1989, 1.442695
      %v2117 = vpow.pop %v2116
      %v2118 = vmul.f32 %v1990, 1.442695
      %v2119 = vpow.pop %v2118
      %v2120 = vmul.f32 %v1991, 1.442695
      %v2121 = vpow.pop %v2120
      %v2122 = vmul.f32 %v1992, 1.442695
      %v2123 = vpow.pop %v2122
      %v2124 = vmul.f32 %v1993, 1.442695
      %v2125 = vpow.pop %v2124
      %v2126 = vmul.f32 %v1994, 1.442695
      %v2127 = vpow.pop %v2126
      %v2128 = vmul.f32 %v1995, 1.442695
      %v2129 = vpow.pop %v2128
      %v2130 = vmul.f32 %v1996, 1.442695
      %v2131 = vpow.pop %v2130
      %v2132 = vmul.f32 %v1997, 1.442695
      %v2133 = vpow.pop %v2132
      %v2134 = vmul.f32 %v1998, 1.442695
      %v2135 = vpow.pop %v2134
      %v2136 = vmul.f32 %v1999, 1.442695
      %v2137 = vpow.pop %v2136
      %v2138 = vmul.f32 %v2000, 1.442695
      %v2139 = vpow.pop %v2138
      %v2140 = vmul.f32 %v2001, 1.442695
      %v2141 = vpow.pop %v2140
      %v2142 = vmul.f32 %v2002, 1.442695
      %v2143 = vpow.pop %v2142
      %v2144 = vmul.f32 %v2003, 1.442695
      %v2145 = vpow.pop %v2144
      %v2146 = vmul.f32 %v2004, 1.442695
      %v2147 = vpow.pop %v2146
      %v2148 = vmul.f32 %v2005, 1.442695
      %v2149 = vpow.pop %v2148
      %v2150 = vmul.f32 %v2006, 1.442695
      %v2151 = vpow.pop %v2150
      %v2152 = vmul.f32 %v2007, 1.442695
      %v2153 = vpow.pop %v2152
      %v2154 = vmul.f32 %v2008, 1.442695
      %v2155 = vpow.pop %v2154
      %v2156 = vmul.f32 %v2009, 1.442695
      %v2157 = vpow.pop %v2156
      %v2158 = vmul.f32 %v2010, 1.442695
      %v2159 = vpow.pop %v2158
      %v2160 = vmul.f32 %v2011, 1.442695
      %v2161 = vpow.pop %v2160
      %v2162 = vmul.f32 %v2012, 1.442695
      %v2163 = vpow.pop %v2162
      %v2164 = vmul.f32 %v2013, 1.442695
      %v2165 = vpow.pop %v2164
      %v2166 = vmul.f32 %v2014, 1.442695
      %v2167 = vpow.pop %v2166
      %v2168 = vmul.f32 %v2015, 1.442695
      %v2169 = vpow.pop %v2168
      %v2170 = vmul.f32 %v2016, 1.442695
      %v2171 = vpow.pop %v2170
      %v2172 = vmul.f32 %v2017, 1.442695
      %v2173 = vpow.pop %v2172
      %v2174 = vmul.f32 %v2018, 1.442695
      %v2175 = vpow.pop %v2174
      %v2176 = vmul.f32 %v2019, 1.442695
      %v2177 = vpow.pop %v2176
      %v2178 = vmul.f32 %v2020, 1.442695
      %v2179 = vpow.pop %v2178
      %v2180 = vmul.f32 %v2021, 1.442695
      %v2181 = vpow.pop %v2180
      %v2182 = vmul.f32 %v2022, 1.442695
      %v2183 = vpow.pop %v2182
      %v2184 = vmul.f32 %v2023, 1.442695
      %v2185 = vpow.pop %v2184
      %v2186 = vmul.f32 %v2024, 1.442695
      %v2187 = vpow.pop %v2186
      %v2188 = vmul.f32 %v2025, 1.442695
      %v2189 = vpow.pop %v2188
      %v2190 = vmul.f32 %v2026, 1.442695
      %v2191 = vpow.pop %v2190
      %v2192 = vmul.f32 %v2027, 1.442695
      %v2193 = vpow.pop %v2192
      %v2194 = vmul.f32 %v2028, 1.442695
      %v2195 = vpow.pop %v2194
      %v2196 = vmul.f32 %v2029, 1.442695
      %v2197 = vpow.pop %v2196
      %v2198 = vmul.f32 %v2030, 1.442695
      %v2199 = vpow.pop %v2198
      %v2200 = vmul.f32 %v2031, 1.442695
      %v2201 = vpow.pop %v2200
      %v2202 = vmul.f32 %v2032, 1.442695
      %v2203 = vpow.pop %v2202
      %v2204 = vmul.f32 %v2033, 1.442695
      %v2205 = vpow.pop %v2204
      %v2206 = vmul.f32 %v2034, 1.442695
      %v2207 = vpow.pop %v2206
      %v2208 = vmul.f32 %v2035, 1.442695
      %v2209 = vpow.pop %v2208
      %v2210 = vmul.f32 %v2036, 1.442695
      %v2211 = vpow.pop %v2210
      %v2212 = vmul.f32 %v2037, 1.442695
      %v2213 = vpow.pop %v2212
      %v2214 = vmul.f32 %v2038, 1.442695
      %v2215 = vpow.pop %v2214
      %v2216 = vmul.f32 %v2039, 1.442695
      %v2217 = vpow.pop %v2216
      %v2218 = vmul.f32 %v2040, 1.442695
      %v2219 = vpow.pop %v2218
      %v2220 = vmul.f32 %v2041, 1.442695
      %v2221 = vpow.pop %v2220
      %v2222 = vmul.f32 %v2042, 1.442695
      %v2223 = vpow.pop %v2222
      %v2224 = vmul.f32 %v2043, 1.442695
      %v2225 = vpow.pop %v2224
      %v2226 = vmul.f32 %v2044, 1.442695
      %v2227 = vpow.pop %v2226
      %v2228 = vmul.f32 %v2045, 1.442695
      %v2229 = vpow.pop %v2228
      %v2230 = vmul.f32 %v2046, 1.442695
      %v2231 = vpow.pop %v2230
      %v2232 = vmul.f32 %v2047, 1.442695
      %v2233 = vpow.pop %v2232
      %v2234 = vmul.f32 %v2048, 1.442695
      %v2235 = vpow.pop %v2234
      %v2236 = vmul.f32 %v2049, 1.442695
      %v2237 = vpow.pop %v2236
      %v2238 = vmul.f32 %v2050, 1.442695
      %v2239 = vpow.pop %v2238
      %v2240 = vmul.f32 %v2051, 1.442695
      %v2241 = vpow.pop %v2240
      %v2242 = vmul.f32 %v2052, 1.442695
      %v2243 = vpow.pop %v2242
      %v2244 = vmul.f32 %v2053, 1.442695
      %v2245 = vpow.pop %v2244
      %v2246 = vmul.f32 %v2054, 1.442695
      %v2247 = vpow.pop %v2246
      %v2248 = vmul.f32 %v2055, 1.442695
      %v2249 = vpow.pop %v2248
      %v2250 = vmul.f32 %v2056, 1.442695
      %v2251 = vpow.pop %v2250
      %v2252 = vmul.f32 %v2057, 1.442695
      %v2253 = vpow.pop %v2252
      %v2254 = vld [vmem:[#allocation3] sm:$0x3]
      %v2255 = vmul.f32 %v1948, %v2254
      %v2354 = vrot.slane %v2063, 7
      %vm2355 = vcmask 1041409
      %v2356 = vsel %vm2355, %v2354, %v2059
      %v2357 = vrot.slane %v2067, 6
      %vm2358 = vcmask 1042434
      %v2359 = vsel %vm2358, %v2357, %v2356
      %v2360 = vrot.slane %v2071, 5
      %vm2361 = vcmask 1043459
      %v2362 = vsel %vm2361, %v2360, %v2359
      %v2363 = vrot.slane %v2075, 4
      %vm2364 = vcmask 1044484
      %v2365 = vsel %vm2364, %v2363, %v2362
      %v2366 = vrot.slane %v2079, 3
      %vm2367 = vcmask 1045509
      %v2368 = vsel %vm2367, %v2366, %v2365
      %v2369 = vrot.slane %v2083, 2
      %vm2370 = vcmask 1046534
      %v2371 = vsel %vm2370, %v2369, %v2368
      %v2372 = vrot.slane %v2087, 1
      %vm2373 = vcmask 1047559
      %v2374 = vsel %vm2373, %v2372, %v2371
      %v2375 = vrot.slane %v2065, 7
      %v2376 = vsel %vm2355, %v2375, %v2061
      %v2377 = vrot.slane %v2069, 6
      %v2378 = vsel %vm2358, %v2377, %v2376
      %v2379 = vrot.slane %v2073, 5
      %v2380 = vsel %vm2361, %v2379, %v2378
      %v2381 = vrot.slane %v2077, 4
      %v2382 = vsel %vm2364, %v2381, %v2380
      %v2383 = vrot.slane %v2081, 3
      %v2384 = vsel %vm2367, %v2383, %v2382
      %v2385 = vrot.slane %v2085, 2
      %v2386 = vsel %vm2370, %v2385, %v2384
      %v2387 = vrot.slane %v2089, 1
      %v2388 = vsel %vm2373, %v2387, %v2386
      %v2389 = vrot.slane %v2095, 7
      %v2390 = vsel %vm2355, %v2389, %v2091
      %v2391 = vrot.slane %v2099, 6
      %v2392 = vsel %vm2358, %v2391, %v2390
      %v2393 = vrot.slane %v2103, 5
      %v2394 = vsel %vm2361, %v2393, %v2392
      %v2395 = vrot.slane %v2107, 4
      %v2396 = vsel %vm2364, %v2395, %v2394
      %v2397 = vrot.slane %v2111, 3
      %v2398 = vsel %vm2367, %v2397, %v2396
      %v2399 = vrot.slane %v2115, 2
      %v2400 = vsel %vm2370, %v2399, %v2398
      %v2401 = vrot.slane %v2119, 1
      %v2402 = vsel %vm2373, %v2401, %v2400
      %v2403 = vrot.slane %v2097, 7
      %v2404 = vsel %vm2355, %v2403, %v2093
      %v2405 = vrot.slane %v2101, 6
      %v2406 = vsel %vm2358, %v2405, %v2404
      %v2407 = vrot.slane %v2105, 5
      %v2408 = vsel %vm2361, %v2407, %v2406
      %v2409 = vrot.slane %v2109, 4
      %v2410 = vsel %vm2364, %v2409, %v2408
      %v2411 = vrot.slane %v2113, 3
      %v2412 = vsel %vm2367, %v2411, %v2410
      %v2413 = vrot.slane %v2117, 2
      %v2414 = vsel %vm2370, %v2413, %v2412
      %v2415 = vrot.slane %v2121, 1
      %v2416 = vsel %vm2373, %v2415, %v2414
      %v2417 = vrot.slane %v2127, 7
      %v2418 = vsel %vm2355, %v2417, %v2123
      %v2419 = vrot.slane %v2131, 6
      %v2420 = vsel %vm2358, %v2419, %v2418
      %v2421 = vrot.slane %v2135, 5
      %v2422 = vsel %vm2361, %v2421, %v2420
      %v2423 = vrot.slane %v2139, 4
      %v2424 = vsel %vm2364, %v2423, %v2422
      %v2425 = vrot.slane %v2143, 3
      %v2426 = vsel %vm2367, %v2425, %v2424
      %v2427 = vrot.slane %v2147, 2
      %v2428 = vsel %vm2370, %v2427, %v2426
      %v2429 = vrot.slane %v2151, 1
      %v2430 = vsel %vm2373, %v2429, %v2428
      %v2431 = vrot.slane %v2129, 7
      %v2432 = vsel %vm2355, %v2431, %v2125
      %v2433 = vrot.slane %v2133, 6
      %v2434 = vsel %vm2358, %v2433, %v2432
      %v2435 = vrot.slane %v2137, 5
      %v2436 = vsel %vm2361, %v2435, %v2434
      %v2437 = vrot.slane %v2141, 4
      %v2438 = vsel %vm2364, %v2437, %v2436
      %v2439 = vrot.slane %v2145, 3
      %v2440 = vsel %vm2367, %v2439, %v2438
      %v2441 = vrot.slane %v2149, 2
      %v2442 = vsel %vm2370, %v2441, %v2440
      %v2443 = vrot.slane %v2153, 1
      %v2444 = vsel %vm2373, %v2443, %v2442
      %v2445 = vrot.slane %v2159, 7
      %v2446 = vsel %vm2355, %v2445, %v2155
      %v2447 = vrot.slane %v2163, 6
      %v2448 = vsel %vm2358, %v2447, %v2446
      %v2449 = vrot.slane %v2167, 5
      %v2450 = vsel %vm2361, %v2449, %v2448
      %v2451 = vrot.slane %v2171, 4
      %v2452 = vsel %vm2364, %v2451, %v2450
      %v2453 = vrot.slane %v2175, 3
      %v2454 = vsel %vm2367, %v2453, %v2452
      %v2455 = vrot.slane %v2179, 2
      %v2456 = vsel %vm2370, %v2455, %v2454
      %v2457 = vrot.slane %v2183, 1
      %v2458 = vsel %vm2373, %v2457, %v2456
      %v2459 = vrot.slane %v2161, 7
      %v2460 = vsel %vm2355, %v2459, %v2157
      %v2461 = vrot.slane %v2165, 6
      %v2462 = vsel %vm2358, %v2461, %v2460
      %v2463 = vrot.slane %v2169, 5
      %v2464 = vsel %vm2361, %v2463, %v2462
      %v2465 = vrot.slane %v2173, 4
      %v2466 = vsel %vm2364, %v2465, %v2464
      %v2467 = vrot.slane %v2177, 3
      %v2468 = vsel %vm2367, %v2467, %v2466
      %v2469 = vrot.slane %v2181, 2
      %v2470 = vsel %vm2370, %v2469, %v2468
      %v2471 = vrot.slane %v2185, 1
      %v2472 = vsel %vm2373, %v2471, %v2470
      %v2473 = vrot.slane %v2191, 7
      %v2474 = vsel %vm2355, %v2473, %v2187
      %v2475 = vrot.slane %v2195, 6
      %v2476 = vsel %vm2358, %v2475, %v2474
      %v2477 = vrot.slane %v2199, 5
      %v2478 = vsel %vm2361, %v2477, %v2476
      %v2479 = vrot.slane %v2203, 4
      %v2480 = vsel %vm2364, %v2479, %v2478
      %v2481 = vrot.slane %v2207, 3
      %v2482 = vsel %vm2367, %v2481, %v2480
      %v2483 = vrot.slane %v2211, 2
      %v2484 = vsel %vm2370, %v2483, %v2482
      %v2485 = vrot.slane %v2215, 1
      %v2486 = vsel %vm2373, %v2485, %v2484
      %v2487 = vrot.slane %v2193, 7
      %v2488 = vsel %vm2355, %v2487, %v2189
      %v2489 = vrot.slane %v2197, 6
      %v2490 = vsel %vm2358, %v2489, %v2488
      %v2491 = vrot.slane %v2201, 5
      %v2492 = vsel %vm2361, %v2491, %v2490
      %v2493 = vrot.slane %v2205, 4
      %v2494 = vsel %vm2364, %v2493, %v2492
      %v2495 = vrot.slane %v2209, 3
      %v2496 = vsel %vm2367, %v2495, %v2494
      %v2497 = vrot.slane %v2213, 2
      %v2498 = vsel %vm2370, %v2497, %v2496
      %v2499 = vrot.slane %v2217, 1
      %v2500 = vsel %vm2373, %v2499, %v2498
      %v2501 = vrot.slane %v2223, 7
      %v2502 = vsel %vm2355, %v2501, %v2219
      %v2503 = vrot.slane %v2227, 6
      %v2504 = vsel %vm2358, %v2503, %v2502
      %v2505 = vrot.slane %v2231, 5
      %v2506 = vsel %vm2361, %v2505, %v2504
      %v2507 = vrot.slane %v2235, 4
      %v2508 = vsel %vm2364, %v2507, %v2506
      %v2509 = vrot.slane %v2239, 3
      %v2510 = vsel %vm2367, %v2509, %v2508
      %v2511 = vrot.slane %v2243, 2
      %v2512 = vsel %vm2370, %v2511, %v2510
      %v2513 = vrot.slane %v2247, 1
      %v2514 = vsel %vm2373, %v2513, %v2512
      %v2515 = vrot.slane %v2225, 7
      %v2516 = vsel %vm2355, %v2515, %v2221
      %v2517 = vrot.slane %v2229, 6
      %v2518 = vsel %vm2358, %v2517, %v2516
      %v2519 = vrot.slane %v2233, 5
      %v2520 = vsel %vm2361, %v2519, %v2518
      %v2521 = vrot.slane %v2237, 4
      %v2522 = vsel %vm2364, %v2521, %v2520
      %v2523 = vrot.slane %v2241, 3
      %v2524 = vsel %vm2367, %v2523, %v2522
      %v2525 = vrot.slane %v2245, 2
      %v2526 = vsel %vm2370, %v2525, %v2524
      %v2527 = vrot.slane %v2249, 1
      %v2528 = vsel %vm2373, %v2527, %v2526
      %v2543 = vadd.f32 %v2374, %v2402
      %v2544 = vadd.f32 %v2543, %v2430
      %v2545 = vadd.f32 %v2544, %v2458
      %v2546 = vadd.f32 %v2545, %v2486
      %v2547 = vadd.f32 %v2546, %v2514
      %vm2548 = vcmask 1040384
      %v2549 = vsel %vm2548, %v2251, 0.0
      %v2550 = vadd.f32 %v2547, %v2549
      %v2551 = vrot.slane %v2550, 4
      %v2552 = vadd.f32 %v2550, %v2551
      %v2553 = vrot.slane %v2552, 2
      %v2554 = vadd.f32 %v2552, %v2553
      %v2555 = vrot.slane %v2554, 1
      %v2556 = vadd.f32 %v2554, %v2555
      %v2557 = vadd.f32 %v2388, %v2416
      %v2558 = vadd.f32 %v2557, %v2444
      %v2559 = vadd.f32 %v2558, %v2472
      %v2560 = vadd.f32 %v2559, %v2500
      %v2561 = vadd.f32 %v2560, %v2528
      %v2562 = vsel %vm2548, %v2253, 0.0
      %v2563 = vadd.f32 %v2561, %v2562
      %v2564 = vrot.slane %v2563, 4
      %v2565 = vadd.f32 %v2563, %v2564
      %v2566 = vrot.slane %v2565, 2
      %v2567 = vadd.f32 %v2565, %v2566
      %v2568 = vrot.slane %v2567, 1
      %v2569 = vadd.f32 %v2567, %v2568
      %v2572 = vcombine.low %v2556, %v2569
      %v2574 = vunpack.c.l.s4 1966171168
      %v2575 = vunpack.c.0.s8 %v2574
      %v2576 = vlaneseq
      %v2577 = vshrl.u32 %v2576, 7
      %v2578 = vsub.s32 %v2575, %v2577
      %v2579 = vrot.slane %v2572, %v2578
      %v2581 = vunpack.c.l.s4 1966171168
      %v2582 = vunpack.c.0.s8 %v2581
      %v2583 = vlaneseq
      %v2584 = vshrl.u32 %v2583, 7
      %v2585 = vsub.s32 %v2582, %v2584
      %v2586 = vrot.slane %v2579, %v2585
      %v2588 = vadd.f32 %v2255, %v2586
      %v2589 = vlaneseq
      %vm2590 = vcmp.ge.s32.totalorder %v2589, 0
      %vm2591 = vcmp.lt.s32.totalorder %v2589, 256
      %vm2592 = vmand %vm2590, %vm2591
      %2593 = vst.msk [vmem:[#allocation3] sm:$0x3] %vm2592, %v2588
      %v2594 = vld [vmem:[#allocation4] sm:$0xf]
      %v2596 = vlaneseq
      %v2597 = vshrl.u32 %v2596, 7
      %v2598 = vsub.s32 0, %v2597
      %v2599 = vrot.slane %v1948, %v2598
      %v2600 = vlaneseq
      %v2601 = vshrl.u32 %v2600, 7
      %v2602 = vsub.s32 1, %v2601
      %v2603 = vrot.slane %v1948, %v2602
      %v2608 = vunpack.c.l.s4 1983009808
      %v2609 = vunpack.c.0.s8 %v2608
      %v2610 = vlaneseq
      %v2611 = vshrl.u32 %v2610, 7
      %v2612 = vsub.s32 %v2609, %v2611
      %v2613 = vrot.slane %v2594, %v2612
      %v2614 = vcombine.high %v2613, %v2613
      %v2617 = vmul.f32 %v2599, %v2613
      %v2618 = vmul.f32 %v2603, %v2614
      %v2619 = vld [vmem:[%s370] sm:$0xf]
      %v2620 = vld [vmem:[%s370 + $0x4] sm:$0xf]
      %v2621 = vld [vmem:[%s370 + $0x8] sm:$0xf]
      %v2622 = vld [vmem:[%s370 + $0xc] sm:$0xf]
      %v2623 = vld [vmem:[%s370 + $0x10] sm:$0xf]
      %v2624 = vld [vmem:[%s370 + $0x14] sm:$0xf]
      %v2625 = vld [vmem:[%s370 + $0x18] sm:$0xf]
      %v2626 = vld [vmem:[%s370 + $0x1c] sm:$0xf]
      %v2627 = vld [vmem:[%s370 + $0x20] sm:$0xf]
      %v2628 = vld [vmem:[%s370 + $0x24] sm:$0xf]
      %v2629 = vld [vmem:[%s370 + $0x28] sm:$0xf]
      %v2630 = vld [vmem:[%s370 + $0x2c] sm:$0xf]
      %v2631 = vld [vmem:[%s370 + $0x30] sm:$0xf]
      %v2632 = vld [vmem:[%s370 + $0x34] sm:$0xf]
      %v2633 = vld [vmem:[%s370 + $0x38] sm:$0xf]
      %v2634 = vld [vmem:[%s370 + $0x3c] sm:$0xf]
      %v2635 = vld [vmem:[%s370 + $0x40] sm:$0xf]
      %v2636 = vld [vmem:[%s370 + $0x44] sm:$0xf]
      %v2637 = vld [vmem:[%s370 + $0x48] sm:$0xf]
      %v2638 = vld [vmem:[%s370 + $0x4c] sm:$0xf]
      %v2639 = vld [vmem:[%s370 + $0x50] sm:$0xf]
      %v2640 = vld [vmem:[%s370 + $0x54] sm:$0xf]
      %v2641 = vld [vmem:[%s370 + $0x58] sm:$0xf]
      %v2642 = vld [vmem:[%s370 + $0x5c] sm:$0xf]
      %v2643 = vld [vmem:[%s370 + $0x60] sm:$0xf]
      %v2644 = vld [vmem:[%s370 + $0x64] sm:$0xf]
      %v2645 = vld [vmem:[%s370 + $0x68] sm:$0xf]
      %v2646 = vld [vmem:[%s370 + $0x6c] sm:$0xf]
      %v2647 = vld [vmem:[%s370 + $0x70] sm:$0xf]
      %v2648 = vld [vmem:[%s370 + $0x74] sm:$0xf]
      %v2649 = vld [vmem:[%s370 + $0x78] sm:$0xf]
      %v2650 = vld [vmem:[%s370 + $0x7c] sm:$0xf]
      %v2651 = vld [vmem:[%s370 + $0x80] sm:$0xf]
      %v2652 = vld [vmem:[%s370 + $0x84] sm:$0xf]
      %v2653 = vld [vmem:[%s370 + $0x88] sm:$0xf]
      %v2654 = vld [vmem:[%s370 + $0x8c] sm:$0xf]
      %v2655 = vld [vmem:[%s370 + $0x90] sm:$0xf]
      %v2656 = vld [vmem:[%s370 + $0x94] sm:$0xf]
      %v2657 = vld [vmem:[%s370 + $0x98] sm:$0xf]
      %v2658 = vld [vmem:[%s370 + $0x9c] sm:$0xf]
      %v2659 = vld [vmem:[%s370 + $0xa0] sm:$0xf]
      %v2660 = vld [vmem:[%s370 + $0xa4] sm:$0xf]
      %v2661 = vld [vmem:[%s370 + $0xa8] sm:$0xf]
      %v2662 = vld [vmem:[%s370 + $0xac] sm:$0xf]
      %v2663 = vld [vmem:[%s370 + $0xb0] sm:$0xf]
      %v2664 = vld [vmem:[%s370 + $0xb4] sm:$0xf]
      %v2665 = vld [vmem:[%s370 + $0xb8] sm:$0xf]
      %v2666 = vld [vmem:[%s370 + $0xbc] sm:$0xf]
      %v2667 = vld [vmem:[%s370 + $0xc0] sm:$0xf]
      %v2668 = vlaneseq
      %v2669 = vshrl.u32 %v2668, 7
      %v2670 = vsub.s32 0, %v2669
      %v2671 = vrot.slane %v2059, %v2670
      %v2672 = vlaneseq
      %v2673 = vshrl.u32 %v2672, 7
      %v2674 = vsub.s32 0, %v2673
      %v2675 = vrot.slane %v2061, %v2674
      %v2676 = vlaneseq
      %v2677 = vshrl.u32 %v2676, 7
      %v2678 = vsub.s32 0, %v2677
      %v2679 = vrot.slane %v2063, %v2678
      %v2680 = vlaneseq
      %v2681 = vshrl.u32 %v2680, 7
      %v2682 = vsub.s32 0, %v2681
      %v2683 = vrot.slane %v2065, %v2682
      %v2684 = vlaneseq
      %v2685 = vshrl.u32 %v2684, 7
      %v2686 = vsub.s32 0, %v2685
      %v2687 = vrot.slane %v2067, %v2686
      %v2688 = vlaneseq
      %v2689 = vshrl.u32 %v2688, 7
      %v2690 = vsub.s32 0, %v2689
      %v2691 = vrot.slane %v2069, %v2690
      %v2692 = vlaneseq
      %v2693 = vshrl.u32 %v2692, 7
      %v2694 = vsub.s32 0, %v2693
      %v2695 = vrot.slane %v2071, %v2694
      %v2696 = vlaneseq
      %v2697 = vshrl.u32 %v2696, 7
      %v2698 = vsub.s32 0, %v2697
      %v2699 = vrot.slane %v2073, %v2698
      %v2700 = vlaneseq
      %v2701 = vshrl.u32 %v2700, 7
      %v2702 = vsub.s32 0, %v2701
      %v2703 = vrot.slane %v2075, %v2702
      %v2704 = vlaneseq
      %v2705 = vshrl.u32 %v2704, 7
      %v2706 = vsub.s32 0, %v2705
      %v2707 = vrot.slane %v2077, %v2706
      %v2708 = vlaneseq
      %v2709 = vshrl.u32 %v2708, 7
      %v2710 = vsub.s32 0, %v2709
      %v2711 = vrot.slane %v2079, %v2710
      %v2712 = vlaneseq
      %v2713 = vshrl.u32 %v2712, 7
      %v2714 = vsub.s32 0, %v2713
      %v2715 = vrot.slane %v2081, %v2714
      %v2716 = vlaneseq
      %v2717 = vshrl.u32 %v2716, 7
      %v2718 = vsub.s32 0, %v2717
      %v2719 = vrot.slane %v2083, %v2718
      %v2720 = vlaneseq
      %v2721 = vshrl.u32 %v2720, 7
      %v2722 = vsub.s32 0, %v2721
      %v2723 = vrot.slane %v2085, %v2722
      %v2724 = vlaneseq
      %v2725 = vshrl.u32 %v2724, 7
      %v2726 = vsub.s32 0, %v2725
      %v2727 = vrot.slane %v2087, %v2726
      %v2728 = vlaneseq
      %v2729 = vshrl.u32 %v2728, 7
      %v2730 = vsub.s32 0, %v2729
      %v2731 = vrot.slane %v2089, %v2730
      %v2732 = vlaneseq
      %v2733 = vshrl.u32 %v2732, 7
      %v2734 = vsub.s32 0, %v2733
      %v2735 = vrot.slane %v2091, %v2734
      %v2736 = vlaneseq
      %v2737 = vshrl.u32 %v2736, 7
      %v2738 = vsub.s32 0, %v2737
      %v2739 = vrot.slane %v2093, %v2738
      %v2740 = vlaneseq
      %v2741 = vshrl.u32 %v2740, 7
      %v2742 = vsub.s32 0, %v2741
      %v2743 = vrot.slane %v2095, %v2742
      %v2744 = vlaneseq
      %v2745 = vshrl.u32 %v2744, 7
      %v2746 = vsub.s32 0, %v2745
      %v2747 = vrot.slane %v2097, %v2746
      %v2748 = vlaneseq
      %v2749 = vshrl.u32 %v2748, 7
      %v2750 = vsub.s32 0, %v2749
      %v2751 = vrot.slane %v2099, %v2750
      %v2752 = vlaneseq
      %v2753 = vshrl.u32 %v2752, 7
      %v2754 = vsub.s32 0, %v2753
      %v2755 = vrot.slane %v2101, %v2754
      %v2756 = vlaneseq
      %v2757 = vshrl.u32 %v2756, 7
      %v2758 = vsub.s32 0, %v2757
      %v2759 = vrot.slane %v2103, %v2758
      %v2760 = vlaneseq
      %v2761 = vshrl.u32 %v2760, 7
      %v2762 = vsub.s32 0, %v2761
      %v2763 = vrot.slane %v2105, %v2762
      %v2764 = vlaneseq
      %v2765 = vshrl.u32 %v2764, 7
      %v2766 = vsub.s32 0, %v2765
      %v2767 = vrot.slane %v2107, %v2766
      %v2768 = vlaneseq
      %v2769 = vshrl.u32 %v2768, 7
      %v2770 = vsub.s32 0, %v2769
      %v2771 = vrot.slane %v2109, %v2770
      %v2772 = vlaneseq
      %v2773 = vshrl.u32 %v2772, 7
      %v2774 = vsub.s32 0, %v2773
      %v2775 = vrot.slane %v2111, %v2774
      %v2776 = vlaneseq
      %v2777 = vshrl.u32 %v2776, 7
      %v2778 = vsub.s32 0, %v2777
      %v2779 = vrot.slane %v2113, %v2778
      %v2780 = vlaneseq
      %v2781 = vshrl.u32 %v2780, 7
      %v2782 = vsub.s32 0, %v2781
      %v2783 = vrot.slane %v2115, %v2782
      %v2784 = vlaneseq
      %v2785 = vshrl.u32 %v2784, 7
      %v2786 = vsub.s32 0, %v2785
      %v2787 = vrot.slane %v2117, %v2786
      %v2788 = vlaneseq
      %v2789 = vshrl.u32 %v2788, 7
      %v2790 = vsub.s32 0, %v2789
      %v2791 = vrot.slane %v2119, %v2790
      %v2792 = vlaneseq
      %v2793 = vshrl.u32 %v2792, 7
      %v2794 = vsub.s32 0, %v2793
      %v2795 = vrot.slane %v2121, %v2794
      %v2796 = vlaneseq
      %v2797 = vshrl.u32 %v2796, 7
      %v2798 = vsub.s32 0, %v2797
      %v2799 = vrot.slane %v2123, %v2798
      %v2800 = vlaneseq
      %v2801 = vshrl.u32 %v2800, 7
      %v2802 = vsub.s32 0, %v2801
      %v2803 = vrot.slane %v2125, %v2802
      %v2804 = vlaneseq
      %v2805 = vshrl.u32 %v2804, 7
      %v2806 = vsub.s32 0, %v2805
      %v2807 = vrot.slane %v2127, %v2806
      %v2808 = vlaneseq
      %v2809 = vshrl.u32 %v2808, 7
      %v2810 = vsub.s32 0, %v2809
      %v2811 = vrot.slane %v2129, %v2810
      %v2812 = vlaneseq
      %v2813 = vshrl.u32 %v2812, 7
      %v2814 = vsub.s32 0, %v2813
      %v2815 = vrot.slane %v2131, %v2814
      %v2816 = vlaneseq
      %v2817 = vshrl.u32 %v2816, 7
      %v2818 = vsub.s32 0, %v2817
      %v2819 = vrot.slane %v2133, %v2818
      %v2820 = vlaneseq
      %v2821 = vshrl.u32 %v2820, 7
      %v2822 = vsub.s32 0, %v2821
      %v2823 = vrot.slane %v2135, %v2822
      %v2824 = vlaneseq
      %v2825 = vshrl.u32 %v2824, 7
      %v2826 = vsub.s32 0, %v2825
      %v2827 = vrot.slane %v2137, %v2826
      %v2828 = vlaneseq
      %v2829 = vshrl.u32 %v2828, 7
      %v2830 = vsub.s32 0, %v2829
      %v2831 = vrot.slane %v2139, %v2830
      %v2832 = vlaneseq
      %v2833 = vshrl.u32 %v2832, 7
      %v2834 = vsub.s32 0, %v2833
      %v2835 = vrot.slane %v2141, %v2834
      %v2836 = vlaneseq
      %v2837 = vshrl.u32 %v2836, 7
      %v2838 = vsub.s32 0, %v2837
      %v2839 = vrot.slane %v2143, %v2838
      %v2840 = vlaneseq
      %v2841 = vshrl.u32 %v2840, 7
      %v2842 = vsub.s32 0, %v2841
      %v2843 = vrot.slane %v2145, %v2842
      %v2844 = vlaneseq
      %v2845 = vshrl.u32 %v2844, 7
      %v2846 = vsub.s32 0, %v2845
      %v2847 = vrot.slane %v2147, %v2846
      %v2848 = vlaneseq
      %v2849 = vshrl.u32 %v2848, 7
      %v2850 = vsub.s32 0, %v2849
      %v2851 = vrot.slane %v2149, %v2850
      %v2852 = vlaneseq
      %v2853 = vshrl.u32 %v2852, 7
      %v2854 = vsub.s32 0, %v2853
      %v2855 = vrot.slane %v2151, %v2854
      %v2856 = vlaneseq
      %v2857 = vshrl.u32 %v2856, 7
      %v2858 = vsub.s32 0, %v2857
      %v2859 = vrot.slane %v2153, %v2858
      %v2860 = vlaneseq
      %v2861 = vshrl.u32 %v2860, 7
      %v2862 = vsub.s32 0, %v2861
      %v2863 = vrot.slane %v2155, %v2862
      %v2864 = vlaneseq
      %v2865 = vshrl.u32 %v2864, 7
      %v2866 = vsub.s32 0, %v2865
      %v2867 = vrot.slane %v2157, %v2866
      %v2868 = vlaneseq
      %v2869 = vshrl.u32 %v2868, 7
      %v2870 = vsub.s32 0, %v2869
      %v2871 = vrot.slane %v2159, %v2870
      %v2872 = vlaneseq
      %v2873 = vshrl.u32 %v2872, 7
      %v2874 = vsub.s32 0, %v2873
      %v2875 = vrot.slane %v2161, %v2874
      %v2876 = vlaneseq
      %v2877 = vshrl.u32 %v2876, 7
      %v2878 = vsub.s32 0, %v2877
      %v2879 = vrot.slane %v2163, %v2878
      %v2880 = vlaneseq
      %v2881 = vshrl.u32 %v2880, 7
      %v2882 = vsub.s32 0, %v2881
      %v2883 = vrot.slane %v2165, %v2882
      %v2884 = vlaneseq
      %v2885 = vshrl.u32 %v2884, 7
      %v2886 = vsub.s32 0, %v2885
      %v2887 = vrot.slane %v2167, %v2886
      %v2888 = vlaneseq
      %v2889 = vshrl.u32 %v2888, 7
      %v2890 = vsub.s32 0, %v2889
      %v2891 = vrot.slane %v2169, %v2890
      %v2892 = vlaneseq
      %v2893 = vshrl.u32 %v2892, 7
      %v2894 = vsub.s32 0, %v2893
      %v2895 = vrot.slane %v2171, %v2894
      %v2896 = vlaneseq
      %v2897 = vshrl.u32 %v2896, 7
      %v2898 = vsub.s32 0, %v2897
      %v2899 = vrot.slane %v2173, %v2898
      %v2900 = vlaneseq
      %v2901 = vshrl.u32 %v2900, 7
      %v2902 = vsub.s32 0, %v2901
      %v2903 = vrot.slane %v2175, %v2902
      %v2904 = vlaneseq
      %v2905 = vshrl.u32 %v2904, 7
      %v2906 = vsub.s32 0, %v2905
      %v2907 = vrot.slane %v2177, %v2906
      %v2908 = vlaneseq
      %v2909 = vshrl.u32 %v2908, 7
      %v2910 = vsub.s32 0, %v2909
      %v2911 = vrot.slane %v2179, %v2910
      %v2912 = vlaneseq
      %v2913 = vshrl.u32 %v2912, 7
      %v2914 = vsub.s32 0, %v2913
      %v2915 = vrot.slane %v2181, %v2914
      %v2916 = vlaneseq
      %v2917 = vshrl.u32 %v2916, 7
      %v2918 = vsub.s32 0, %v2917
      %v2919 = vrot.slane %v2183, %v2918
      %v2920 = vlaneseq
      %v2921 = vshrl.u32 %v2920, 7
      %v2922 = vsub.s32 0, %v2921
      %v2923 = vrot.slane %v2185, %v2922
      %v2924 = vlaneseq
      %v2925 = vshrl.u32 %v2924, 7
      %v2926 = vsub.s32 0, %v2925
      %v2927 = vrot.slane %v2187, %v2926
      %v2928 = vlaneseq
      %v2929 = vshrl.u32 %v2928, 7
      %v2930 = vsub.s32 0, %v2929
      %v2931 = vrot.slane %v2189, %v2930
      %v2932 = vlaneseq
      %v2933 = vshrl.u32 %v2932, 7
      %v2934 = vsub.s32 0, %v2933
      %v2935 = vrot.slane %v2191, %v2934
      %v2936 = vlaneseq
      %v2937 = vshrl.u32 %v2936, 7
      %v2938 = vsub.s32 0, %v2937
      %v2939 = vrot.slane %v2193, %v2938
      %v2940 = vlaneseq
      %v2941 = vshrl.u32 %v2940, 7
      %v2942 = vsub.s32 0, %v2941
      %v2943 = vrot.slane %v2195, %v2942
      %v2944 = vlaneseq
      %v2945 = vshrl.u32 %v2944, 7
      %v2946 = vsub.s32 0, %v2945
      %v2947 = vrot.slane %v2197, %v2946
      %v2948 = vlaneseq
      %v2949 = vshrl.u32 %v2948, 7
      %v2950 = vsub.s32 0, %v2949
      %v2951 = vrot.slane %v2199, %v2950
      %v2952 = vlaneseq
      %v2953 = vshrl.u32 %v2952, 7
      %v2954 = vsub.s32 0, %v2953
      %v2955 = vrot.slane %v2201, %v2954
      %v2956 = vlaneseq
      %v2957 = vshrl.u32 %v2956, 7
      %v2958 = vsub.s32 0, %v2957
      %v2959 = vrot.slane %v2203, %v2958
      %v2960 = vlaneseq
      %v2961 = vshrl.u32 %v2960, 7
      %v2962 = vsub.s32 0, %v2961
      %v2963 = vrot.slane %v2205, %v2962
      %v2964 = vlaneseq
      %v2965 = vshrl.u32 %v2964, 7
      %v2966 = vsub.s32 0, %v2965
      %v2967 = vrot.slane %v2207, %v2966
      %v2968 = vlaneseq
      %v2969 = vshrl.u32 %v2968, 7
      %v2970 = vsub.s32 0, %v2969
      %v2971 = vrot.slane %v2209, %v2970
      %v2972 = vlaneseq
      %v2973 = vshrl.u32 %v2972, 7
      %v2974 = vsub.s32 0, %v2973
      %v2975 = vrot.slane %v2211, %v2974
      %v2976 = vlaneseq
      %v2977 = vshrl.u32 %v2976, 7
      %v2978 = vsub.s32 0, %v2977
      %v2979 = vrot.slane %v2213, %v2978
      %v2980 = vlaneseq
      %v2981 = vshrl.u32 %v2980, 7
      %v2982 = vsub.s32 0, %v2981
      %v2983 = vrot.slane %v2215, %v2982
      %v2984 = vlaneseq
      %v2985 = vshrl.u32 %v2984, 7
      %v2986 = vsub.s32 0, %v2985
      %v2987 = vrot.slane %v2217, %v2986
      %v2988 = vlaneseq
      %v2989 = vshrl.u32 %v2988, 7
      %v2990 = vsub.s32 0, %v2989
      %v2991 = vrot.slane %v2219, %v2990
      %v2992 = vlaneseq
      %v2993 = vshrl.u32 %v2992, 7
      %v2994 = vsub.s32 0, %v2993
      %v2995 = vrot.slane %v2221, %v2994
      %v2996 = vlaneseq
      %v2997 = vshrl.u32 %v2996, 7
      %v2998 = vsub.s32 0, %v2997
      %v2999 = vrot.slane %v2223, %v2998
      %v3000 = vlaneseq
      %v3001 = vshrl.u32 %v3000, 7
      %v3002 = vsub.s32 0, %v3001
      %v3003 = vrot.slane %v2225, %v3002
      %v3004 = vlaneseq
      %v3005 = vshrl.u32 %v3004, 7
      %v3006 = vsub.s32 0, %v3005
      %v3007 = vrot.slane %v2227, %v3006
      %v3008 = vlaneseq
      %v3009 = vshrl.u32 %v3008, 7
      %v3010 = vsub.s32 0, %v3009
      %v3011 = vrot.slane %v2229, %v3010
      %v3012 = vlaneseq
      %v3013 = vshrl.u32 %v3012, 7
      %v3014 = vsub.s32 0, %v3013
      %v3015 = vrot.slane %v2231, %v3014
      %v3016 = vlaneseq
      %v3017 = vshrl.u32 %v3016, 7
      %v3018 = vsub.s32 0, %v3017
      %v3019 = vrot.slane %v2233, %v3018
      %v3020 = vlaneseq
      %v3021 = vshrl.u32 %v3020, 7
      %v3022 = vsub.s32 0, %v3021
      %v3023 = vrot.slane %v2235, %v3022
      %v3024 = vlaneseq
      %v3025 = vshrl.u32 %v3024, 7
      %v3026 = vsub.s32 0, %v3025
      %v3027 = vrot.slane %v2237, %v3026
      %v3028 = vlaneseq
      %v3029 = vshrl.u32 %v3028, 7
      %v3030 = vsub.s32 0, %v3029
      %v3031 = vrot.slane %v2239, %v3030
      %v3032 = vlaneseq
      %v3033 = vshrl.u32 %v3032, 7
      %v3034 = vsub.s32 0, %v3033
      %v3035 = vrot.slane %v2241, %v3034
      %v3036 = vlaneseq
      %v3037 = vshrl.u32 %v3036, 7
      %v3038 = vsub.s32 0, %v3037
      %v3039 = vrot.slane %v2243, %v3038
      %v3040 = vlaneseq
      %v3041 = vshrl.u32 %v3040, 7
      %v3042 = vsub.s32 0, %v3041
      %v3043 = vrot.slane %v2245, %v3042
      %v3044 = vlaneseq
      %v3045 = vshrl.u32 %v3044, 7
      %v3046 = vsub.s32 0, %v3045
      %v3047 = vrot.slane %v2247, %v3046
      %v3048 = vlaneseq
      %v3049 = vshrl.u32 %v3048, 7
      %v3050 = vsub.s32 0, %v3049
      %v3051 = vrot.slane %v2249, %v3050
      %v3052 = vlaneseq
      %v3053 = vshrl.u32 %v3052, 7
      %v3054 = vsub.s32 0, %v3053
      %v3055 = vrot.slane %v2251, %v3054
      %v3056 = vlaneseq
      %v3057 = vshrl.u32 %v3056, 7
      %v3058 = vsub.s32 0, %v3057
      %v3059 = vrot.slane %v2253, %v3058
      %v3110 = vunpack.c.l.s4 1983009808
      %v3111 = vunpack.c.0.s8 %v3110
      %v3112 = vlaneseq
      %v3113 = vshrl.u32 %v3112, 7
      %v3114 = vsub.s32 %v3111, %v3113
      %v3115 = vrot.slane %v2619, %v3114
      %v3116 = vcombine.high %v3115, %v3115
      %v3118 = vunpack.c.l.s4 1983009808
      %v3119 = vunpack.c.0.s8 %v3118
      %v3120 = vlaneseq
      %v3121 = vshrl.u32 %v3120, 7
      %v3122 = vsub.s32 %v3119, %v3121
      %v3123 = vrot.slane %v2620, %v3122
      %v3124 = vcombine.high %v3123, %v3123
      %v3126 = vunpack.c.l.s4 1983009808
      %v3127 = vunpack.c.0.s8 %v3126
      %v3128 = vlaneseq
      %v3129 = vshrl.u32 %v3128, 7
      %v3130 = vsub.s32 %v3127, %v3129
      %v3131 = vrot.slane %v2621, %v3130
      %v3132 = vcombine.high %v3131, %v3131
      %v3134 = vunpack.c.l.s4 1983009808
      %v3135 = vunpack.c.0.s8 %v3134
      %v3136 = vlaneseq
      %v3137 = vshrl.u32 %v3136, 7
      %v3138 = vsub.s32 %v3135, %v3137
      %v3139 = vrot.slane %v2622, %v3138
      %v3140 = vcombine.high %v3139, %v3139
      %v3142 = vunpack.c.l.s4 1983009808
      %v3143 = vunpack.c.0.s8 %v3142
      %v3144 = vlaneseq
      %v3145 = vshrl.u32 %v3144, 7
      %v3146 = vsub.s32 %v3143, %v3145
      %v3147 = vrot.slane %v2623, %v3146
      %v3148 = vcombine.high %v3147, %v3147
      %v3150 = vunpack.c.l.s4 1983009808
      %v3151 = vunpack.c.0.s8 %v3150
      %v3152 = vlaneseq
      %v3153 = vshrl.u32 %v3152, 7
      %v3154 = vsub.s32 %v3151, %v3153
      %v3155 = vrot.slane %v2624, %v3154
      %v3156 = vcombine.high %v3155, %v3155
      %v3158 = vunpack.c.l.s4 1983009808
      %v3159 = vunpack.c.0.s8 %v3158
      %v3160 = vlaneseq
      %v3161 = vshrl.u32 %v3160, 7
      %v3162 = vsub.s32 %v3159, %v3161
      %v3163 = vrot.slane %v2625, %v3162
      %v3164 = vcombine.high %v3163, %v3163
      %v3166 = vunpack.c.l.s4 1983009808
      %v3167 = vunpack.c.0.s8 %v3166
      %v3168 = vlaneseq
      %v3169 = vshrl.u32 %v3168, 7
      %v3170 = vsub.s32 %v3167, %v3169
      %v3171 = vrot.slane %v2626, %v3170
      %v3172 = vcombine.high %v3171, %v3171
      %v3174 = vunpack.c.l.s4 1983009808
      %v3175 = vunpack.c.0.s8 %v3174
      %v3176 = vlaneseq
      %v3177 = vshrl.u32 %v3176, 7
      %v3178 = vsub.s32 %v3175, %v3177
      %v3179 = vrot.slane %v2627, %v3178
      %v3180 = vcombine.high %v3179, %v3179
      %v3182 = vunpack.c.l.s4 1983009808
      %v3183 = vunpack.c.0.s8 %v3182
      %v3184 = vlaneseq
      %v3185 = vshrl.u32 %v3184, 7
      %v3186 = vsub.s32 %v3183, %v3185
      %v3187 = vrot.slane %v2628, %v3186
      %v3188 = vcombine.high %v3187, %v3187
      %v3190 = vunpack.c.l.s4 1983009808
      %v3191 = vunpack.c.0.s8 %v3190
      %v3192 = vlaneseq
      %v3193 = vshrl.u32 %v3192, 7
      %v3194 = vsub.s32 %v3191, %v3193
      %v3195 = vrot.slane %v2629, %v3194
      %v3196 = vcombine.high %v3195, %v3195
      %v3198 = vunpack.c.l.s4 1983009808
      %v3199 = vunpack.c.0.s8 %v3198
      %v3200 = vlaneseq
      %v3201 = vshrl.u32 %v3200, 7
      %v3202 = vsub.s32 %v3199, %v3201
      %v3203 = vrot.slane %v2630, %v3202
      %v3204 = vcombine.high %v3203, %v3203
      %v3206 = vunpack.c.l.s4 1983009808
      %v3207 = vunpack.c.0.s8 %v3206
      %v3208 = vlaneseq
      %v3209 = vshrl.u32 %v3208, 7
      %v3210 = vsub.s32 %v3207, %v3209
      %v3211 = vrot.slane %v2631, %v3210
      %v3212 = vcombine.high %v3211, %v3211
      %v3214 = vunpack.c.l.s4 1983009808
      %v3215 = vunpack.c.0.s8 %v3214
      %v3216 = vlaneseq
      %v3217 = vshrl.u32 %v3216, 7
      %v3218 = vsub.s32 %v3215, %v3217
      %v3219 = vrot.slane %v2632, %v3218
      %v3220 = vcombine.high %v3219, %v3219
      %v3222 = vunpack.c.l.s4 1983009808
      %v3223 = vunpack.c.0.s8 %v3222
      %v3224 = vlaneseq
      %v3225 = vshrl.u32 %v3224, 7
      %v3226 = vsub.s32 %v3223, %v3225
      %v3227 = vrot.slane %v2633, %v3226
      %v3228 = vcombine.high %v3227, %v3227
      %v3230 = vunpack.c.l.s4 1983009808
      %v3231 = vunpack.c.0.s8 %v3230
      %v3232 = vlaneseq
      %v3233 = vshrl.u32 %v3232, 7
      %v3234 = vsub.s32 %v3231, %v3233
      %v3235 = vrot.slane %v2634, %v3234
      %v3236 = vcombine.high %v3235, %v3235
      %v3238 = vunpack.c.l.s4 1983009808
      %v3239 = vunpack.c.0.s8 %v3238
      %v3240 = vlaneseq
      %v3241 = vshrl.u32 %v3240, 7
      %v3242 = vsub.s32 %v3239, %v3241
      %v3243 = vrot.slane %v2635, %v3242
      %v3244 = vcombine.high %v3243, %v3243
      %v3246 = vunpack.c.l.s4 1983009808
      %v3247 = vunpack.c.0.s8 %v3246
      %v3248 = vlaneseq
      %v3249 = vshrl.u32 %v3248, 7
      %v3250 = vsub.s32 %v3247, %v3249
      %v3251 = vrot.slane %v2636, %v3250
      %v3252 = vcombine.high %v3251, %v3251
      %v3254 = vunpack.c.l.s4 1983009808
      %v3255 = vunpack.c.0.s8 %v3254
      %v3256 = vlaneseq
      %v3257 = vshrl.u32 %v3256, 7
      %v3258 = vsub.s32 %v3255, %v3257
      %v3259 = vrot.slane %v2637, %v3258
      %v3260 = vcombine.high %v3259, %v3259
      %v3262 = vunpack.c.l.s4 1983009808
      %v3263 = vunpack.c.0.s8 %v3262
      %v3264 = vlaneseq
      %v3265 = vshrl.u32 %v3264, 7
      %v3266 = vsub.s32 %v3263, %v3265
      %v3267 = vrot.slane %v2638, %v3266
      %v3268 = vcombine.high %v3267, %v3267
      %v3270 = vunpack.c.l.s4 1983009808
      %v3271 = vunpack.c.0.s8 %v3270
      %v3272 = vlaneseq
      %v3273 = vshrl.u32 %v3272, 7
      %v3274 = vsub.s32 %v3271, %v3273
      %v3275 = vrot.slane %v2639, %v3274
      %v3276 = vcombine.high %v3275, %v3275
      %v3278 = vunpack.c.l.s4 1983009808
      %v3279 = vunpack.c.0.s8 %v3278
      %v3280 = vlaneseq
      %v3281 = vshrl.u32 %v3280, 7
      %v3282 = vsub.s32 %v3279, %v3281
      %v3283 = vrot.slane %v2640, %v3282
      %v3284 = vcombine.high %v3283, %v3283
      %v3286 = vunpack.c.l.s4 1983009808
      %v3287 = vunpack.c.0.s8 %v3286
      %v3288 = vlaneseq
      %v3289 = vshrl.u32 %v3288, 7
      %v3290 = vsub.s32 %v3287, %v3289
      %v3291 = vrot.slane %v2641, %v3290
      %v3292 = vcombine.high %v3291, %v3291
      %v3294 = vunpack.c.l.s4 1983009808
      %v3295 = vunpack.c.0.s8 %v3294
      %v3296 = vlaneseq
      %v3297 = vshrl.u32 %v3296, 7
      %v3298 = vsub.s32 %v3295, %v3297
      %v3299 = vrot.slane %v2642, %v3298
      %v3300 = vcombine.high %v3299, %v3299
      %v3302 = vunpack.c.l.s4 1983009808
      %v3303 = vunpack.c.0.s8 %v3302
      %v3304 = vlaneseq
      %v3305 = vshrl.u32 %v3304, 7
      %v3306 = vsub.s32 %v3303, %v3305
      %v3307 = vrot.slane %v2643, %v3306
      %v3308 = vcombine.high %v3307, %v3307
      %v3310 = vunpack.c.l.s4 1983009808
      %v3311 = vunpack.c.0.s8 %v3310
      %v3312 = vlaneseq
      %v3313 = vshrl.u32 %v3312, 7
      %v3314 = vsub.s32 %v3311, %v3313
      %v3315 = vrot.slane %v2644, %v3314
      %v3316 = vcombine.high %v3315, %v3315
      %v3318 = vunpack.c.l.s4 1983009808
      %v3319 = vunpack.c.0.s8 %v3318
      %v3320 = vlaneseq
      %v3321 = vshrl.u32 %v3320, 7
      %v3322 = vsub.s32 %v3319, %v3321
      %v3323 = vrot.slane %v2645, %v3322
      %v3324 = vcombine.high %v3323, %v3323
      %v3326 = vunpack.c.l.s4 1983009808
      %v3327 = vunpack.c.0.s8 %v3326
      %v3328 = vlaneseq
      %v3329 = vshrl.u32 %v3328, 7
      %v3330 = vsub.s32 %v3327, %v3329
      %v3331 = vrot.slane %v2646, %v3330
      %v3332 = vcombine.high %v3331, %v3331
      %v3334 = vunpack.c.l.s4 1983009808
      %v3335 = vunpack.c.0.s8 %v3334
      %v3336 = vlaneseq
      %v3337 = vshrl.u32 %v3336, 7
      %v3338 = vsub.s32 %v3335, %v3337
      %v3339 = vrot.slane %v2647, %v3338
      %v3340 = vcombine.high %v3339, %v3339
      %v3342 = vunpack.c.l.s4 1983009808
      %v3343 = vunpack.c.0.s8 %v3342
      %v3344 = vlaneseq
      %v3345 = vshrl.u32 %v3344, 7
      %v3346 = vsub.s32 %v3343, %v3345
      %v3347 = vrot.slane %v2648, %v3346
      %v3348 = vcombine.high %v3347, %v3347
      %v3350 = vunpack.c.l.s4 1983009808
      %v3351 = vunpack.c.0.s8 %v3350
      %v3352 = vlaneseq
      %v3353 = vshrl.u32 %v3352, 7
      %v3354 = vsub.s32 %v3351, %v3353
      %v3355 = vrot.slane %v2649, %v3354
      %v3356 = vcombine.high %v3355, %v3355
      %v3358 = vunpack.c.l.s4 1983009808
      %v3359 = vunpack.c.0.s8 %v3358
      %v3360 = vlaneseq
      %v3361 = vshrl.u32 %v3360, 7
      %v3362 = vsub.s32 %v3359, %v3361
      %v3363 = vrot.slane %v2650, %v3362
      %v3364 = vcombine.high %v3363, %v3363
      %v3366 = vunpack.c.l.s4 1983009808
      %v3367 = vunpack.c.0.s8 %v3366
      %v3368 = vlaneseq
      %v3369 = vshrl.u32 %v3368, 7
      %v3370 = vsub.s32 %v3367, %v3369
      %v3371 = vrot.slane %v2651, %v3370
      %v3372 = vcombine.high %v3371, %v3371
      %v3374 = vunpack.c.l.s4 1983009808
      %v3375 = vunpack.c.0.s8 %v3374
      %v3376 = vlaneseq
      %v3377 = vshrl.u32 %v3376, 7
      %v3378 = vsub.s32 %v3375, %v3377
      %v3379 = vrot.slane %v2652, %v3378
      %v3380 = vcombine.high %v3379, %v3379
      %v3382 = vunpack.c.l.s4 1983009808
      %v3383 = vunpack.c.0.s8 %v3382
      %v3384 = vlaneseq
      %v3385 = vshrl.u32 %v3384, 7
      %v3386 = vsub.s32 %v3383, %v3385
      %v3387 = vrot.slane %v2653, %v3386
      %v3388 = vcombine.high %v3387, %v3387
      %v3390 = vunpack.c.l.s4 1983009808
      %v3391 = vunpack.c.0.s8 %v3390
      %v3392 = vlaneseq
      %v3393 = vshrl.u32 %v3392, 7
      %v3394 = vsub.s32 %v3391, %v3393
      %v3395 = vrot.slane %v2654, %v3394
      %v3396 = vcombine.high %v3395, %v3395
      %v3398 = vunpack.c.l.s4 1983009808
      %v3399 = vunpack.c.0.s8 %v3398
      %v3400 = vlaneseq
      %v3401 = vshrl.u32 %v3400, 7
      %v3402 = vsub.s32 %v3399, %v3401
      %v3403 = vrot.slane %v2655, %v3402
      %v3404 = vcombine.high %v3403, %v3403
      %v3406 = vunpack.c.l.s4 1983009808
      %v3407 = vunpack.c.0.s8 %v3406
      %v3408 = vlaneseq
      %v3409 = vshrl.u32 %v3408, 7
      %v3410 = vsub.s32 %v3407, %v3409
      %v3411 = vrot.slane %v2656, %v3410
      %v3412 = vcombine.high %v3411, %v3411
      %v3414 = vunpack.c.l.s4 1983009808
      %v3415 = vunpack.c.0.s8 %v3414
      %v3416 = vlaneseq
      %v3417 = vshrl.u32 %v3416, 7
      %v3418 = vsub.s32 %v3415, %v3417
      %v3419 = vrot.slane %v2657, %v3418
      %v3420 = vcombine.high %v3419, %v3419
      %v3422 = vunpack.c.l.s4 1983009808
      %v3423 = vunpack.c.0.s8 %v3422
      %v3424 = vlaneseq
      %v3425 = vshrl.u32 %v3424, 7
      %v3426 = vsub.s32 %v3423, %v3425
      %v3427 = vrot.slane %v2658, %v3426
      %v3428 = vcombine.high %v3427, %v3427
      %v3430 = vunpack.c.l.s4 1983009808
      %v3431 = vunpack.c.0.s8 %v3430
      %v3432 = vlaneseq
      %v3433 = vshrl.u32 %v3432, 7
      %v3434 = vsub.s32 %v3431, %v3433
      %v3435 = vrot.slane %v2659, %v3434
      %v3436 = vcombine.high %v3435, %v3435
      %v3438 = vunpack.c.l.s4 1983009808
      %v3439 = vunpack.c.0.s8 %v3438
      %v3440 = vlaneseq
      %v3441 = vshrl.u32 %v3440, 7
      %v3442 = vsub.s32 %v3439, %v3441
      %v3443 = vrot.slane %v2660, %v3442
      %v3444 = vcombine.high %v3443, %v3443
      %v3446 = vunpack.c.l.s4 1983009808
      %v3447 = vunpack.c.0.s8 %v3446
      %v3448 = vlaneseq
      %v3449 = vshrl.u32 %v3448, 7
      %v3450 = vsub.s32 %v3447, %v3449
      %v3451 = vrot.slane %v2661, %v3450
      %v3452 = vcombine.high %v3451, %v3451
      %v3454 = vunpack.c.l.s4 1983009808
      %v3455 = vunpack.c.0.s8 %v3454
      %v3456 = vlaneseq
      %v3457 = vshrl.u32 %v3456, 7
      %v3458 = vsub.s32 %v3455, %v3457
      %v3459 = vrot.slane %v2662, %v3458
      %v3460 = vcombine.high %v3459, %v3459
      %v3462 = vunpack.c.l.s4 1983009808
      %v3463 = vunpack.c.0.s8 %v3462
      %v3464 = vlaneseq
      %v3465 = vshrl.u32 %v3464, 7
      %v3466 = vsub.s32 %v3463, %v3465
      %v3467 = vrot.slane %v2663, %v3466
      %v3468 = vcombine.high %v3467, %v3467
      %v3470 = vunpack.c.l.s4 1983009808
      %v3471 = vunpack.c.0.s8 %v3470
      %v3472 = vlaneseq
      %v3473 = vshrl.u32 %v3472, 7
      %v3474 = vsub.s32 %v3471, %v3473
      %v3475 = vrot.slane %v2664, %v3474
      %v3476 = vcombine.high %v3475, %v3475
      %v3478 = vunpack.c.l.s4 1983009808
      %v3479 = vunpack.c.0.s8 %v3478
      %v3480 = vlaneseq
      %v3481 = vshrl.u32 %v3480, 7
      %v3482 = vsub.s32 %v3479, %v3481
      %v3483 = vrot.slane %v2665, %v3482
      %v3484 = vcombine.high %v3483, %v3483
      %v3486 = vunpack.c.l.s4 1983009808
      %v3487 = vunpack.c.0.s8 %v3486
      %v3488 = vlaneseq
      %v3489 = vshrl.u32 %v3488, 7
      %v3490 = vsub.s32 %v3487, %v3489
      %v3491 = vrot.slane %v2666, %v3490
      %v3492 = vcombine.high %v3491, %v3491
      %v3494 = vunpack.c.l.s4 1983009808
      %v3495 = vunpack.c.0.s8 %v3494
      %v3496 = vlaneseq
      %v3497 = vshrl.u32 %v3496, 7
      %v3498 = vsub.s32 %v3495, %v3497
      %v3499 = vrot.slane %v2667, %v3498
      %v3500 = vcombine.high %v3499, %v3499
      %v3599 = vmul.f32 %v2671, %v3115
      %v3600 = vmul.f32 %v2675, %v3116
      %v3601 = vmul.f32 %v2679, %v3123
      %v3602 = vmul.f32 %v2683, %v3124
      %v3603 = vmul.f32 %v2687, %v3131
      %v3604 = vmul.f32 %v2691, %v3132
      %v3605 = vmul.f32 %v2695, %v3139
      %v3606 = vmul.f32 %v2699, %v3140
      %v3607 = vmul.f32 %v2703, %v3147
      %v3608 = vmul.f32 %v2707, %v3148
      %v3609 = vmul.f32 %v2711, %v3155
      %v3610 = vmul.f32 %v2715, %v3156
      %v3611 = vmul.f32 %v2719, %v3163
      %v3612 = vmul.f32 %v2723, %v3164
      %v3613 = vmul.f32 %v2727, %v3171
      %v3614 = vmul.f32 %v2731, %v3172
      %v3615 = vmul.f32 %v2735, %v3179
      %v3616 = vmul.f32 %v2739, %v3180
      %v3617 = vmul.f32 %v2743, %v3187
      %v3618 = vmul.f32 %v2747, %v3188
      %v3619 = vmul.f32 %v2751, %v3195
      %v3620 = vmul.f32 %v2755, %v3196
      %v3621 = vmul.f32 %v2759, %v3203
      %v3622 = vmul.f32 %v2763, %v3204
      %v3623 = vmul.f32 %v2767, %v3211
      %v3624 = vmul.f32 %v2771, %v3212
      %v3625 = vmul.f32 %v2775, %v3219
      %v3626 = vmul.f32 %v2779, %v3220
      %v3627 = vmul.f32 %v2783, %v3227
      %v3628 = vmul.f32 %v2787, %v3228
      %v3629 = vmul.f32 %v2791, %v3235
      %v3630 = vmul.f32 %v2795, %v3236
      %v3631 = vmul.f32 %v2799, %v3243
      %v3632 = vmul.f32 %v2803, %v3244
      %v3633 = vmul.f32 %v2807, %v3251
      %v3634 = vmul.f32 %v2811, %v3252
      %v3635 = vmul.f32 %v2815, %v3259
      %v3636 = vmul.f32 %v2819, %v3260
      %v3637 = vmul.f32 %v2823, %v3267
      %v3638 = vmul.f32 %v2827, %v3268
      %v3639 = vmul.f32 %v2831, %v3275
      %v3640 = vmul.f32 %v2835, %v3276
      %v3641 = vmul.f32 %v2839, %v3283
      %v3642 = vmul.f32 %v2843, %v3284
      %v3643 = vmul.f32 %v2847, %v3291
      %v3644 = vmul.f32 %v2851, %v3292
      %v3645 = vmul.f32 %v2855, %v3299
      %v3646 = vmul.f32 %v2859, %v3300
      %v3647 = vmul.f32 %v2863, %v3307
      %v3648 = vmul.f32 %v2867, %v3308
      %v3649 = vmul.f32 %v2871, %v3315
      %v3650 = vmul.f32 %v2875, %v3316
      %v3651 = vmul.f32 %v2879, %v3323
      %v3652 = vmul.f32 %v2883, %v3324
      %v3653 = vmul.f32 %v2887, %v3331
      %v3654 = vmul.f32 %v2891, %v3332
      %v3655 = vmul.f32 %v2895, %v3339
      %v3656 = vmul.f32 %v2899, %v3340
      %v3657 = vmul.f32 %v2903, %v3347
      %v3658 = vmul.f32 %v2907, %v3348
      %v3659 = vmul.f32 %v2911, %v3355
      %v3660 = vmul.f32 %v2915, %v3356
      %v3661 = vmul.f32 %v2919, %v3363
      %v3662 = vmul.f32 %v2923, %v3364
      %v3663 = vmul.f32 %v2927, %v3371
      %v3664 = vmul.f32 %v2931, %v3372
      %v3665 = vmul.f32 %v2935, %v3379
      %v3666 = vmul.f32 %v2939, %v3380
      %v3667 = vmul.f32 %v2943, %v3387
      %v3668 = vmul.f32 %v2947, %v3388
      %v3669 = vmul.f32 %v2951, %v3395
      %v3670 = vmul.f32 %v2955, %v3396
      %v3671 = vmul.f32 %v2959, %v3403
      %v3672 = vmul.f32 %v2963, %v3404
      %v3673 = vmul.f32 %v2967, %v3411
      %v3674 = vmul.f32 %v2971, %v3412
      %v3675 = vmul.f32 %v2975, %v3419
      %v3676 = vmul.f32 %v2979, %v3420
      %v3677 = vmul.f32 %v2983, %v3427
      %v3678 = vmul.f32 %v2987, %v3428
      %v3679 = vmul.f32 %v2991, %v3435
      %v3680 = vmul.f32 %v2995, %v3436
      %v3681 = vmul.f32 %v2999, %v3443
      %v3682 = vmul.f32 %v3003, %v3444
      %v3683 = vmul.f32 %v3007, %v3451
      %v3684 = vmul.f32 %v3011, %v3452
      %v3685 = vmul.f32 %v3015, %v3459
      %v3686 = vmul.f32 %v3019, %v3460
      %v3687 = vmul.f32 %v3023, %v3467
      %v3688 = vmul.f32 %v3027, %v3468
      %v3689 = vmul.f32 %v3031, %v3475
      %v3690 = vmul.f32 %v3035, %v3476
      %v3691 = vmul.f32 %v3039, %v3483
      %v3692 = vmul.f32 %v3043, %v3484
      %v3693 = vmul.f32 %v3047, %v3491
      %v3694 = vmul.f32 %v3051, %v3492
      %v3695 = vmul.f32 %v3055, %v3499
      %v3696 = vmul.f32 %v3059, %v3500
      %v3697 = vsel %vm1143, %v3599, 0.0
      %v3698 = vsel %vm1143, %v3601, 0.0
      %v3699 = vadd.f32 %v3697, %v3698
      %v3700 = vsel %vm1143, %v3603, 0.0
      %v3701 = vadd.f32 %v3699, %v3700
      %v3702 = vsel %vm1143, %v3605, 0.0
      %v3703 = vadd.f32 %v3701, %v3702
      %v3704 = vsel %vm1143, %v3607, 0.0
      %v3705 = vadd.f32 %v3703, %v3704
      %v3706 = vsel %vm1143, %v3609, 0.0
      %v3707 = vadd.f32 %v3705, %v3706
      %v3708 = vsel %vm1143, %v3611, 0.0
      %v3709 = vadd.f32 %v3707, %v3708
      %v3710 = vsel %vm1143, %v3613, 0.0
      %v3711 = vadd.f32 %v3709, %v3710
      %v3712 = vsel %vm1143, %v3615, 0.0
      %v3713 = vadd.f32 %v3711, %v3712
      %v3714 = vsel %vm1143, %v3617, 0.0
      %v3715 = vadd.f32 %v3713, %v3714
      %v3716 = vsel %vm1143, %v3619, 0.0
      %v3717 = vadd.f32 %v3715, %v3716
      %v3718 = vsel %vm1143, %v3621, 0.0
      %v3719 = vadd.f32 %v3717, %v3718
      %v3720 = vsel %vm1143, %v3623, 0.0
      %v3721 = vadd.f32 %v3719, %v3720
      %v3722 = vsel %vm1143, %v3625, 0.0
      %v3723 = vadd.f32 %v3721, %v3722
      %v3724 = vsel %vm1143, %v3627, 0.0
      %v3725 = vadd.f32 %v3723, %v3724
      %v3726 = vsel %vm1143, %v3629, 0.0
      %v3727 = vadd.f32 %v3725, %v3726
      %v3728 = vsel %vm1143, %v3631, 0.0
      %v3729 = vadd.f32 %v3727, %v3728
      %v3730 = vsel %vm1143, %v3633, 0.0
      %v3731 = vadd.f32 %v3729, %v3730
      %v3732 = vsel %vm1143, %v3635, 0.0
      %v3733 = vadd.f32 %v3731, %v3732
      %v3734 = vsel %vm1143, %v3637, 0.0
      %v3735 = vadd.f32 %v3733, %v3734
      %v3736 = vsel %vm1143, %v3639, 0.0
      %v3737 = vadd.f32 %v3735, %v3736
      %v3738 = vsel %vm1143, %v3641, 0.0
      %v3739 = vadd.f32 %v3737, %v3738
      %v3740 = vsel %vm1143, %v3643, 0.0
      %v3741 = vadd.f32 %v3739, %v3740
      %v3742 = vsel %vm1143, %v3645, 0.0
      %v3743 = vadd.f32 %v3741, %v3742
      %v3744 = vsel %vm1143, %v3647, 0.0
      %v3745 = vadd.f32 %v3743, %v3744
      %v3746 = vsel %vm1143, %v3649, 0.0
      %v3747 = vadd.f32 %v3745, %v3746
      %v3748 = vsel %vm1143, %v3651, 0.0
      %v3749 = vadd.f32 %v3747, %v3748
      %v3750 = vsel %vm1143, %v3653, 0.0
      %v3751 = vadd.f32 %v3749, %v3750
      %v3752 = vsel %vm1143, %v3655, 0.0
      %v3753 = vadd.f32 %v3751, %v3752
      %v3754 = vsel %vm1143, %v3657, 0.0
      %v3755 = vadd.f32 %v3753, %v3754
      %v3756 = vsel %vm1143, %v3659, 0.0
      %v3757 = vadd.f32 %v3755, %v3756
      %v3758 = vsel %vm1143, %v3661, 0.0
      %v3759 = vadd.f32 %v3757, %v3758
      %v3760 = vsel %vm1143, %v3663, 0.0
      %v3761 = vadd.f32 %v3759, %v3760
      %v3762 = vsel %vm1143, %v3665, 0.0
      %v3763 = vadd.f32 %v3761, %v3762
      %v3764 = vsel %vm1143, %v3667, 0.0
      %v3765 = vadd.f32 %v3763, %v3764
      %v3766 = vsel %vm1143, %v3669, 0.0
      %v3767 = vadd.f32 %v3765, %v3766
      %v3768 = vsel %vm1143, %v3671, 0.0
      %v3769 = vadd.f32 %v3767, %v3768
      %v3770 = vsel %vm1143, %v3673, 0.0
      %v3771 = vadd.f32 %v3769, %v3770
      %v3772 = vsel %vm1143, %v3675, 0.0
      %v3773 = vadd.f32 %v3771, %v3772
      %v3774 = vsel %vm1143, %v3677, 0.0
      %v3775 = vadd.f32 %v3773, %v3774
      %v3776 = vsel %vm1143, %v3679, 0.0
      %v3777 = vadd.f32 %v3775, %v3776
      %v3778 = vsel %vm1143, %v3681, 0.0
      %v3779 = vadd.f32 %v3777, %v3778
      %v3780 = vsel %vm1143, %v3683, 0.0
      %v3781 = vadd.f32 %v3779, %v3780
      %v3782 = vsel %vm1143, %v3685, 0.0
      %v3783 = vadd.f32 %v3781, %v3782
      %v3784 = vsel %vm1143, %v3687, 0.0
      %v3785 = vadd.f32 %v3783, %v3784
      %v3786 = vsel %vm1143, %v3689, 0.0
      %v3787 = vadd.f32 %v3785, %v3786
      %v3788 = vsel %vm1143, %v3691, 0.0
      %v3789 = vadd.f32 %v3787, %v3788
      %v3790 = vsel %vm1143, %v3693, 0.0
      %v3791 = vadd.f32 %v3789, %v3790
      %v3792 = vsel %vm1143, %v3695, 0.0
      %v3793 = vadd.f32 %v3791, %v3792
      %v3794 = vsel %vm1143, %v3600, 0.0
      %v3795 = vsel %vm1143, %v3602, 0.0
      %v3796 = vadd.f32 %v3794, %v3795
      %v3797 = vsel %vm1143, %v3604, 0.0
      %v3798 = vadd.f32 %v3796, %v3797
      %v3799 = vsel %vm1143, %v3606, 0.0
      %v3800 = vadd.f32 %v3798, %v3799
      %v3801 = vsel %vm1143, %v3608, 0.0
      %v3802 = vadd.f32 %v3800, %v3801
      %v3803 = vsel %vm1143, %v3610, 0.0
      %v3804 = vadd.f32 %v3802, %v3803
      %v3805 = vsel %vm1143, %v3612, 0.0
      %v3806 = vadd.f32 %v3804, %v3805
      %v3807 = vsel %vm1143, %v3614, 0.0
      %v3808 = vadd.f32 %v3806, %v3807
      %v3809 = vsel %vm1143, %v3616, 0.0
      %v3810 = vadd.f32 %v3808, %v3809
      %v3811 = vsel %vm1143, %v3618, 0.0
      %v3812 = vadd.f32 %v3810, %v3811
      %v3813 = vsel %vm1143, %v3620, 0.0
      %v3814 = vadd.f32 %v3812, %v3813
      %v3815 = vsel %vm1143, %v3622, 0.0
      %v3816 = vadd.f32 %v3814, %v3815
      %v3817 = vsel %vm1143, %v3624, 0.0
      %v3818 = vadd.f32 %v3816, %v3817
      %v3819 = vsel %vm1143, %v3626, 0.0
      %v3820 = vadd.f32 %v3818, %v3819
      %v3821 = vsel %vm1143, %v3628, 0.0
      %v3822 = vadd.f32 %v3820, %v3821
      %v3823 = vsel %vm1143, %v3630, 0.0
      %v3824 = vadd.f32 %v3822, %v3823
      %v3825 = vsel %vm1143, %v3632, 0.0
      %v3826 = vadd.f32 %v3824, %v3825
      %v3827 = vsel %vm1143, %v3634, 0.0
      %v3828 = vadd.f32 %v3826, %v3827
      %v3829 = vsel %vm1143, %v3636, 0.0
      %v3830 = vadd.f32 %v3828, %v3829
      %v3831 = vsel %vm1143, %v3638, 0.0
      %v3832 = vadd.f32 %v3830, %v3831
      %v3833 = vsel %vm1143, %v3640, 0.0
      %v3834 = vadd.f32 %v3832, %v3833
      %v3835 = vsel %vm1143, %v3642, 0.0
      %v3836 = vadd.f32 %v3834, %v3835
      %v3837 = vsel %vm1143, %v3644, 0.0
      %v3838 = vadd.f32 %v3836, %v3837
      %v3839 = vsel %vm1143, %v3646, 0.0
      %v3840 = vadd.f32 %v3838, %v3839
      %v3841 = vsel %vm1143, %v3648, 0.0
      %v3842 = vadd.f32 %v3840, %v3841
      %v3843 = vsel %vm1143, %v3650, 0.0
      %v3844 = vadd.f32 %v3842, %v3843
      %v3845 = vsel %vm1143, %v3652, 0.0
      %v3846 = vadd.f32 %v3844, %v3845
      %v3847 = vsel %vm1143, %v3654, 0.0
      %v3848 = vadd.f32 %v3846, %v3847
      %v3849 = vsel %vm1143, %v3656, 0.0
      %v3850 = vadd.f32 %v3848, %v3849
      %v3851 = vsel %vm1143, %v3658, 0.0
      %v3852 = vadd.f32 %v3850, %v3851
      %v3853 = vsel %vm1143, %v3660, 0.0
      %v3854 = vadd.f32 %v3852, %v3853
      %v3855 = vsel %vm1143, %v3662, 0.0
      %v3856 = vadd.f32 %v3854, %v3855
      %v3857 = vsel %vm1143, %v3664, 0.0
      %v3858 = vadd.f32 %v3856, %v3857
      %v3859 = vsel %vm1143, %v3666, 0.0
      %v3860 = vadd.f32 %v3858, %v3859
      %v3861 = vsel %vm1143, %v3668, 0.0
      %v3862 = vadd.f32 %v3860, %v3861
      %v3863 = vsel %vm1143, %v3670, 0.0
      %v3864 = vadd.f32 %v3862, %v3863
      %v3865 = vsel %vm1143, %v3672, 0.0
      %v3866 = vadd.f32 %v3864, %v3865
      %v3867 = vsel %vm1143, %v3674, 0.0
      %v3868 = vadd.f32 %v3866, %v3867
      %v3869 = vsel %vm1143, %v3676, 0.0
      %v3870 = vadd.f32 %v3868, %v3869
      %v3871 = vsel %vm1143, %v3678, 0.0
      %v3872 = vadd.f32 %v3870, %v3871
      %v3873 = vsel %vm1143, %v3680, 0.0
      %v3874 = vadd.f32 %v3872, %v3873
      %v3875 = vsel %vm1143, %v3682, 0.0
      %v3876 = vadd.f32 %v3874, %v3875
      %v3877 = vsel %vm1143, %v3684, 0.0
      %v3878 = vadd.f32 %v3876, %v3877
      %v3879 = vsel %vm1143, %v3686, 0.0
      %v3880 = vadd.f32 %v3878, %v3879
      %v3881 = vsel %vm1143, %v3688, 0.0
      %v3882 = vadd.f32 %v3880, %v3881
      %v3883 = vsel %vm1143, %v3690, 0.0
      %v3884 = vadd.f32 %v3882, %v3883
      %v3885 = vsel %vm1143, %v3692, 0.0
      %v3886 = vadd.f32 %v3884, %v3885
      %v3887 = vsel %vm1143, %v3694, 0.0
      %v3888 = vadd.f32 %v3886, %v3887
      %v3889 = vsel %vm1143, %v3696, 0.0
      %v3890 = vadd.f32 %v3888, %v3889
      %v3891 = vadd.f32 %v2617, %v3793
      %v3892 = vadd.f32 %v2618, %v3890
      %v3895 = vcombine.low %v3891, %v3892
      %v3897 = vunpack.c.l.s4 1983009808
      %v3898 = vunpack.c.0.s8 %v3897
      %v3899 = vlaneseq
      %v3900 = vshrl.u32 %v3899, 7
      %v3901 = vsub.s32 %v3898, %v3900
      %v3902 = vrot.slane %v3895, %v3901
      %3904 = vst [vmem:[#allocation4] sm:$0xf] %v3902
      %3905 = vst.msk [vmem:[#allocation2] sm:$0x3] %vm2592, %v1945
      // Predicated region
      $region41: #{acmix_forward.7} parent=35 // pred_check
        %p3906 = pneg %p395
      $region42: #{acmix_forward.7} parent=35 // pred_check_branch
        %3908 = sbr.rel (%p3906) target = $region44
      $region43: #{acmix_forward.7} parent=35 // pred_region
        %v3909 = vld [vmem:[#allocation3] sm:$0x3]
        %v3910 = vrcp.pop %v3909
        %v3911 = vld [vmem:[#allocation4] sm:$0xf]
        %v3913 = vlaneseq
        %v3914 = vshrl.u32 %v3913, 7
        %v3915 = vsub.s32 0, %v3914
        %v3916 = vrot.slane %v3910, %v3915
        %v3917 = vlaneseq
        %v3918 = vshrl.u32 %v3917, 7
        %v3919 = vsub.s32 1, %v3918
        %v3920 = vrot.slane %v3910, %v3919
        %v3921 = vcombine.low %v3916, %v3920
        %v3923 = vunpack.c.l.s4 1983009808
        %v3924 = vunpack.c.0.s8 %v3923
        %v3925 = vlaneseq
        %v3926 = vshrl.u32 %v3925, 7
        %v3927 = vsub.s32 %v3924, %v3926
        %v3928 = vrot.slane %v3921, %v3927
        %v3930 = vmul.f32 %v3911, %v3928
        %3931 = vst [vmem:[%s393] sm:$0xf] %v3930
      $region44: #{acmix_forward.7} parent=35 // pred_fallthru
        _
      %s3932 = smul.u32 2, %s21
      %p3933 = scmp.lt.s32.totalorder %s20, 7
      %s3934 = scalar_select %p3933, %s20, 7
      %p3935 = scmp.lt.s32.totalorder %s3932, 1
      %s3936 = scalar_select %p3935, %s3932, 1
      %s3937 = smul.addr %s3934, 2
      %s3938 = sadd.s32 %s3936, %s3937
      %s3939 = smul.addr %s3938, 2
      %s3940 = scalar_lea.vmem %s4, %s3939
      // Predicated region
      $region45: #{acmix_forward.7} parent=35 // pred_check
        %p3941 = pneg %p170
      $region46: #{acmix_forward.7} parent=35 // pred_check_branch
        %3943 = sbr.rel (%p3941) target = $region48
      $region47: #{acmix_forward.7} parent=35 // pred_region
        %s3944 = smul.u32 2, %s21
      $region48: #{acmix_forward.7} parent=35 // pred_fallthru
        _
    $region36: #{acmix_forward.7} parent=5 // pred_fallthru
      _
    %p3945 = scmp.le.s32.totalorder 2, %s10
    // Predicated region
    $region49: #{acmix_forward.7} parent=5 // pred_check
      %p3946 = pneg %p3945
    $region50: #{acmix_forward.7} parent=5 // pred_check_branch
      %3948 = sbr.rel (%p3946) target = $region52
    $region51: #{acmix_forward.7} parent=5 // pred_region
      %s3949 = ssub.s32 %s10, 2
      // Predicated region
      $region53: #{acmix_forward.7} parent=51 // pred_check
        %p3950 = pneg %p176
      $region54: #{acmix_forward.7} parent=51 // pred_check_branch
        %3952 = sbr.rel (%p3950) target = $region56
      $region55: #{acmix_forward.7} parent=51 // pred_region
        %s3953 = smul.u32 2, %s24
        %p3954 = scmp.lt.s32.totalorder %s23, 7
        %s3955 = scalar_select %p3954, %s23, 7
        %p3956 = scmp.lt.s32.totalorder %s3953, 1
        %s3957 = scalar_select %p3956, %s3953, 1
        %s3958 = smul.addr %s3955, 2
        %s3959 = sadd.s32 %s3957, %s3958
        %s3960 = smul.addr %s3959, 2
        %s3961 = scalar_lea.vmem %s4, %s3960
      $region56: #{acmix_forward.7} parent=51 // pred_fallthru
        _
    $region52: #{acmix_forward.7} parent=5 // pred_fallthru
      _
  $region6: #{acmix_forward.7} parent=0 // loop_footer
    %s14 = sadd.s32 1, %s10
  $region7: #{acmix_forward.7} parent=0 // loop_footer_branch
    %9 = sbr.rel target = $region3
  $region8: #{acmix_forward.7} parent=0 // loop_exit
    _

</llo_original>
